<compile_context>
chip_gen: v6e
topology: v6e:2x2x1
jax: 0.10.0
libtpu: 0.0.40
codegen_flags: <defaults>
</compile_context>

<pallas_src>
import functools

import jax
import jax.numpy as jnp
from jax import lax
from jax.experimental import pallas as pl
from jax.experimental.pallas import tpu as pltpu


def _round_up(x, m):
    return (x + m - 1) // m * m


# ---------------------------------------------------------------------------
# Pallas kernel: fused LSTM recurrence + V-tiled output projection + masked CE
# grid = (num_v_tiles,)  — "arbitrary" reduction axis over vocab tiles
# ---------------------------------------------------------------------------
def elmo_lm_kernel(emb_ref,      # (T*Bp, Ep)     bf16  time-major, flattened
                   mask_ref,     # (T*Bp, 1)      f32
                   tgt_ref,      # (T*Bp, 1)      i32
                   w_ih_ref,     # (Ep, 4*Hp)     bf16  (gate blocks, width Hp)
                   w_hh_ref,     # (Hp, 4*Hp)     bf16
                   b_ref,        # (1, 4*Hp)      f32   (b_ih + b_hh)
                   w_out_ref,    # (Hp, V_TILE)   bf16  current vocab tile
                   b_out_ref,    # (1, V_TILE)    f32   (padded cols = -1e30)
                   h0_ref,       # (Bp, Hp)       f32
                   c0_ref,       # (Bp, Hp)       f32
                   h_out_ref,    # out (Bp, Hp)   f32
                   c_out_ref,    # out (Bp, Hp)   f32
                   loss_ref,     # out (1, 1)     f32
                   gx_ref,       # scratch (T*Bp, 4*Hp) f32  precomputed x-gates
                   h_seq_ref,    # scratch (T*Bp, Hp)   bf16 h sequence
                   m_ref,        # scratch (T*Bp, 1)    f32  running max
                   s_ref,        # scratch (T*Bp, 1)    f32  running sum-exp
                   tl_ref,       # scratch (T*Bp, 1)    f32  running target logit
                   *, T, Bp):
    v = pl.program_id(0)
    nv = pl.num_programs(0)
    Hp = h0_ref.shape[1]
    V_TILE = w_out_ref.shape[1]

    # ---- (1) recurrence phase: runs only on the first vocab tile -----------
    # (its compute overlaps the DMA of the next w_out tile via the pipeline)
    @pl.when(v == 0)
    def _recurrence_and_init():
        # hoisted input projection: one big matmul, no serial dependence
        gx_ref[...] = (jnp.dot(emb_ref[...], w_ih_ref[...],
                               preferred_element_type=jnp.float32)
                       + b_ref[...])                              # (T*Bp, 4Hp) f32

        w_hh = w_hh_ref[...]                                      # resident (Hp, 4Hp) bf16

        def step(r0, h, c):
            # r0 is a multiple of Bp (>=16) -> every slice is tile-aligned
            gates = gx_ref[pl.ds(r0, Bp), :] + jnp.dot(
                h.astype(w_hh.dtype), w_hh,
                preferred_element_type=jnp.float32)               # (Bp, 4Hp) f32
            # PyTorch LSTM gate order i, f, g, o; each block = full 128-lane chunks
            i_g = jax.nn.sigmoid(gates[:, 0 * Hp:1 * Hp])
            f_g = jax.nn.sigmoid(gates[:, 1 * Hp:2 * Hp])
            g_g = jnp.tanh(gates[:, 2 * Hp:3 * Hp])
            o_g = jax.nn.sigmoid(gates[:, 3 * Hp:4 * Hp])

            c_new = f_g * c + i_g * g_g
            h_new = o_g * jnp.tanh(c_new)

            # masked steps carry the previous state unchanged
            m = mask_ref[pl.ds(r0, Bp), :]                        # (Bp, 1) f32
            h = m * h_new + (1.0 - m) * h
            c = m * c_new + (1.0 - m) * c

            h_seq_ref[pl.ds(r0, Bp), :] = h.astype(h_seq_ref.dtype)
            return h, c

        h = h0_ref[...]
        c = c0_ref[...]
        if T <= 16:
            # full unroll for small static T: LLO scheduler sees everything
            for t in range(T):
                h, c = step(t * Bp, h, c)
        else:
            # bounded-register-pressure path for long sequences
            def body(t, carry):
                hh, cc = carry
                return step(pl.multiple_of(t * Bp, Bp), hh, cc)
            h, c = lax.fori_loop(0, T, body, (h, c), unroll=4)

        h_out_ref[...] = h
        c_out_ref[...] = c

        # init online-logsumexp accumulators
        m_ref[...] = jnp.full(m_ref.shape, -jnp.inf, m_ref.dtype)
        s_ref[...] = jnp.zeros_like(s_ref)
        tl_ref[...] = jnp.zeros_like(tl_ref)

    # ---- (2) per-vocab-tile projection + online logsumexp ------------------
    logits = (jnp.dot(h_seq_ref[...], w_out_ref[...],
                      preferred_element_type=jnp.float32)
              + b_out_ref[...])                                   # (T*Bp, V_TILE) f32

    # target logit: each target id falls in exactly one vocab tile
    col_ids = v * V_TILE + lax.broadcasted_iota(jnp.int32, logits.shape, 1)
    tl_ref[...] += jnp.sum(
        jnp.where(col_ids == tgt_ref[...], logits, 0.0),
        axis=-1, keepdims=True)                                   # (T*Bp, 1)

    # online max / sum-exp (padded vocab cols carry bias -1e30 -> exp == 0)
    tile_max = jnp.max(logits, axis=-1, keepdims=True)
    m_old = m_ref[...]
    m_new = jnp.maximum(m_old, tile_max)
    s_ref[...] = (s_ref[...] * jnp.exp(m_old - m_new)
                  + jnp.sum(jnp.exp(logits - m_new), axis=-1, keepdims=True))
    m_ref[...] = m_new

    # ---- (3) finalize masked mean CE on the last vocab tile -----------------
    @pl.when(v == nv - 1)
    def _finalize():
        lse = m_ref[...] + jnp.log(s_ref[...])                    # (T*Bp, 1)
        nll = lse - tl_ref[...]
        m_all = mask_ref[...]                                     # (T*Bp, 1)
        loss_sum = jnp.sum(m_all * nll).reshape(1, 1)
        cnt = jnp.sum(m_all).reshape(1, 1)
        # NOTE: max(cnt, 1) guards the all-masked edge case (avoids NaN).
        loss_ref[...] = loss_sum / jnp.maximum(cnt, 1.0)


def run_elmo_lm_kernel(emb_flat, mask_flat, tgt_flat,
                       w_ih_p, w_hh_p, b_p, w_out_p, b_out_p, h0_p, c0_p,
                       *, T, Bp, v_tile=512):
    TB, Ep = emb_flat.shape
    Hp = h0_p.shape[1]
    Vp = w_out_p.shape[1]

    # pick a vocab tile: multiple of 128 that divides Vp (<= v_tile)
    V_TILE = min(v_tile, Vp)
    while Vp % V_TILE:
        V_TILE -= 128
    num_v = Vp // V_TILE

    kernel = functools.partial(elmo_lm_kernel, T=T, Bp=Bp)

    # TODO(synk): on v7x, add a second "parallel" grid axis (e.g. batch halves)
    # to shard the recurrence + projection across the two TensorCores, and
    # consider fp8 (v7x) / int8 (v5e/v6e) w_out tiles at very large V.
    return pl.pallas_call(
        kernel,
        out_shape=(
            jax.ShapeDtypeStruct((Bp, Hp), jnp.float32),   # h_T (lane padded)
            jax.ShapeDtypeStruct((Bp, Hp), jnp.float32),   # c_T (lane padded)
            jax.ShapeDtypeStruct((1, 1), jnp.float32),     # masked CE loss
        ),
        grid_spec=pltpu.PrefetchScalarGridSpec(
            num_scalar_prefetch=0,
            grid=(num_v,),
            in_specs=[
                pl.BlockSpec((TB, Ep), lambda v: (0, 0)),        # emb (resident)
                pl.BlockSpec((TB, 1), lambda v: (0, 0)),         # mask
                pl.BlockSpec((TB, 1), lambda v: (0, 0)),         # target ids
                pl.BlockSpec((Ep, 4 * Hp), lambda v: (0, 0)),    # w_ih
                pl.BlockSpec((Hp, 4 * Hp), lambda v: (0, 0)),    # w_hh
                pl.BlockSpec((1, 4 * Hp), lambda v: (0, 0)),     # bias
                pl.BlockSpec((Hp, V_TILE), lambda v: (0, v)),    # w_out tile
                pl.BlockSpec((1, V_TILE), lambda v: (0, v)),     # b_out tile
                pl.BlockSpec((Bp, Hp), lambda v: (0, 0)),        # h0
                pl.BlockSpec((Bp, Hp), lambda v: (0, 0)),        # c0
            ],
            out_specs=(
                pl.BlockSpec((Bp, Hp), lambda v: (0, 0)),
                pl.BlockSpec((Bp, Hp), lambda v: (0, 0)),
                pl.BlockSpec((1, 1), lambda v: (0, 0)),
            ),
            scratch_shapes=[
                pltpu.VMEM((TB, 4 * Hp), jnp.float32),   # precomputed x-gates
                pltpu.VMEM((TB, Hp), jnp.bfloat16),      # h sequence (bf16)
                pltpu.VMEM((TB, 1), jnp.float32),        # running max
                pltpu.VMEM((TB, 1), jnp.float32),        # running sum-exp
                pltpu.VMEM((TB, 1), jnp.float32),        # running target logit
            ]),
        compiler_params=pltpu.CompilerParams(
            dimension_semantics=("arbitrary",),
            # sized against v7x's 64 MiB physical VMEM (v5e/v6e have headroom)
            vmem_limit_bytes=48 * 1024 * 1024),
    )(emb_flat, mask_flat, tgt_flat, w_ih_p, w_hh_p, b_p,
      w_out_p, b_out_p, h0_p, c0_p)


# ---------------------------------------------------------------------------
# Parameter construction (deterministic) with lane-aligned, bf16 MXU copies
# ---------------------------------------------------------------------------
def make_params(key, vocab, embed_dim, hidden_dim, lane=128):
    V, E, H = vocab, embed_dim, hidden_dim
    Ep, Hp, Vp = _round_up(E, lane), _round_up(H, lane), _round_up(V, lane)

    ks = jax.random.split(key, 6)
    scale = 0.1
    embedding = scale * jax.random.normal(ks[0], (V, E), jnp.float32)
    w_ih = scale * jax.random.normal(ks[1], (E, 4 * H), jnp.float32)
    w_hh = scale * jax.random.normal(ks[2], (H, 4 * H), jnp.float32)
    b = scale * jax.random.normal(ks[3], (1, 4 * H), jnp.float32)
    w_out = scale * jax.random.normal(ks[4], (H, V), jnp.float32)
    b_out = scale * jax.random.normal(ks[5], (1, V), jnp.float32)

    # embedding table padded on E and cast to bf16 (MXU operand)
    emb_p = (jnp.zeros((V, Ep), jnp.float32).at[:, :E].set(embedding)
             .astype(jnp.bfloat16))

    # gate-block padding: gate g occupies columns [g*Hp, g*Hp + H), rest zero.
    # Padded hidden columns stay exactly 0 through the recurrence
    # (sigmoid(0)*tanh(0) terms vanish with zero-padded weights/bias/state).
    def pad_gate_cols(w, rows_pad):
        rows = w.shape[0]
        wp = jnp.zeros((rows_pad, 4 * Hp), jnp.float32)
        for g in range(4):
            wp = wp.at[:rows, g * Hp:g * Hp + H].set(w[:, g * H:(g + 1) * H])
        return wp

    w_ih_p = pad_gate_cols(w_ih, Ep).astype(jnp.bfloat16)
    w_hh_p = pad_gate_cols(w_hh, Hp).astype(jnp.bfloat16)
    b_p = pad_gate_cols(b, 1)                                   # stays f32

    w_out_p = (jnp.zeros((Hp, Vp), jnp.float32).at[:H, :V].set(w_out)
               .astype(jnp.bfloat16))
    # padded vocab columns get a huge negative bias so softmax ignores them
    # (safe while the logits accumulation stays f32)
    b_out_p = jnp.full((1, Vp), -1e30, jnp.float32).at[:, :V].set(b_out)

    return {
        "V": V, "E": E, "H": H, "Ep": Ep, "Hp": Hp, "Vp": Vp,
        "embedding": embedding, "w_ih": w_ih, "w_hh": w_hh, "b": b,
        "w_out": w_out, "b_out": b_out,
        "emb_p": emb_p, "w_ih_p": w_ih_p, "w_hh_p": w_hh_p, "b_p": b_p,
        "w_out_p": w_out_p, "b_out_p": b_out_p,
    }


# ---------------------------------------------------------------------------
# TrueRunningModel.forward wrapper
# ---------------------------------------------------------------------------
def true_running_model_forward(params, input_pair, forward_target, mask_forward,
                               backward_target, mask_backward, hidden,
                               return_hidden=True):
    """Mirrors TrueRunningModel.forward for bidirectional=False, reverse=False,
    situation=3 (DataParallel(input_layer -> rnn(+linear) -> loss))."""
    del backward_target, mask_backward   # unused in the unidirectional config

    tokens = input_pair[0]               # forward stream, (B, T) int32
    B, T = tokens.shape
    H, Hp = params["H"], params["Hp"]
    # Bp multiple of 16: every per-timestep slice is tile-aligned for both the
    # f32 (8-sublane) and bf16 (16-sublane packed) scratch layouts.
    Bp = _round_up(max(B, 1), 16)

    # --- FlexibleInputLayer: embedding lookup (dropout p=0 -> identity) ------
    # Only tiny (B,T) int32 / f32 arrays are transposed / padded to time-major;
    # large float tensors are produced time-major directly and logits never
    # leave the kernel.
    # TODO(synk): move this gather into the kernel (scalar-prefetched ids +
    # pl.Element row-gather) to drop one HBM round-trip of (T*Bp, Ep) bf16.
    tok_tm = jnp.zeros((T, Bp), jnp.int32).at[:, :B].set(
        jnp.transpose(tokens, (1, 0))).reshape(T * Bp)             # (T*Bp,)
    emb_flat = params["emb_p"][tok_tm]                             # (T*Bp, Ep) bf16

    mask_flat = jnp.zeros((T, Bp), jnp.float32).at[:, :B].set(
        jnp.transpose(mask_forward.astype(jnp.float32), (1, 0))
    ).reshape(T * Bp, 1)                                           # (T*Bp, 1)
    tgt_flat = jnp.zeros((T, Bp), jnp.int32).at[:, :B].set(
        jnp.transpose(forward_target.astype(jnp.int32), (1, 0))
    ).reshape(T * Bp, 1)                                           # (T*Bp, 1)

    if hidden is None:
        h0_p = jnp.zeros((Bp, Hp), jnp.float32)
        c0_p = jnp.zeros((Bp, Hp), jnp.float32)
    else:
        h0, c0 = hidden
        h0_p = jnp.zeros((Bp, Hp), jnp.float32).at[:B, :H].set(h0)
        c0_p = jnp.zeros((Bp, Hp), jnp.float32).at[:B, :H].set(c0)

    h_p, c_p, loss = run_elmo_lm_kernel(
        emb_flat, mask_flat, tgt_flat,
        params["w_ih_p"], params["w_hh_p"], params["b_p"],
        params["w_out_p"], params["b_out_p"], h0_p, c0_p, T=T, Bp=Bp)

    forward_loss = loss.reshape(1)                 # .unsqueeze(0) -> (1,)
    new_hidden = (h_p[:B, :H], c_p[:B, :H]) if return_hidden else hidden

    # Final kwargs dict produced by CustomSequential(input_layer, rnn, loss):
    # forward_output / backward_output are consumed by FlexibleLoss and are
    # not part of the returned dict.
    return {
        "hidden": new_hidden,
        "forward_loss": forward_loss,
        "backward_loss": None,                     # bidirectional == False
    }


# ---------------------------------------------------------------------------
if __name__ == "__main__":
    B, T = 2, 8           # batch, sequence length
    E, H = 32, 32         # embedding dim, LSTM hidden dim
    V = 64                # vocab size

    key = jax.random.PRNGKey(0)
    k_par, k_in0, k_in1, k_tf, k_tb = jax.random.split(key, 5)

    params = make_params(k_par, V, E, H)

    tokens_fwd = jax.random.randint(k_in0, (B, T), 0, V, jnp.int32)
    tokens_bwd = jax.random.randint(k_in1, (B, T), 0, V, jnp.int32)
    forward_target = jax.random.randint(k_tf, (B, T), 0, V, jnp.int32)
    backward_target = jax.random.randint(k_tb, (B, T), 0, V, jnp.int32)

    # masks: last timestep of sample 1 is padding
    mask_forward = jnp.ones((B, T), jnp.float32).at[1, -1].set(0.0)
    mask_backward = jnp.ones((B, T), jnp.float32)

    out = true_running_model_forward(
        params,
        input_pair=(tokens_fwd, tokens_bwd),
        forward_target=forward_target,
        mask_forward=mask_forward,
        backward_target=backward_target,
        mask_backward=mask_backward,
        hidden=None,
        return_hidden=True,
    )

    jax.block_until_ready(out["forward_loss"])
    jax.block_until_ready(out["hidden"][0])
    jax.block_until_ready(out["hidden"][1])

    # TODO(synk): the CUDA/DataParallel placement logic (situation switch) has
    # no Pallas equivalent; it is a device-placement no-op here.
    print("KERNEL_OK")
</pallas_src>

<mosaic_0001>
module attributes {stable_mosaic.version = 11 : i64} {
  func.func @elmo_lm_kernel(%arg0: i32, %arg1: memref<128x128xbf16, #tpu.memory_space<vmem>>, %arg2: memref<128x1xf32, #tpu.memory_space<vmem>>, %arg3: memref<128x1xi32, #tpu.memory_space<vmem>>, %arg4: memref<128x512xbf16, #tpu.memory_space<vmem>>, %arg5: memref<128x512xbf16, #tpu.memory_space<vmem>>, %arg6: memref<1x512xf32, #tpu.memory_space<vmem>>, %arg7: memref<128x128xbf16, #tpu.memory_space<vmem>>, %arg8: memref<1x128xf32, #tpu.memory_space<vmem>>, %arg9: memref<16x128xf32, #tpu.memory_space<vmem>>, %arg10: memref<16x128xf32, #tpu.memory_space<vmem>>, %arg11: memref<16x128xf32, #tpu.memory_space<vmem>>, %arg12: memref<16x128xf32, #tpu.memory_space<vmem>>, %arg13: memref<1x1xf32, #tpu.memory_space<vmem>>, %arg14: memref<128x512xf32, #tpu.memory_space<vmem>>, %arg15: memref<128x128xbf16, #tpu.memory_space<vmem>>, %arg16: memref<128x1xf32, #tpu.memory_space<vmem>>, %arg17: memref<128x1xf32, #tpu.memory_space<vmem>>, %arg18: memref<128x1xf32, #tpu.memory_space<vmem>>) attributes {dimension_semantics = [#tpu.dimension_semantics<arbitrary>], iteration_bounds = array<i64: 1>, scalar_prefetch = 0 : i64, scratch_operands = 5 : i64, tpu.core_type = #tpu.core_type<tc>, window_params = [{pipeline_mode = #tpu.pipeline_mode<synchronous>, transform_indices = @transform_0, window_bounds = array<i64: 128, 128>}, {pipeline_mode = #tpu.pipeline_mode<synchronous>, transform_indices = @transform_1, window_bounds = array<i64: 128, 1>}, {pipeline_mode = #tpu.pipeline_mode<synchronous>, transform_indices = @transform_2, window_bounds = array<i64: 128, 1>}, {pipeline_mode = #tpu.pipeline_mode<synchronous>, transform_indices = @transform_3, window_bounds = array<i64: 128, 512>}, {pipeline_mode = #tpu.pipeline_mode<synchronous>, transform_indices = @transform_4, window_bounds = array<i64: 128, 512>}, {pipeline_mode = #tpu.pipeline_mode<synchronous>, transform_indices = @transform_5, window_bounds = array<i64: 1, 512>}, {transform_indices = @transform_6, window_bounds = array<i64: 128, 128>}, {transform_indices = @transform_7, window_bounds = array<i64: 1, 128>}, {pipeline_mode = #tpu.pipeline_mode<synchronous>, transform_indices = @transform_8, window_bounds = array<i64: 16, 128>}, {pipeline_mode = #tpu.pipeline_mode<synchronous>, transform_indices = @transform_9, window_bounds = array<i64: 16, 128>}, {pipeline_mode = #tpu.pipeline_mode<synchronous>, transform_indices = @transform_10, window_bounds = array<i64: 16, 128>}, {pipeline_mode = #tpu.pipeline_mode<synchronous>, transform_indices = @transform_11, window_bounds = array<i64: 16, 128>}, {pipeline_mode = #tpu.pipeline_mode<synchronous>, transform_indices = @transform_12, window_bounds = array<i64: 1, 1>}]} {
    %c0_i32 = arith.constant 0 : i32
    %0 = arith.cmpi eq, %arg0, %c0_i32 : i32
    %1 = arith.extui %0 : i1 to i32
    %c0_i32_0 = arith.constant 0 : i32
    %2 = arith.cmpi ne, %1, %c0_i32_0 : i32
    scf.if %2 {
      %c0_26 = arith.constant 0 : index
      %c0_27 = arith.constant 0 : index
      %42 = vector.load %arg1[%c0_26, %c0_27] : memref<128x128xbf16, #tpu.memory_space<vmem>>, vector<128x128xbf16>
      %c0_28 = arith.constant 0 : index
      %c0_29 = arith.constant 0 : index
      %43 = vector.load %arg4[%c0_28, %c0_29] : memref<128x512xbf16, #tpu.memory_space<vmem>>, vector<128x512xbf16>
      %cst_30 = arith.constant dense<0.000000e+00> : vector<128x512xf32>
      %44 = tpu.matmul %42, %43, %cst_30 {dimension_numbers = #tpu.dot_dimension_numbers<[1], [0], [0], [1], [0, 0, 1, 1], [], []>} : vector<128x128xbf16>, vector<128x512xbf16>, vector<128x512xf32> -> vector<128x512xf32>
      %c0_31 = arith.constant 0 : index
      %c0_32 = arith.constant 0 : index
      %45 = vector.load %arg6[%c0_31, %c0_32] : memref<1x512xf32, #tpu.memory_space<vmem>>, vector<1x512xf32>
      %46 = vector.broadcast %45 : vector<1x512xf32> to vector<128x512xf32>
      %47 = arith.addf %44, %46 : vector<128x512xf32>
      %c0_33 = arith.constant 0 : index
      %c0_34 = arith.constant 0 : index
      %48 = vector.load %arg14[%c0_33, %c0_34] : memref<128x512xf32, #tpu.memory_space<vmem>>, vector<128x512xf32>
      tpu.vector_store %arg14[%c0_33, %c0_34], %47 {strides = array<i32>} : memref<128x512xf32, #tpu.memory_space<vmem>>, vector<128x512xf32>,
      %c0_35 = arith.constant 0 : index
      %c0_36 = arith.constant 0 : index
      %49 = vector.load %arg5[%c0_35, %c0_36] : memref<128x512xbf16, #tpu.memory_space<vmem>>, vector<128x512xbf16>
      %c0_37 = arith.constant 0 : index
      %c0_38 = arith.constant 0 : index
      %50 = vector.load %arg9[%c0_37, %c0_38] : memref<16x128xf32, #tpu.memory_space<vmem>>, vector<16x128xf32>
      %c0_39 = arith.constant 0 : index
      %c0_40 = arith.constant 0 : index
      %51 = vector.load %arg10[%c0_39, %c0_40] : memref<16x128xf32, #tpu.memory_space<vmem>>, vector<16x128xf32>
      %c0_41 = arith.constant 0 : index
      %c0_42 = arith.constant 0 : index
      %52 = vector.load %arg14[%c0_41, %c0_42] : memref<128x512xf32, #tpu.memory_space<vmem>>, vector<16x512xf32>
      %53 = arith.truncf %50 : vector<16x128xf32> to vector<16x128xbf16>
      %cst_43 = arith.constant dense<0.000000e+00> : vector<16x512xf32>
      %54 = tpu.matmul %53, %49, %cst_43 {dimension_numbers = #tpu.dot_dimension_numbers<[1], [0], [0], [1], [0, 0, 1, 1], [], []>} : vector<16x128xbf16>, vector<128x512xbf16>, vector<16x512xf32> -> vector<16x512xf32>
      %55 = arith.addf %52, %54 : vector<16x512xf32>
      %56 = vector.extract_strided_slice %55 {offsets = [0, 0], sizes = [16, 128], strides = [1, 1]} : vector<16x512xf32> to vector<16x128xf32>
      %57 = arith.negf %56 : vector<16x128xf32>
      %58 = math.exp %57 : vector<16x128xf32>
      %cst_44 = arith.constant 1.000000e+00 : f32
      %59 = vector.broadcast %cst_44 : f32 to vector<16x128xf32>
      %60 = arith.addf %59, %58 : vector<16x128xf32>
      %61 = arith.divf %59, %60 : vector<16x128xf32>
      %62 = vector.extract_strided_slice %55 {offsets = [0, 128], sizes = [16, 128], strides = [1, 1]} : vector<16x512xf32> to vector<16x128xf32>
      %63 = arith.negf %62 : vector<16x128xf32>
      %64 = math.exp %63 : vector<16x128xf32>
      %cst_45 = arith.constant 1.000000e+00 : f32
      %65 = vector.broadcast %cst_45 : f32 to vector<16x128xf32>
      %66 = arith.addf %65, %64 : vector<16x128xf32>
      %67 = arith.divf %65, %66 : vector<16x128xf32>
      %68 = vector.extract_strided_slice %55 {offsets = [0, 256], sizes = [16, 128], strides = [1, 1]} : vector<16x512xf32> to vector<16x128xf32>
      %69 = math.tanh %68 : vector<16x128xf32>
      %70 = vector.extract_strided_slice %55 {offsets = [0, 384], sizes = [16, 128], strides = [1, 1]} : vector<16x512xf32> to vector<16x128xf32>
      %71 = arith.negf %70 : vector<16x128xf32>
      %72 = math.exp %71 : vector<16x128xf32>
      %cst_46 = arith.constant 1.000000e+00 : f32
      %73 = vector.broadcast %cst_46 : f32 to vector<16x128xf32>
      %74 = arith.addf %73, %72 : vector<16x128xf32>
      %75 = arith.divf %73, %74 : vector<16x128xf32>
      %76 = arith.mulf %67, %51 : vector<16x128xf32>
      %77 = arith.mulf %61, %69 : vector<16x128xf32>
      %78 = arith.addf %76, %77 : vector<16x128xf32>
      %79 = math.tanh %78 : vector<16x128xf32>
      %80 = arith.mulf %75, %79 : vector<16x128xf32>
      %c0_47 = arith.constant 0 : index
      %c0_48 = arith.constant 0 : index
      %81 = vector.load %arg2[%c0_47, %c0_48] : memref<128x1xf32, #tpu.memory_space<vmem>>, vector<16x1xf32>
      %82 = vector.broadcast %81 : vector<16x1xf32> to vector<16x128xf32>
      %83 = arith.mulf %82, %80 : vector<16x128xf32>
      %cst_49 = arith.constant 1.000000e+00 : f32
      %84 = vector.broadcast %cst_49 : f32 to vector<16x1xf32>
      %85 = arith.subf %84, %81 : vector<16x1xf32>
      %86 = vector.broadcast %85 : vector<16x1xf32> to vector<16x128xf32>
      %87 = arith.mulf %86, %50 : vector<16x128xf32>
      %88 = arith.addf %83, %87 : vector<16x128xf32>
      %89 = vector.broadcast %81 : vector<16x1xf32> to vector<16x128xf32>
      %90 = arith.mulf %89, %78 : vector<16x128xf32>
      %cst_50 = arith.constant 1.000000e+00 : f32
      %91 = vector.broadcast %cst_50 : f32 to vector<16x1xf32>
      %92 = arith.subf %91, %81 : vector<16x1xf32>
      %93 = vector.broadcast %92 : vector<16x1xf32> to vector<16x128xf32>
      %94 = arith.mulf %93, %51 : vector<16x128xf32>
      %95 = arith.addf %90, %94 : vector<16x128xf32>
      %96 = arith.truncf %88 : vector<16x128xf32> to vector<16x128xbf16>
      %c0_51 = arith.constant 0 : index
      %c0_52 = arith.constant 0 : index
      %97 = vector.load %arg15[%c0_51, %c0_52] : memref<128x128xbf16, #tpu.memory_space<vmem>>, vector<16x128xbf16>
      tpu.vector_store %arg15[%c0_51, %c0_52], %96 {strides = array<i32>} : memref<128x128xbf16, #tpu.memory_space<vmem>>, vector<16x128xbf16>,
      %c16 = arith.constant 16 : index
      %c0_53 = arith.constant 0 : index
      %98 = vector.load %arg14[%c16, %c0_53] : memref<128x512xf32, #tpu.memory_space<vmem>>, vector<16x512xf32>
      %99 = arith.truncf %88 : vector<16x128xf32> to vector<16x128xbf16>
      %cst_54 = arith.constant dense<0.000000e+00> : vector<16x512xf32>
      %100 = tpu.matmul %99, %49, %cst_54 {dimension_numbers = #tpu.dot_dimension_numbers<[1], [0], [0], [1], [0, 0, 1, 1], [], []>} : vector<16x128xbf16>, vector<128x512xbf16>, vector<16x512xf32> -> vector<16x512xf32>
      %101 = arith.addf %98, %100 : vector<16x512xf32>
      %102 = vector.extract_strided_slice %101 {offsets = [0, 0], sizes = [16, 128], strides = [1, 1]} : vector<16x512xf32> to vector<16x128xf32>
      %103 = arith.negf %102 : vector<16x128xf32>
      %104 = math.exp %103 : vector<16x128xf32>
      %cst_55 = arith.constant 1.000000e+00 : f32
      %105 = vector.broadcast %cst_55 : f32 to vector<16x128xf32>
      %106 = arith.addf %105, %104 : vector<16x128xf32>
      %107 = arith.divf %105, %106 : vector<16x128xf32>
      %108 = vector.extract_strided_slice %101 {offsets = [0, 128], sizes = [16, 128], strides = [1, 1]} : vector<16x512xf32> to vector<16x128xf32>
      %109 = arith.negf %108 : vector<16x128xf32>
      %110 = math.exp %109 : vector<16x128xf32>
      %cst_56 = arith.constant 1.000000e+00 : f32
      %111 = vector.broadcast %cst_56 : f32 to vector<16x128xf32>
      %112 = arith.addf %111, %110 : vector<16x128xf32>
      %113 = arith.divf %111, %112 : vector<16x128xf32>
      %114 = vector.extract_strided_slice %101 {offsets = [0, 256], sizes = [16, 128], strides = [1, 1]} : vector<16x512xf32> to vector<16x128xf32>
      %115 = math.tanh %114 : vector<16x128xf32>
      %116 = vector.extract_strided_slice %101 {offsets = [0, 384], sizes = [16, 128], strides = [1, 1]} : vector<16x512xf32> to vector<16x128xf32>
      %117 = arith.negf %116 : vector<16x128xf32>
      %118 = math.exp %117 : vector<16x128xf32>
      %cst_57 = arith.constant 1.000000e+00 : f32
      %119 = vector.broadcast %cst_57 : f32 to vector<16x128xf32>
      %120 = arith.addf %119, %118 : vector<16x128xf32>
      %121 = arith.divf %119, %120 : vector<16x128xf32>
      %122 = arith.mulf %113, %95 : vector<16x128xf32>
      %123 = arith.mulf %107, %115 : vector<16x128xf32>
      %124 = arith.addf %122, %123 : vector<16x128xf32>
      %125 = math.tanh %124 : vector<16x128xf32>
      %126 = arith.mulf %121, %125 : vector<16x128xf32>
      %c16_58 = arith.constant 16 : index
      %c0_59 = arith.constant 0 : index
      %127 = vector.load %arg2[%c16_58, %c0_59] : memref<128x1xf32, #tpu.memory_space<vmem>>, vector<16x1xf32>
      %128 = vector.broadcast %127 : vector<16x1xf32> to vector<16x128xf32>
      %129 = arith.mulf %128, %126 : vector<16x128xf32>
      %cst_60 = arith.constant 1.000000e+00 : f32
      %130 = vector.broadcast %cst_60 : f32 to vector<16x1xf32>
      %131 = arith.subf %130, %127 : vector<16x1xf32>
      %132 = vector.broadcast %131 : vector<16x1xf32> to vector<16x128xf32>
      %133 = arith.mulf %132, %88 : vector<16x128xf32>
      %134 = arith.addf %129, %133 : vector<16x128xf32>
      %135 = vector.broadcast %127 : vector<16x1xf32> to vector<16x128xf32>
      %136 = arith.mulf %135, %124 : vector<16x128xf32>
      %cst_61 = arith.constant 1.000000e+00 : f32
      %137 = vector.broadcast %cst_61 : f32 to vector<16x1xf32>
      %138 = arith.subf %137, %127 : vector<16x1xf32>
      %139 = vector.broadcast %138 : vector<16x1xf32> to vector<16x128xf32>
      %140 = arith.mulf %139, %95 : vector<16x128xf32>
      %141 = arith.addf %136, %140 : vector<16x128xf32>
      %142 = arith.truncf %134 : vector<16x128xf32> to vector<16x128xbf16>
      %c16_62 = arith.constant 16 : index
      %c0_63 = arith.constant 0 : index
      %143 = vector.load %arg15[%c16_62, %c0_63] : memref<128x128xbf16, #tpu.memory_space<vmem>>, vector<16x128xbf16>
      tpu.vector_store %arg15[%c16_62, %c0_63], %142 {strides = array<i32>} : memref<128x128xbf16, #tpu.memory_space<vmem>>, vector<16x128xbf16>,
      %c32 = arith.constant 32 : index
      %c0_64 = arith.constant 0 : index
      %144 = vector.load %arg14[%c32, %c0_64] : memref<128x512xf32, #tpu.memory_space<vmem>>, vector<16x512xf32>
      %145 = arith.truncf %134 : vector<16x128xf32> to vector<16x128xbf16>
      %cst_65 = arith.constant dense<0.000000e+00> : vector<16x512xf32>
      %146 = tpu.matmul %145, %49, %cst_65 {dimension_numbers = #tpu.dot_dimension_numbers<[1], [0], [0], [1], [0, 0, 1, 1], [], []>} : vector<16x128xbf16>, vector<128x512xbf16>, vector<16x512xf32> -> vector<16x512xf32>
      %147 = arith.addf %144, %146 : vector<16x512xf32>
      %148 = vector.extract_strided_slice %147 {offsets = [0, 0], sizes = [16, 128], strides = [1, 1]} : vector<16x512xf32> to vector<16x128xf32>
      %149 = arith.negf %148 : vector<16x128xf32>
      %150 = math.exp %149 : vector<16x128xf32>
      %cst_66 = arith.constant 1.000000e+00 : f32
      %151 = vector.broadcast %cst_66 : f32 to vector<16x128xf32>
      %152 = arith.addf %151, %150 : vector<16x128xf32>
      %153 = arith.divf %151, %152 : vector<16x128xf32>
      %154 = vector.extract_strided_slice %147 {offsets = [0, 128], sizes = [16, 128], strides = [1, 1]} : vector<16x512xf32> to vector<16x128xf32>
      %155 = arith.negf %154 : vector<16x128xf32>
      %156 = math.exp %155 : vector<16x128xf32>
      %cst_67 = arith.constant 1.000000e+00 : f32
      %157 = vector.broadcast %cst_67 : f32 to vector<16x128xf32>
      %158 = arith.addf %157, %156 : vector<16x128xf32>
      %159 = arith.divf %157, %158 : vector<16x128xf32>
      %160 = vector.extract_strided_slice %147 {offsets = [0, 256], sizes = [16, 128], strides = [1, 1]} : vector<16x512xf32> to vector<16x128xf32>
      %161 = math.tanh %160 : vector<16x128xf32>
      %162 = vector.extract_strided_slice %147 {offsets = [0, 384], sizes = [16, 128], strides = [1, 1]} : vector<16x512xf32> to vector<16x128xf32>
      %163 = arith.negf %162 : vector<16x128xf32>
      %164 = math.exp %163 : vector<16x128xf32>
      %cst_68 = arith.constant 1.000000e+00 : f32
      %165 = vector.broadcast %cst_68 : f32 to vector<16x128xf32>
      %166 = arith.addf %165, %164 : vector<16x128xf32>
      %167 = arith.divf %165, %166 : vector<16x128xf32>
      %168 = arith.mulf %159, %141 : vector<16x128xf32>
      %169 = arith.mulf %153, %161 : vector<16x128xf32>
      %170 = arith.addf %168, %169 : vector<16x128xf32>
      %171 = math.tanh %170 : vector<16x128xf32>
      %172 = arith.mulf %167, %171 : vector<16x128xf32>
      %c32_69 = arith.constant 32 : index
      %c0_70 = arith.constant 0 : index
      %173 = vector.load %arg2[%c32_69, %c0_70] : memref<128x1xf32, #tpu.memory_space<vmem>>, vector<16x1xf32>
      %174 = vector.broadcast %173 : vector<16x1xf32> to vector<16x128xf32>
      %175 = arith.mulf %174, %172 : vector<16x128xf32>
      %cst_71 = arith.constant 1.000000e+00 : f32
      %176 = vector.broadcast %cst_71 : f32 to vector<16x1xf32>
      %177 = arith.subf %176, %173 : vector<16x1xf32>
      %178 = vector.broadcast %177 : vector<16x1xf32> to vector<16x128xf32>
      %179 = arith.mulf %178, %134 : vector<16x128xf32>
      %180 = arith.addf %175, %179 : vector<16x128xf32>
      %181 = vector.broadcast %173 : vector<16x1xf32> to vector<16x128xf32>
      %182 = arith.mulf %181, %170 : vector<16x128xf32>
      %cst_72 = arith.constant 1.000000e+00 : f32
      %183 = vector.broadcast %cst_72 : f32 to vector<16x1xf32>
      %184 = arith.subf %183, %173 : vector<16x1xf32>
      %185 = vector.broadcast %184 : vector<16x1xf32> to vector<16x128xf32>
      %186 = arith.mulf %185, %141 : vector<16x128xf32>
      %187 = arith.addf %182, %186 : vector<16x128xf32>
      %188 = arith.truncf %180 : vector<16x128xf32> to vector<16x128xbf16>
      %c32_73 = arith.constant 32 : index
      %c0_74 = arith.constant 0 : index
      %189 = vector.load %arg15[%c32_73, %c0_74] : memref<128x128xbf16, #tpu.memory_space<vmem>>, vector<16x128xbf16>
      tpu.vector_store %arg15[%c32_73, %c0_74], %188 {strides = array<i32>} : memref<128x128xbf16, #tpu.memory_space<vmem>>, vector<16x128xbf16>,
      %c48 = arith.constant 48 : index
      %c0_75 = arith.constant 0 : index
      %190 = vector.load %arg14[%c48, %c0_75] : memref<128x512xf32, #tpu.memory_space<vmem>>, vector<16x512xf32>
      %191 = arith.truncf %180 : vector<16x128xf32> to vector<16x128xbf16>
      %cst_76 = arith.constant dense<0.000000e+00> : vector<16x512xf32>
      %192 = tpu.matmul %191, %49, %cst_76 {dimension_numbers = #tpu.dot_dimension_numbers<[1], [0], [0], [1], [0, 0, 1, 1], [], []>} : vector<16x128xbf16>, vector<128x512xbf16>, vector<16x512xf32> -> vector<16x512xf32>
      %193 = arith.addf %190, %192 : vector<16x512xf32>
      %194 = vector.extract_strided_slice %193 {offsets = [0, 0], sizes = [16, 128], strides = [1, 1]} : vector<16x512xf32> to vector<16x128xf32>
      %195 = arith.negf %194 : vector<16x128xf32>
      %196 = math.exp %195 : vector<16x128xf32>
      %cst_77 = arith.constant 1.000000e+00 : f32
      %197 = vector.broadcast %cst_77 : f32 to vector<16x128xf32>
      %198 = arith.addf %197, %196 : vector<16x128xf32>
      %199 = arith.divf %197, %198 : vector<16x128xf32>
      %200 = vector.extract_strided_slice %193 {offsets = [0, 128], sizes = [16, 128], strides = [1, 1]} : vector<16x512xf32> to vector<16x128xf32>
      %201 = arith.negf %200 : vector<16x128xf32>
      %202 = math.exp %201 : vector<16x128xf32>
      %cst_78 = arith.constant 1.000000e+00 : f32
      %203 = vector.broadcast %cst_78 : f32 to vector<16x128xf32>
      %204 = arith.addf %203, %202 : vector<16x128xf32>
      %205 = arith.divf %203, %204 : vector<16x128xf32>
      %206 = vector.extract_strided_slice %193 {offsets = [0, 256], sizes = [16, 128], strides = [1, 1]} : vector<16x512xf32> to vector<16x128xf32>
      %207 = math.tanh %206 : vector<16x128xf32>
      %208 = vector.extract_strided_slice %193 {offsets = [0, 384], sizes = [16, 128], strides = [1, 1]} : vector<16x512xf32> to vector<16x128xf32>
      %209 = arith.negf %208 : vector<16x128xf32>
      %210 = math.exp %209 : vector<16x128xf32>
      %cst_79 = arith.constant 1.000000e+00 : f32
      %211 = vector.broadcast %cst_79 : f32 to vector<16x128xf32>
      %212 = arith.addf %211, %210 : vector<16x128xf32>
      %213 = arith.divf %211, %212 : vector<16x128xf32>
      %214 = arith.mulf %205, %187 : vector<16x128xf32>
      %215 = arith.mulf %199, %207 : vector<16x128xf32>
      %216 = arith.addf %214, %215 : vector<16x128xf32>
      %217 = math.tanh %216 : vector<16x128xf32>
      %218 = arith.mulf %213, %217 : vector<16x128xf32>
      %c48_80 = arith.constant 48 : index
      %c0_81 = arith.constant 0 : index
      %219 = vector.load %arg2[%c48_80, %c0_81] : memref<128x1xf32, #tpu.memory_space<vmem>>, vector<16x1xf32>
      %220 = vector.broadcast %219 : vector<16x1xf32> to vector<16x128xf32>
      %221 = arith.mulf %220, %218 : vector<16x128xf32>
      %cst_82 = arith.constant 1.000000e+00 : f32
      %222 = vector.broadcast %cst_82 : f32 to vector<16x1xf32>
      %223 = arith.subf %222, %219 : vector<16x1xf32>
      %224 = vector.broadcast %223 : vector<16x1xf32> to vector<16x128xf32>
      %225 = arith.mulf %224, %180 : vector<16x128xf32>
      %226 = arith.addf %221, %225 : vector<16x128xf32>
      %227 = vector.broadcast %219 : vector<16x1xf32> to vector<16x128xf32>
      %228 = arith.mulf %227, %216 : vector<16x128xf32>
      %cst_83 = arith.constant 1.000000e+00 : f32
      %229 = vector.broadcast %cst_83 : f32 to vector<16x1xf32>
      %230 = arith.subf %229, %219 : vector<16x1xf32>
      %231 = vector.broadcast %230 : vector<16x1xf32> to vector<16x128xf32>
      %232 = arith.mulf %231, %187 : vector<16x128xf32>
      %233 = arith.addf %228, %232 : vector<16x128xf32>
      %234 = arith.truncf %226 : vector<16x128xf32> to vector<16x128xbf16>
      %c48_84 = arith.constant 48 : index
      %c0_85 = arith.constant 0 : index
      %235 = vector.load %arg15[%c48_84, %c0_85] : memref<128x128xbf16, #tpu.memory_space<vmem>>, vector<16x128xbf16>
      tpu.vector_store %arg15[%c48_84, %c0_85], %234 {strides = array<i32>} : memref<128x128xbf16, #tpu.memory_space<vmem>>, vector<16x128xbf16>,
      %c64 = arith.constant 64 : index
      %c0_86 = arith.constant 0 : index
      %236 = vector.load %arg14[%c64, %c0_86] : memref<128x512xf32, #tpu.memory_space<vmem>>, vector<16x512xf32>
      %237 = arith.truncf %226 : vector<16x128xf32> to vector<16x128xbf16>
      %cst_87 = arith.constant dense<0.000000e+00> : vector<16x512xf32>
      %238 = tpu.matmul %237, %49, %cst_87 {dimension_numbers = #tpu.dot_dimension_numbers<[1], [0], [0], [1], [0, 0, 1, 1], [], []>} : vector<16x128xbf16>, vector<128x512xbf16>, vector<16x512xf32> -> vector<16x512xf32>
      %239 = arith.addf %236, %238 : vector<16x512xf32>
      %240 = vector.extract_strided_slice %239 {offsets = [0, 0], sizes = [16, 128], strides = [1, 1]} : vector<16x512xf32> to vector<16x128xf32>
      %241 = arith.negf %240 : vector<16x128xf32>
      %242 = math.exp %241 : vector<16x128xf32>
      %cst_88 = arith.constant 1.000000e+00 : f32
      %243 = vector.broadcast %cst_88 : f32 to vector<16x128xf32>
      %244 = arith.addf %243, %242 : vector<16x128xf32>
      %245 = arith.divf %243, %244 : vector<16x128xf32>
      %246 = vector.extract_strided_slice %239 {offsets = [0, 128], sizes = [16, 128], strides = [1, 1]} : vector<16x512xf32> to vector<16x128xf32>
      %247 = arith.negf %246 : vector<16x128xf32>
      %248 = math.exp %247 : vector<16x128xf32>
      %cst_89 = arith.constant 1.000000e+00 : f32
      %249 = vector.broadcast %cst_89 : f32 to vector<16x128xf32>
      %250 = arith.addf %249, %248 : vector<16x128xf32>
      %251 = arith.divf %249, %250 : vector<16x128xf32>
      %252 = vector.extract_strided_slice %239 {offsets = [0, 256], sizes = [16, 128], strides = [1, 1]} : vector<16x512xf32> to vector<16x128xf32>
      %253 = math.tanh %252 : vector<16x128xf32>
      %254 = vector.extract_strided_slice %239 {offsets = [0, 384], sizes = [16, 128], strides = [1, 1]} : vector<16x512xf32> to vector<16x128xf32>
      %255 = arith.negf %254 : vector<16x128xf32>
      %256 = math.exp %255 : vector<16x128xf32>
      %cst_90 = arith.constant 1.000000e+00 : f32
      %257 = vector.broadcast %cst_90 : f32 to vector<16x128xf32>
      %258 = arith.addf %257, %256 : vector<16x128xf32>
      %259 = arith.divf %257, %258 : vector<16x128xf32>
      %260 = arith.mulf %251, %233 : vector<16x128xf32>
      %261 = arith.mulf %245, %253 : vector<16x128xf32>
      %262 = arith.addf %260, %261 : vector<16x128xf32>
      %263 = math.tanh %262 : vector<16x128xf32>
      %264 = arith.mulf %259, %263 : vector<16x128xf32>
      %c64_91 = arith.constant 64 : index
      %c0_92 = arith.constant 0 : index
      %265 = vector.load %arg2[%c64_91, %c0_92] : memref<128x1xf32, #tpu.memory_space<vmem>>, vector<16x1xf32>
      %266 = vector.broadcast %265 : vector<16x1xf32> to vector<16x128xf32>
      %267 = arith.mulf %266, %264 : vector<16x128xf32>
      %cst_93 = arith.constant 1.000000e+00 : f32
      %268 = vector.broadcast %cst_93 : f32 to vector<16x1xf32>
      %269 = arith.subf %268, %265 : vector<16x1xf32>
      %270 = vector.broadcast %269 : vector<16x1xf32> to vector<16x128xf32>
      %271 = arith.mulf %270, %226 : vector<16x128xf32>
      %272 = arith.addf %267, %271 : vector<16x128xf32>
      %273 = vector.broadcast %265 : vector<16x1xf32> to vector<16x128xf32>
      %274 = arith.mulf %273, %262 : vector<16x128xf32>
      %cst_94 = arith.constant 1.000000e+00 : f32
      %275 = vector.broadcast %cst_94 : f32 to vector<16x1xf32>
      %276 = arith.subf %275, %265 : vector<16x1xf32>
      %277 = vector.broadcast %276 : vector<16x1xf32> to vector<16x128xf32>
      %278 = arith.mulf %277, %233 : vector<16x128xf32>
      %279 = arith.addf %274, %278 : vector<16x128xf32>
      %280 = arith.truncf %272 : vector<16x128xf32> to vector<16x128xbf16>
      %c64_95 = arith.constant 64 : index
      %c0_96 = arith.constant 0 : index
      %281 = vector.load %arg15[%c64_95, %c0_96] : memref<128x128xbf16, #tpu.memory_space<vmem>>, vector<16x128xbf16>
      tpu.vector_store %arg15[%c64_95, %c0_96], %280 {strides = array<i32>} : memref<128x128xbf16, #tpu.memory_space<vmem>>, vector<16x128xbf16>,
      %c80 = arith.constant 80 : index
      %c0_97 = arith.constant 0 : index
      %282 = vector.load %arg14[%c80, %c0_97] : memref<128x512xf32, #tpu.memory_space<vmem>>, vector<16x512xf32>
      %283 = arith.truncf %272 : vector<16x128xf32> to vector<16x128xbf16>
      %cst_98 = arith.constant dense<0.000000e+00> : vector<16x512xf32>
      %284 = tpu.matmul %283, %49, %cst_98 {dimension_numbers = #tpu.dot_dimension_numbers<[1], [0], [0], [1], [0, 0, 1, 1], [], []>} : vector<16x128xbf16>, vector<128x512xbf16>, vector<16x512xf32> -> vector<16x512xf32>
      %285 = arith.addf %282, %284 : vector<16x512xf32>
      %286 = vector.extract_strided_slice %285 {offsets = [0, 0], sizes = [16, 128], strides = [1, 1]} : vector<16x512xf32> to vector<16x128xf32>
      %287 = arith.negf %286 : vector<16x128xf32>
      %288 = math.exp %287 : vector<16x128xf32>
      %cst_99 = arith.constant 1.000000e+00 : f32
      %289 = vector.broadcast %cst_99 : f32 to vector<16x128xf32>
      %290 = arith.addf %289, %288 : vector<16x128xf32>
      %291 = arith.divf %289, %290 : vector<16x128xf32>
      %292 = vector.extract_strided_slice %285 {offsets = [0, 128], sizes = [16, 128], strides = [1, 1]} : vector<16x512xf32> to vector<16x128xf32>
      %293 = arith.negf %292 : vector<16x128xf32>
      %294 = math.exp %293 : vector<16x128xf32>
      %cst_100 = arith.constant 1.000000e+00 : f32
      %295 = vector.broadcast %cst_100 : f32 to vector<16x128xf32>
      %296 = arith.addf %295, %294 : vector<16x128xf32>
      %297 = arith.divf %295, %296 : vector<16x128xf32>
      %298 = vector.extract_strided_slice %285 {offsets = [0, 256], sizes = [16, 128], strides = [1, 1]} : vector<16x512xf32> to vector<16x128xf32>
      %299 = math.tanh %298 : vector<16x128xf32>
      %300 = vector.extract_strided_slice %285 {offsets = [0, 384], sizes = [16, 128], strides = [1, 1]} : vector<16x512xf32> to vector<16x128xf32>
      %301 = arith.negf %300 : vector<16x128xf32>
      %302 = math.exp %301 : vector<16x128xf32>
      %cst_101 = arith.constant 1.000000e+00 : f32
      %303 = vector.broadcast %cst_101 : f32 to vector<16x128xf32>
      %304 = arith.addf %303, %302 : vector<16x128xf32>
      %305 = arith.divf %303, %304 : vector<16x128xf32>
      %306 = arith.mulf %297, %279 : vector<16x128xf32>
      %307 = arith.mulf %291, %299 : vector<16x128xf32>
      %308 = arith.addf %306, %307 : vector<16x128xf32>
      %309 = math.tanh %308 : vector<16x128xf32>
      %310 = arith.mulf %305, %309 : vector<16x128xf32>
      %c80_102 = arith.constant 80 : index
      %c0_103 = arith.constant 0 : index
      %311 = vector.load %arg2[%c80_102, %c0_103] : memref<128x1xf32, #tpu.memory_space<vmem>>, vector<16x1xf32>
      %312 = vector.broadcast %311 : vector<16x1xf32> to vector<16x128xf32>
      %313 = arith.mulf %312, %310 : vector<16x128xf32>
      %cst_104 = arith.constant 1.000000e+00 : f32
      %314 = vector.broadcast %cst_104 : f32 to vector<16x1xf32>
      %315 = arith.subf %314, %311 : vector<16x1xf32>
      %316 = vector.broadcast %315 : vector<16x1xf32> to vector<16x128xf32>
      %317 = arith.mulf %316, %272 : vector<16x128xf32>
      %318 = arith.addf %313, %317 : vector<16x128xf32>
      %319 = vector.broadcast %311 : vector<16x1xf32> to vector<16x128xf32>
      %320 = arith.mulf %319, %308 : vector<16x128xf32>
      %cst_105 = arith.constant 1.000000e+00 : f32
      %321 = vector.broadcast %cst_105 : f32 to vector<16x1xf32>
      %322 = arith.subf %321, %311 : vector<16x1xf32>
      %323 = vector.broadcast %322 : vector<16x1xf32> to vector<16x128xf32>
      %324 = arith.mulf %323, %279 : vector<16x128xf32>
      %325 = arith.addf %320, %324 : vector<16x128xf32>
      %326 = arith.truncf %318 : vector<16x128xf32> to vector<16x128xbf16>
      %c80_106 = arith.constant 80 : index
      %c0_107 = arith.constant 0 : index
      %327 = vector.load %arg15[%c80_106, %c0_107] : memref<128x128xbf16, #tpu.memory_space<vmem>>, vector<16x128xbf16>
      tpu.vector_store %arg15[%c80_106, %c0_107], %326 {strides = array<i32>} : memref<128x128xbf16, #tpu.memory_space<vmem>>, vector<16x128xbf16>,
      %c96 = arith.constant 96 : index
      %c0_108 = arith.constant 0 : index
      %328 = vector.load %arg14[%c96, %c0_108] : memref<128x512xf32, #tpu.memory_space<vmem>>, vector<16x512xf32>
      %329 = arith.truncf %318 : vector<16x128xf32> to vector<16x128xbf16>
      %cst_109 = arith.constant dense<0.000000e+00> : vector<16x512xf32>
      %330 = tpu.matmul %329, %49, %cst_109 {dimension_numbers = #tpu.dot_dimension_numbers<[1], [0], [0], [1], [0, 0, 1, 1], [], []>} : vector<16x128xbf16>, vector<128x512xbf16>, vector<16x512xf32> -> vector<16x512xf32>
      %331 = arith.addf %328, %330 : vector<16x512xf32>
      %332 = vector.extract_strided_slice %331 {offsets = [0, 0], sizes = [16, 128], strides = [1, 1]} : vector<16x512xf32> to vector<16x128xf32>
      %333 = arith.negf %332 : vector<16x128xf32>
      %334 = math.exp %333 : vector<16x128xf32>
      %cst_110 = arith.constant 1.000000e+00 : f32
      %335 = vector.broadcast %cst_110 : f32 to vector<16x128xf32>
      %336 = arith.addf %335, %334 : vector<16x128xf32>
      %337 = arith.divf %335, %336 : vector<16x128xf32>
      %338 = vector.extract_strided_slice %331 {offsets = [0, 128], sizes = [16, 128], strides = [1, 1]} : vector<16x512xf32> to vector<16x128xf32>
      %339 = arith.negf %338 : vector<16x128xf32>
      %340 = math.exp %339 : vector<16x128xf32>
      %cst_111 = arith.constant 1.000000e+00 : f32
      %341 = vector.broadcast %cst_111 : f32 to vector<16x128xf32>
      %342 = arith.addf %341, %340 : vector<16x128xf32>
      %343 = arith.divf %341, %342 : vector<16x128xf32>
      %344 = vector.extract_strided_slice %331 {offsets = [0, 256], sizes = [16, 128], strides = [1, 1]} : vector<16x512xf32> to vector<16x128xf32>
      %345 = math.tanh %344 : vector<16x128xf32>
      %346 = vector.extract_strided_slice %331 {offsets = [0, 384], sizes = [16, 128], strides = [1, 1]} : vector<16x512xf32> to vector<16x128xf32>
      %347 = arith.negf %346 : vector<16x128xf32>
      %348 = math.exp %347 : vector<16x128xf32>
      %cst_112 = arith.constant 1.000000e+00 : f32
      %349 = vector.broadcast %cst_112 : f32 to vector<16x128xf32>
      %350 = arith.addf %349, %348 : vector<16x128xf32>
      %351 = arith.divf %349, %350 : vector<16x128xf32>
      %352 = arith.mulf %343, %325 : vector<16x128xf32>
      %353 = arith.mulf %337, %345 : vector<16x128xf32>
      %354 = arith.addf %352, %353 : vector<16x128xf32>
      %355 = math.tanh %354 : vector<16x128xf32>
      %356 = arith.mulf %351, %355 : vector<16x128xf32>
      %c96_113 = arith.constant 96 : index
      %c0_114 = arith.constant 0 : index
      %357 = vector.load %arg2[%c96_113, %c0_114] : memref<128x1xf32, #tpu.memory_space<vmem>>, vector<16x1xf32>
      %358 = vector.broadcast %357 : vector<16x1xf32> to vector<16x128xf32>
      %359 = arith.mulf %358, %356 : vector<16x128xf32>
      %cst_115 = arith.constant 1.000000e+00 : f32
      %360 = vector.broadcast %cst_115 : f32 to vector<16x1xf32>
      %361 = arith.subf %360, %357 : vector<16x1xf32>
      %362 = vector.broadcast %361 : vector<16x1xf32> to vector<16x128xf32>
      %363 = arith.mulf %362, %318 : vector<16x128xf32>
      %364 = arith.addf %359, %363 : vector<16x128xf32>
      %365 = vector.broadcast %357 : vector<16x1xf32> to vector<16x128xf32>
      %366 = arith.mulf %365, %354 : vector<16x128xf32>
      %cst_116 = arith.constant 1.000000e+00 : f32
      %367 = vector.broadcast %cst_116 : f32 to vector<16x1xf32>
      %368 = arith.subf %367, %357 : vector<16x1xf32>
      %369 = vector.broadcast %368 : vector<16x1xf32> to vector<16x128xf32>
      %370 = arith.mulf %369, %325 : vector<16x128xf32>
      %371 = arith.addf %366, %370 : vector<16x128xf32>
      %372 = arith.truncf %364 : vector<16x128xf32> to vector<16x128xbf16>
      %c96_117 = arith.constant 96 : index
      %c0_118 = arith.constant 0 : index
      %373 = vector.load %arg15[%c96_117, %c0_118] : memref<128x128xbf16, #tpu.memory_space<vmem>>, vector<16x128xbf16>
      tpu.vector_store %arg15[%c96_117, %c0_118], %372 {strides = array<i32>} : memref<128x128xbf16, #tpu.memory_space<vmem>>, vector<16x128xbf16>,
      %c112 = arith.constant 112 : index
      %c0_119 = arith.constant 0 : index
      %374 = vector.load %arg14[%c112, %c0_119] : memref<128x512xf32, #tpu.memory_space<vmem>>, vector<16x512xf32>
      %375 = arith.truncf %364 : vector<16x128xf32> to vector<16x128xbf16>
      %cst_120 = arith.constant dense<0.000000e+00> : vector<16x512xf32>
      %376 = tpu.matmul %375, %49, %cst_120 {dimension_numbers = #tpu.dot_dimension_numbers<[1], [0], [0], [1], [0, 0, 1, 1], [], []>} : vector<16x128xbf16>, vector<128x512xbf16>, vector<16x512xf32> -> vector<16x512xf32>
      %377 = arith.addf %374, %376 : vector<16x512xf32>
      %378 = vector.extract_strided_slice %377 {offsets = [0, 0], sizes = [16, 128], strides = [1, 1]} : vector<16x512xf32> to vector<16x128xf32>
      %379 = arith.negf %378 : vector<16x128xf32>
      %380 = math.exp %379 : vector<16x128xf32>
      %cst_121 = arith.constant 1.000000e+00 : f32
      %381 = vector.broadcast %cst_121 : f32 to vector<16x128xf32>
      %382 = arith.addf %381, %380 : vector<16x128xf32>
      %383 = arith.divf %381, %382 : vector<16x128xf32>
      %384 = vector.extract_strided_slice %377 {offsets = [0, 128], sizes = [16, 128], strides = [1, 1]} : vector<16x512xf32> to vector<16x128xf32>
      %385 = arith.negf %384 : vector<16x128xf32>
      %386 = math.exp %385 : vector<16x128xf32>
      %cst_122 = arith.constant 1.000000e+00 : f32
      %387 = vector.broadcast %cst_122 : f32 to vector<16x128xf32>
      %388 = arith.addf %387, %386 : vector<16x128xf32>
      %389 = arith.divf %387, %388 : vector<16x128xf32>
      %390 = vector.extract_strided_slice %377 {offsets = [0, 256], sizes = [16, 128], strides = [1, 1]} : vector<16x512xf32> to vector<16x128xf32>
      %391 = math.tanh %390 : vector<16x128xf32>
      %392 = vector.extract_strided_slice %377 {offsets = [0, 384], sizes = [16, 128], strides = [1, 1]} : vector<16x512xf32> to vector<16x128xf32>
      %393 = arith.negf %392 : vector<16x128xf32>
      %394 = math.exp %393 : vector<16x128xf32>
      %cst_123 = arith.constant 1.000000e+00 : f32
      %395 = vector.broadcast %cst_123 : f32 to vector<16x128xf32>
      %396 = arith.addf %395, %394 : vector<16x128xf32>
      %397 = arith.divf %395, %396 : vector<16x128xf32>
      %398 = arith.mulf %389, %371 : vector<16x128xf32>
      %399 = arith.mulf %383, %391 : vector<16x128xf32>
      %400 = arith.addf %398, %399 : vector<16x128xf32>
      %401 = math.tanh %400 : vector<16x128xf32>
      %402 = arith.mulf %397, %401 : vector<16x128xf32>
      %c112_124 = arith.constant 112 : index
      %c0_125 = arith.constant 0 : index
      %403 = vector.load %arg2[%c112_124, %c0_125] : memref<128x1xf32, #tpu.memory_space<vmem>>, vector<16x1xf32>
      %404 = vector.broadcast %403 : vector<16x1xf32> to vector<16x128xf32>
      %405 = arith.mulf %404, %402 : vector<16x128xf32>
      %cst_126 = arith.constant 1.000000e+00 : f32
      %406 = vector.broadcast %cst_126 : f32 to vector<16x1xf32>
      %407 = arith.subf %406, %403 : vector<16x1xf32>
      %408 = vector.broadcast %407 : vector<16x1xf32> to vector<16x128xf32>
      %409 = arith.mulf %408, %364 : vector<16x128xf32>
      %410 = arith.addf %405, %409 : vector<16x128xf32>
      %411 = vector.broadcast %403 : vector<16x1xf32> to vector<16x128xf32>
      %412 = arith.mulf %411, %400 : vector<16x128xf32>
      %cst_127 = arith.constant 1.000000e+00 : f32
      %413 = vector.broadcast %cst_127 : f32 to vector<16x1xf32>
      %414 = arith.subf %413, %403 : vector<16x1xf32>
      %415 = vector.broadcast %414 : vector<16x1xf32> to vector<16x128xf32>
      %416 = arith.mulf %415, %371 : vector<16x128xf32>
      %417 = arith.addf %412, %416 : vector<16x128xf32>
      %418 = arith.truncf %410 : vector<16x128xf32> to vector<16x128xbf16>
      %c112_128 = arith.constant 112 : index
      %c0_129 = arith.constant 0 : index
      %419 = vector.load %arg15[%c112_128, %c0_129] : memref<128x128xbf16, #tpu.memory_space<vmem>>, vector<16x128xbf16>
      tpu.vector_store %arg15[%c112_128, %c0_129], %418 {strides = array<i32>} : memref<128x128xbf16, #tpu.memory_space<vmem>>, vector<16x128xbf16>,
      %c0_130 = arith.constant 0 : index
      %c0_131 = arith.constant 0 : index
      %420 = vector.load %arg11[%c0_130, %c0_131] : memref<16x128xf32, #tpu.memory_space<vmem>>, vector<16x128xf32>
      tpu.vector_store %arg11[%c0_130, %c0_131], %410 {strides = array<i32>} : memref<16x128xf32, #tpu.memory_space<vmem>>, vector<16x128xf32>,
      %c0_132 = arith.constant 0 : index
      %c0_133 = arith.constant 0 : index
      %421 = vector.load %arg12[%c0_132, %c0_133] : memref<16x128xf32, #tpu.memory_space<vmem>>, vector<16x128xf32>
      tpu.vector_store %arg12[%c0_132, %c0_133], %417 {strides = array<i32>} : memref<16x128xf32, #tpu.memory_space<vmem>>, vector<16x128xf32>,
      %cst_134 = arith.constant 0xFF800000 : f32
      %422 = vector.broadcast %cst_134 : f32 to vector<128x1xf32>
      %c0_135 = arith.constant 0 : index
      %c0_136 = arith.constant 0 : index
      %423 = vector.load %arg16[%c0_135, %c0_136] : memref<128x1xf32, #tpu.memory_space<vmem>>, vector<128x1xf32>
      tpu.vector_store %arg16[%c0_135, %c0_136], %422 {strides = array<i32>} : memref<128x1xf32, #tpu.memory_space<vmem>>, vector<128x1xf32>,
      %cst_137 = arith.constant 0.000000e+00 : f32
      %424 = vector.broadcast %cst_137 : f32 to vector<128x1xf32>
      %c0_138 = arith.constant 0 : index
      %c0_139 = arith.constant 0 : index
      %425 = vector.load %arg17[%c0_138, %c0_139] : memref<128x1xf32, #tpu.memory_space<vmem>>, vector<128x1xf32>
      tpu.vector_store %arg17[%c0_138, %c0_139], %424 {strides = array<i32>} : memref<128x1xf32, #tpu.memory_space<vmem>>, vector<128x1xf32>,
      %cst_140 = arith.constant 0.000000e+00 : f32
      %426 = vector.broadcast %cst_140 : f32 to vector<128x1xf32>
      %c0_141 = arith.constant 0 : index
      %c0_142 = arith.constant 0 : index
      %427 = vector.load %arg18[%c0_141, %c0_142] : memref<128x1xf32, #tpu.memory_space<vmem>>, vector<128x1xf32>
      tpu.vector_store %arg18[%c0_141, %c0_142], %426 {strides = array<i32>} : memref<128x1xf32, #tpu.memory_space<vmem>>, vector<128x1xf32>,
    } else {
    }
    %c0 = arith.constant 0 : index
    %c0_1 = arith.constant 0 : index
    %3 = vector.load %arg15[%c0, %c0_1] : memref<128x128xbf16, #tpu.memory_space<vmem>>, vector<128x128xbf16>
    %c0_2 = arith.constant 0 : index
    %c0_3 = arith.constant 0 : index
    %4 = vector.load %arg7[%c0_2, %c0_3] : memref<128x128xbf16, #tpu.memory_space<vmem>>, vector<128x128xbf16>
    %cst = arith.constant dense<0.000000e+00> : vector<128x128xf32>
    %5 = tpu.matmul %3, %4, %cst {dimension_numbers = #tpu.dot_dimension_numbers<[1], [0], [0], [1], [0, 0, 1, 1], [], []>} : vector<128x128xbf16>, vector<128x128xbf16>, vector<128x128xf32> -> vector<128x128xf32>
    %c0_4 = arith.constant 0 : index
    %c0_5 = arith.constant 0 : index
    %6 = vector.load %arg8[%c0_4, %c0_5] : memref<1x128xf32, #tpu.memory_space<vmem>>, vector<1x128xf32>
    %7 = vector.broadcast %6 : vector<1x128xf32> to vector<128x128xf32>
    %8 = arith.addf %5, %7 : vector<128x128xf32>
    %c128_i32 = arith.constant 128 : i32
    %9 = arith.muli %arg0, %c128_i32 : i32
    %10 = tpu.iota {dimensions = array<i32: 1>} : vector<128x128xi32>
    %11 = vector.broadcast %9 : i32 to vector<128x128xi32>
    %12 = arith.addi %11, %10 : vector<128x128xi32>
    %c0_6 = arith.constant 0 : index
    %c0_7 = arith.constant 0 : index
    %13 = vector.load %arg18[%c0_6, %c0_7] : memref<128x1xf32, #tpu.memory_space<vmem>>, vector<128x1xf32>
    %c0_8 = arith.constant 0 : index
    %c0_9 = arith.constant 0 : index
    %14 = vector.load %arg3[%c0_8, %c0_9] : memref<128x1xi32, #tpu.memory_space<vmem>>, vector<128x1xi32>
    %15 = vector.broadcast %14 : vector<128x1xi32> to vector<128x128xi32>
    %16 = arith.cmpi eq, %12, %15 : vector<128x128xi32>
    %cst_10 = arith.constant 0.000000e+00 : f32
    %17 = vector.broadcast %cst_10 : f32 to vector<128x128xf32>
    %18 = arith.select %16, %8, %17 : vector<128x128xi1>, vector<128x128xf32>
    %cst_11 = arith.constant dense<0.000000e+00> : vector<128xf32>
    %19 = vector.multi_reduction <add>, %18, %cst_11 [1] : vector<128x128xf32> to vector<128xf32>
    %20 = vector.shape_cast %19 : vector<128xf32> to vector<128x1xf32>
    %21 = arith.addf %13, %20 : vector<128x1xf32>
    %c0_12 = arith.constant 0 : index
    %c0_13 = arith.constant 0 : index
    %22 = vector.load %arg18[%c0_12, %c0_13] : memref<128x1xf32, #tpu.memory_space<vmem>>, vector<128x1xf32>
    tpu.vector_store %arg18[%c0_12, %c0_13], %21 {strides = array<i32>} : memref<128x1xf32, #tpu.memory_space<vmem>>, vector<128x1xf32>,
    %cst_14 = arith.constant dense<0xFF800000> : vector<128xf32>
    %23 = vector.multi_reduction <maximumf>, %8, %cst_14 [1] : vector<128x128xf32> to vector<128xf32>
    %24 = vector.shape_cast %23 : vector<128xf32> to vector<128x1xf32>
    %c0_15 = arith.constant 0 : index
    %c0_16 = arith.constant 0 : index
    %25 = vector.load %arg16[%c0_15, %c0_16] : memref<128x1xf32, #tpu.memory_space<vmem>>, vector<128x1xf32>
    %26 = arith.maximumf %25, %24 : vector<128x1xf32>
    %c0_17 = arith.constant 0 : index
    %c0_18 = arith.constant 0 : index
    %27 = vector.load %arg17[%c0_17, %c0_18] : memref<128x1xf32, #tpu.memory_space<vmem>>, vector<128x1xf32>
    %28 = arith.subf %25, %26 : vector<128x1xf32>
    %29 = math.exp %28 : vector<128x1xf32>
    %30 = arith.mulf %27, %29 : vector<128x1xf32>
    %31 = vector.broadcast %26 : vector<128x1xf32> to vector<128x128xf32>
    %32 = arith.subf %8, %31 : vector<128x128xf32>
    %33 = math.exp %32 : vector<128x128xf32>
    %cst_19 = arith.constant dense<0.000000e+00> : vector<128xf32>
    %34 = vector.multi_reduction <add>, %33, %cst_19 [1] : vector<128x128xf32> to vector<128xf32>
    %35 = vector.shape_cast %34 : vector<128xf32> to vector<128x1xf32>
    %36 = arith.addf %30, %35 : vector<128x1xf32>
    %c0_20 = arith.constant 0 : index
    %c0_21 = arith.constant 0 : index
    %37 = vector.load %arg17[%c0_20, %c0_21] : memref<128x1xf32, #tpu.memory_space<vmem>>, vector<128x1xf32>
    tpu.vector_store %arg17[%c0_20, %c0_21], %36 {strides = array<i32>} : memref<128x1xf32, #tpu.memory_space<vmem>>, vector<128x1xf32>,
    %c0_22 = arith.constant 0 : index
    %c0_23 = arith.constant 0 : index
    %38 = vector.load %arg16[%c0_22, %c0_23] : memref<128x1xf32, #tpu.memory_space<vmem>>, vector<128x1xf32>
    tpu.vector_store %arg16[%c0_22, %c0_23], %26 {strides = array<i32>} : memref<128x1xf32, #tpu.memory_space<vmem>>, vector<128x1xf32>,
    %c0_i32_24 = arith.constant 0 : i32
    %39 = arith.cmpi eq, %arg0, %c0_i32_24 : i32
    %40 = arith.extui %39 : i1 to i32
    %c0_i32_25 = arith.constant 0 : i32
    %41 = arith.cmpi ne, %40, %c0_i32_25 : i32
    scf.if %41 {
      %c0_26 = arith.constant 0 : index
      %c0_27 = arith.constant 0 : index
      %42 = vector.load %arg16[%c0_26, %c0_27] : memref<128x1xf32, #tpu.memory_space<vmem>>, vector<128x1xf32>
      %c0_28 = arith.constant 0 : index
      %c0_29 = arith.constant 0 : index
      %43 = vector.load %arg17[%c0_28, %c0_29] : memref<128x1xf32, #tpu.memory_space<vmem>>, vector<128x1xf32>
      %44 = math.log %43 : vector<128x1xf32>
      %45 = arith.addf %42, %44 : vector<128x1xf32>
      %c0_30 = arith.constant 0 : index
      %c0_31 = arith.constant 0 : index
      %46 = vector.load %arg18[%c0_30, %c0_31] : memref<128x1xf32, #tpu.memory_space<vmem>>, vector<128x1xf32>
      %47 = arith.subf %45, %46 : vector<128x1xf32>
      %c0_32 = arith.constant 0 : index
      %c0_33 = arith.constant 0 : index
      %48 = vector.load %arg2[%c0_32, %c0_33] : memref<128x1xf32, #tpu.memory_space<vmem>>, vector<128x1xf32>
      %49 = arith.mulf %48, %47 : vector<128x1xf32>
      %50 = vector.shape_cast %49 : vector<128x1xf32> to vector<1x128x1xf32>
      %cst_34 = arith.constant dense<0.000000e+00> : vector<1xf32>
      %51 = vector.multi_reduction <add>, %50, %cst_34 [1, 2] : vector<1x128x1xf32> to vector<1xf32>
      %52 = vector.shape_cast %51 : vector<1xf32> to vector<1x1x1xf32>
      %53 = vector.extract %52[0, 0, 0] : f32 from vector<1x1x1xf32>
      %54 = vector.broadcast %53 : f32 to vector<1x1xf32>
      %55 = vector.shape_cast %48 : vector<128x1xf32> to vector<1x128x1xf32>
      %cst_35 = arith.constant dense<0.000000e+00> : vector<1xf32>
      %56 = vector.multi_reduction <add>, %55, %cst_35 [1, 2] : vector<1x128x1xf32> to vector<1xf32>
      %57 = vector.shape_cast %56 : vector<1xf32> to vector<1x1x1xf32>
      %58 = vector.extract %57[0, 0, 0] : f32 from vector<1x1x1xf32>
      %59 = vector.broadcast %58 : f32 to vector<1x1xf32>
      %cst_36 = arith.constant 1.000000e+00 : f32
      %60 = vector.broadcast %cst_36 : f32 to vector<1x1xf32>
      %61 = arith.maximumf %59, %60 : vector<1x1xf32>
      %62 = arith.divf %54, %61 : vector<1x1xf32>
      %c0_37 = arith.constant 0 : index
      %c0_38 = arith.constant 0 : index
      %63 = vector.load %arg13[%c0_37, %c0_38] : memref<1x1xf32, #tpu.memory_space<vmem>>, vector<1x1xf32>
      tpu.vector_store %arg13[%c0_37, %c0_38], %62 {strides = array<i32>} : memref<1x1xf32, #tpu.memory_space<vmem>>, vector<1x1xf32>,
    } else {
    }
    return
  }
  func.func @transform_0(%arg0: i32) -> (i32, i32) {
    %c0_i32 = arith.constant 0 : i32
    %c0_i32_0 = arith.constant 0 : i32
    %c0_i32_1 = arith.constant 0 : i32
    return %c0_i32, %c0_i32_0 : i32, i32
  }
  func.func @transform_1(%arg0: i32) -> (i32, i32) {
    %c0_i32 = arith.constant 0 : i32
    %c0_i32_0 = arith.constant 0 : i32
    %c0_i32_1 = arith.constant 0 : i32
    return %c0_i32, %c0_i32_0 : i32, i32
  }
  func.func @transform_2(%arg0: i32) -> (i32, i32) {
    %c0_i32 = arith.constant 0 : i32
    %c0_i32_0 = arith.constant 0 : i32
    %c0_i32_1 = arith.constant 0 : i32
    return %c0_i32, %c0_i32_0 : i32, i32
  }
  func.func @transform_3(%arg0: i32) -> (i32, i32) {
    %c0_i32 = arith.constant 0 : i32
    %c0_i32_0 = arith.constant 0 : i32
    %c0_i32_1 = arith.constant 0 : i32
    return %c0_i32, %c0_i32_0 : i32, i32
  }
  func.func @transform_4(%arg0: i32) -> (i32, i32) {
    %c0_i32 = arith.constant 0 : i32
    %c0_i32_0 = arith.constant 0 : i32
    %c0_i32_1 = arith.constant 0 : i32
    return %c0_i32, %c0_i32_0 : i32, i32
  }
  func.func @transform_5(%arg0: i32) -> (i32, i32) {
    %c0_i32 = arith.constant 0 : i32
    %c0_i32_0 = arith.constant 0 : i32
    %c0_i32_1 = arith.constant 0 : i32
    return %c0_i32, %c0_i32_0 : i32, i32
  }
  func.func @transform_6(%arg0: i32) -> (i32, i32) {
    %c0_i32 = arith.constant 0 : i32
    %c0_i32_0 = arith.constant 0 : i32
    return %c0_i32, %arg0 : i32, i32
  }
  func.func @transform_7(%arg0: i32) -> (i32, i32) {
    %c0_i32 = arith.constant 0 : i32
    %c0_i32_0 = arith.constant 0 : i32
    return %c0_i32, %arg0 : i32, i32
  }
  func.func @transform_8(%arg0: i32) -> (i32, i32) {
    %c0_i32 = arith.constant 0 : i32
    %c0_i32_0 = arith.constant 0 : i32
    %c0_i32_1 = arith.constant 0 : i32
    return %c0_i32, %c0_i32_0 : i32, i32
  }
  func.func @transform_9(%arg0: i32) -> (i32, i32) {
    %c0_i32 = arith.constant 0 : i32
    %c0_i32_0 = arith.constant 0 : i32
    %c0_i32_1 = arith.constant 0 : i32
    return %c0_i32, %c0_i32_0 : i32, i32
  }
  func.func @transform_10(%arg0: i32) -> (i32, i32) {
    %c0_i32 = arith.constant 0 : i32
    %c0_i32_0 = arith.constant 0 : i32
    %c0_i32_1 = arith.constant 0 : i32
    return %c0_i32, %c0_i32_0 : i32, i32
  }
  func.func @transform_11(%arg0: i32) -> (i32, i32) {
    %c0_i32 = arith.constant 0 : i32
    %c0_i32_0 = arith.constant 0 : i32
    %c0_i32_1 = arith.constant 0 : i32
    return %c0_i32, %c0_i32_0 : i32, i32
  }
  func.func @transform_12(%arg0: i32) -> (i32, i32) {
    %c0_i32 = arith.constant 0 : i32
    %c0_i32_0 = arith.constant 0 : i32
    %c0_i32_1 = arith.constant 0 : i32
    return %c0_i32, %c0_i32_0 : i32, i32
  }
}

</mosaic_0001>

<llo_original>
// kernel: tpu_custom_call.1
$region0: #{tpu_custom_call.1}
  #allocation0 [shape = 'u32[]', space=smem, size = 0x4, offset = 0x4, fixed_abs, tag = 'smem constant byte address 0x4 - core index']
  #allocation1 [shape = 'u32[144,128]{1,0:T(1,128)}', space=vmem, size = 0x12000, scoped, tag = 'internal scratch']
  #allocation2 [shape = 'f32[128,512]{1,0:T(8,128)}', space=vmem, size = 0x40000, scoped, tag = 'scratch operand']
  #allocation3 [shape = 'bf16[128,128]{1,0:T(8,128)(2,1)}', space=vmem, size = 0x8000, scoped, tag = 'scratch operand']
  #allocation4 [shape = 'f32[128,1]{1,0:T(8,128)}', space=vmem, size = 0x10000, scoped, tag = 'scratch operand']
  #allocation5 [shape = 'f32[128,1]{1,0:T(8,128)}', space=vmem, size = 0x10000, scoped, tag = 'scratch operand']
  #allocation6 [shape = 'f32[128,1]{1,0:T(8,128)}', space=vmem, size = 0x10000, scoped, tag = 'scratch operand']
  %s0 = inlined_call_operand.hbm [shape: bf16[128,128], index: 0, kind: input, shape index: {}]
  %s1 = inlined_call_operand.vmem [shape: f32[128,1], index: 1, kind: input, shape index: {}]
  %s2 = inlined_call_operand.vmem [shape: s32[128,1], index: 2, kind: input, shape index: {}]
  %s3 = inlined_call_operand.vmem [shape: bf16[128,512], index: 3, kind: input, shape index: {}]
  %s4 = inlined_call_operand.hbm [shape: bf16[128,512], index: 4, kind: input, shape index: {}]
  %s5 = inlined_call_operand.hbm [shape: f32[1,512], index: 5, kind: input, shape index: {}]
  %s6 = inlined_call_operand.hbm [shape: bf16[128,128], index: 6, kind: input, shape index: {}]
  %s7 = inlined_call_operand.hbm [shape: f32[1,128], index: 7, kind: input, shape index: {}]
  %s8 = inlined_call_operand.vmem [shape: f32[16,128], index: 8, kind: input, shape index: {}]
  %s9 = inlined_call_operand.hbm [shape: f32[16,128], index: 9, kind: input, shape index: {}]
  %s10 = inlined_call_operand.hbm [shape: f32[16,128], index: 10, kind: output, shape index: {0}]
  %s11 = inlined_call_operand.hbm [shape: f32[16,128], index: 11, kind: output, shape index: {1}]
  %s12 = inlined_call_operand.hbm [shape: f32[1,1], index: 12, kind: output, shape index: {2}]
  %13 = xla_tuple %s10, %s11, %s12
  %s14 = sld [smem:[#allocation0]]
  $region98: #{tpu_custom_call.1} parent=0
    _
  %s16 = ssub.s32 1, %s14
  %s17 = scalar_select 0, %s16, %s14
  $region1: #{tpu_custom_call.1} parent=0
    #allocation7 [shape = 'u8[32768]{0}', space=vmem, size = 0x8000, scoped, tag = 'input window, operand 0, single buffered']
    #allocation8 [shape = 's32[1]{0}', space=sflag, size = 0x4, scoped, tag = 'scoped memory for tpu_custom_call.1']
    #allocation9 [shape = 's32[1]{0}', space=sflag, size = 0x4, scoped, tag = 'scoped memory for tpu_custom_call.1']
    #allocation10 [shape = 'u8[131072]{0}', space=vmem, size = 0x20000, scoped, tag = 'input window, operand 4, single buffered']
    #allocation11 [shape = 's32[1]{0}', space=sflag, size = 0x4, scoped, tag = 'scoped memory for tpu_custom_call.1']
    #allocation12 [shape = 'u8[2048]{0}', space=vmem, size = 0x800, scoped, tag = 'input window, operand 5, single buffered']
    #allocation13 [shape = 'u8[32768]{0}', space=vmem, size = 0x8000, scoped, tag = 'input window, operand 6, single buffered']
    #allocation14 [shape = 's32[1]{0}', space=sflag, size = 0x4, scoped, tag = 'scoped memory for tpu_custom_call.1']
    #allocation15 [shape = 'u8[512]{0}', space=vmem, size = 0x400, scoped, tag = 'input window, operand 7, single buffered']
    #allocation16 [shape = 'u8[8192]{0}', space=vmem, size = 0x2000, scoped, tag = 'input window, operand 9, single buffered']
    #allocation17 [shape = 's32[1]{0}', space=sflag, size = 0x4, scoped, tag = 'scoped memory for tpu_custom_call.1']
    #allocation18 [shape = 'u8[8192]{0}', space=vmem, size = 0x2000, scoped, tag = 'output window, operand 0, single buffered']
    #allocation19 [shape = 'u8[8192]{0}', space=vmem, size = 0x2000, scoped, tag = 'output window, operand 1, single buffered']
    #allocation20 [shape = 's32[1]{0}', space=sflag, size = 0x4, scoped, tag = 'scoped memory for tpu_custom_call.1']
    #allocation21 [shape = 'u8[512]{0}', space=vmem, size = 0x400, scoped, tag = 'output window, operand 2, single buffered']
    %18 = vsyncpa [#allocation8], 0
    %19 = vsyncpa [#allocation11], 0
    %20 = vsyncpa [#allocation14], 0
    %21 = vsyncpa [#allocation17], 0
    %22 = vsyncpa [#allocation9], 0
    %23 = vsyncpa [#allocation20], 0
    // Predicated region
    $region2: #{tpu_custom_call.1} parent=1 // pred_check
      _
    $region3: #{tpu_custom_call.1} parent=1 // pred_check_branch
      %25 = sbr.rel (0) target = $region5
    $region4: #{tpu_custom_call.1} parent=1 // pred_region
      %s27 = ssub.s32 1024, 1024
      %28 = vsyncadd [#allocation8], %s27
      %s29 = sshll.u32 [#allocation7], 4
      %s30 = int_to_ptr.vmem [resolvable:$true] %s29
      %35 = dma.hbm_to_vmem [thread:$0]  %s0, 1024, %s30, [#allocation8], 64, 64, 4
    $region5: #{tpu_custom_call.1} parent=1 // pred_fallthru
      _
    // Predicated region
    $region6: #{tpu_custom_call.1} parent=1 // pred_check
      _
    $region7: #{tpu_custom_call.1} parent=1 // pred_check_branch
      %37 = sbr.rel (0) target = $region9
    $region8: #{tpu_custom_call.1} parent=1 // pred_region
      _
    $region9: #{tpu_custom_call.1} parent=1 // pred_fallthru
      _
    // Predicated region
    $region10: #{tpu_custom_call.1} parent=1 // pred_check
      _
    $region11: #{tpu_custom_call.1} parent=1 // pred_check_branch
      %39 = sbr.rel (0) target = $region13
    $region12: #{tpu_custom_call.1} parent=1 // pred_region
      _
    $region13: #{tpu_custom_call.1} parent=1 // pred_fallthru
      _
    // Predicated region
    $region14: #{tpu_custom_call.1} parent=1 // pred_check
      _
    $region15: #{tpu_custom_call.1} parent=1 // pred_check_branch
      %41 = sbr.rel (0) target = $region17
    $region16: #{tpu_custom_call.1} parent=1 // pred_region
      _
    $region17: #{tpu_custom_call.1} parent=1 // pred_fallthru
      _
    // Predicated region
    $region18: #{tpu_custom_call.1} parent=1 // pred_check
      _
    $region19: #{tpu_custom_call.1} parent=1 // pred_check_branch
      %43 = sbr.rel (0) target = $region21
    $region20: #{tpu_custom_call.1} parent=1 // pred_region
      %s45 = ssub.s32 4096, 4096
      %46 = vsyncadd [#allocation11], %s45
      %s47 = sshll.u32 [#allocation10], 4
      %s48 = int_to_ptr.vmem [resolvable:$true] %s47
      %53 = dma.hbm_to_vmem [thread:$0]  %s4, 4096, %s48, [#allocation11], 256, 256, 16
    $region21: #{tpu_custom_call.1} parent=1 // pred_fallthru
      _
    // Predicated region
    $region22: #{tpu_custom_call.1} parent=1 // pred_check
      _
    $region23: #{tpu_custom_call.1} parent=1 // pred_check_branch
      %55 = sbr.rel (0) target = $region25
    $region24: #{tpu_custom_call.1} parent=1 // pred_region
      %s57 = ssub.s32 64, 64
      %58 = vsyncadd [#allocation11], %s57
      %s60 = sshll.u32 [#allocation12], 4
      %s61 = int_to_ptr.vmem [resolvable:$true] %s60
      %63 = dma.hbm_to_vmem [thread:$0]  %s5, 64, %s61, [#allocation11]
    $region25: #{tpu_custom_call.1} parent=1 // pred_fallthru
      _
    // Predicated region
    $region26: #{tpu_custom_call.1} parent=1 // pred_check
      _
    $region27: #{tpu_custom_call.1} parent=1 // pred_check_branch
      %65 = sbr.rel (0) target = $region29
    $region28: #{tpu_custom_call.1} parent=1 // pred_region
      %s67 = ssub.s32 1024, 1024
      %68 = vsyncadd [#allocation14], %s67
      %s69 = sshll.u32 [#allocation13], 4
      %s70 = int_to_ptr.vmem [resolvable:$true] %s69
      %75 = dma.hbm_to_vmem [thread:$0]  %s6, 1024, %s70, [#allocation14], 64, 64, 4
    $region29: #{tpu_custom_call.1} parent=1 // pred_fallthru
      _
    // Predicated region
    $region30: #{tpu_custom_call.1} parent=1 // pred_check
      _
    $region31: #{tpu_custom_call.1} parent=1 // pred_check_branch
      %77 = sbr.rel (0) target = $region33
    $region32: #{tpu_custom_call.1} parent=1 // pred_region
      %s79 = ssub.s32 16, 16
      %80 = vsyncadd [#allocation14], %s79
      %s82 = sshll.u32 [#allocation15], 4
      %s83 = int_to_ptr.vmem [resolvable:$true] %s82
      %85 = dma.hbm_to_vmem [thread:$0]  %s7, 16, %s83, [#allocation14]
    $region33: #{tpu_custom_call.1} parent=1 // pred_fallthru
      _
    // Predicated region
    $region34: #{tpu_custom_call.1} parent=1 // pred_check
      _
    $region35: #{tpu_custom_call.1} parent=1 // pred_check_branch
      %87 = sbr.rel (0) target = $region37
    $region36: #{tpu_custom_call.1} parent=1 // pred_region
      _
    $region37: #{tpu_custom_call.1} parent=1 // pred_fallthru
      _
    // Predicated region
    $region38: #{tpu_custom_call.1} parent=1 // pred_check
      _
    $region39: #{tpu_custom_call.1} parent=1 // pred_check_branch
      %89 = sbr.rel (0) target = $region41
    $region40: #{tpu_custom_call.1} parent=1 // pred_region
      %s91 = ssub.s32 256, 256
      %92 = vsyncadd [#allocation17], %s91
      %s93 = sshll.u32 [#allocation16], 4
      %s94 = int_to_ptr.vmem [resolvable:$true] %s93
      %99 = dma.hbm_to_vmem [thread:$0]  %s9, 256, %s94, [#allocation17], 128, 128, 8
    $region41: #{tpu_custom_call.1} parent=1 // pred_fallthru
      _
    // Predicated region
    $region42: #{tpu_custom_call.1} parent=1 // pred_check
      _
    $region43: #{tpu_custom_call.1} parent=1 // pred_check_branch
      %101 = sbr.rel (0) target = $region45
    $region44: #{tpu_custom_call.1} parent=1 // pred_region
      %102 = dma.done [#allocation8], 1024
    $region45: #{tpu_custom_call.1} parent=1 // pred_fallthru
      _
    // Predicated region
    $region46: #{tpu_custom_call.1} parent=1 // pred_check
      _
    $region47: #{tpu_custom_call.1} parent=1 // pred_check_branch
      %104 = sbr.rel (0) target = $region49
    $region48: #{tpu_custom_call.1} parent=1 // pred_region
      %105 = dma.done [#allocation11], 4096
    $region49: #{tpu_custom_call.1} parent=1 // pred_fallthru
      _
    // Predicated region
    $region50: #{tpu_custom_call.1} parent=1 // pred_check
      _
    $region51: #{tpu_custom_call.1} parent=1 // pred_check_branch
      %107 = sbr.rel (0) target = $region53
    $region52: #{tpu_custom_call.1} parent=1 // pred_region
      %108 = dma.done [#allocation11], 64
    $region53: #{tpu_custom_call.1} parent=1 // pred_fallthru
      _
    // Predicated region
    $region54: #{tpu_custom_call.1} parent=1 // pred_check
      _
    $region55: #{tpu_custom_call.1} parent=1 // pred_check_branch
      %110 = sbr.rel (0) target = $region57
    $region56: #{tpu_custom_call.1} parent=1 // pred_region
      %111 = dma.done [#allocation14], 1024
    $region57: #{tpu_custom_call.1} parent=1 // pred_fallthru
      _
    // Predicated region
    $region58: #{tpu_custom_call.1} parent=1 // pred_check
      _
    $region59: #{tpu_custom_call.1} parent=1 // pred_check_branch
      %113 = sbr.rel (0) target = $region61
    $region60: #{tpu_custom_call.1} parent=1 // pred_region
      %114 = dma.done [#allocation14], 16
    $region61: #{tpu_custom_call.1} parent=1 // pred_fallthru
      _
    // Predicated region
    $region62: #{tpu_custom_call.1} parent=1 // pred_check
      _
    $region63: #{tpu_custom_call.1} parent=1 // pred_check_branch
      %116 = sbr.rel (0) target = $region65
    $region64: #{tpu_custom_call.1} parent=1 // pred_region
      %117 = dma.done [#allocation17], 256
    $region65: #{tpu_custom_call.1} parent=1 // pred_fallthru
      _
    %p119 = scmp.eq.s32.totalorder 0, 0
    // Predicated region
    $region66: #{tpu_custom_call.1} parent=1 // pred_check
      %p120 = pneg %p119
    $region67: #{tpu_custom_call.1} parent=1 // pred_check_branch
      %122 = sbr.rel (%p120) target = $region69
    $region68: #{tpu_custom_call.1} parent=1 // pred_region
      %v123 = vld [vmem:[#allocation7] sm:$0xf]
      %v124 = vld [vmem:[#allocation7 + $0x4] sm:$0xf]
      %v125 = vld [vmem:[#allocation7 + $0x8] sm:$0xf]
      %v126 = vld [vmem:[#allocation7 + $0xc] sm:$0xf]
      %v127 = vld [vmem:[#allocation7 + $0x10] sm:$0xf]
      %v128 = vld [vmem:[#allocation7 + $0x14] sm:$0xf]
      %v129 = vld [vmem:[#allocation7 + $0x18] sm:$0xf]
      %v130 = vld [vmem:[#allocation7 + $0x1c] sm:$0xf]
      %v131 = vld [vmem:[#allocation7 + $0x20] sm:$0xf]
      %v132 = vld [vmem:[#allocation7 + $0x24] sm:$0xf]
      %v133 = vld [vmem:[#allocation7 + $0x28] sm:$0xf]
      %v134 = vld [vmem:[#allocation7 + $0x2c] sm:$0xf]
      %v135 = vld [vmem:[#allocation7 + $0x30] sm:$0xf]
      %v136 = vld [vmem:[#allocation7 + $0x34] sm:$0xf]
      %v137 = vld [vmem:[#allocation7 + $0x38] sm:$0xf]
      %v138 = vld [vmem:[#allocation7 + $0x3c] sm:$0xf]
      %v139 = vld [vmem:[%s3] sm:$0xff]
      %v140 = vld [vmem:[%s3 + $0x8] sm:$0xff]
      %v141 = vld [vmem:[%s3 + $0x10] sm:$0xff]
      %v142 = vld [vmem:[%s3 + $0x18] sm:$0xff]
      %v143 = vld [vmem:[%s3 + $0x20] sm:$0xff]
      %v144 = vld [vmem:[%s3 + $0x28] sm:$0xff]
      %v145 = vld [vmem:[%s3 + $0x30] sm:$0xff]
      %v146 = vld [vmem:[%s3 + $0x38] sm:$0xff]
      %v147 = vld [vmem:[%s3 + $0x40] sm:$0xff]
      %v148 = vld [vmem:[%s3 + $0x48] sm:$0xff]
      %v149 = vld [vmem:[%s3 + $0x50] sm:$0xff]
      %v150 = vld [vmem:[%s3 + $0x58] sm:$0xff]
      %v151 = vld [vmem:[%s3 + $0x60] sm:$0xff]
      %v152 = vld [vmem:[%s3 + $0x68] sm:$0xff]
      %v153 = vld [vmem:[%s3 + $0x70] sm:$0xff]
      %v154 = vld [vmem:[%s3 + $0x78] sm:$0xff]
      %v155 = vld [vmem:[%s3 + $0x80] sm:$0xff]
      %v156 = vld [vmem:[%s3 + $0x88] sm:$0xff]
      %v157 = vld [vmem:[%s3 + $0x90] sm:$0xff]
      %v158 = vld [vmem:[%s3 + $0x98] sm:$0xff]
      %v159 = vld [vmem:[%s3 + $0xa0] sm:$0xff]
      %v160 = vld [vmem:[%s3 + $0xa8] sm:$0xff]
      %v161 = vld [vmem:[%s3 + $0xb0] sm:$0xff]
      %v162 = vld [vmem:[%s3 + $0xb8] sm:$0xff]
      %v163 = vld [vmem:[%s3 + $0xc0] sm:$0xff]
      %v164 = vld [vmem:[%s3 + $0xc8] sm:$0xff]
      %v165 = vld [vmem:[%s3 + $0xd0] sm:$0xff]
      %v166 = vld [vmem:[%s3 + $0xd8] sm:$0xff]
      %v167 = vld [vmem:[%s3 + $0xe0] sm:$0xff]
      %v168 = vld [vmem:[%s3 + $0xe8] sm:$0xff]
      %v169 = vld [vmem:[%s3 + $0xf0] sm:$0xff]
      %v170 = vld [vmem:[%s3 + $0xf8] sm:$0xff]
      %v171 = vld [vmem:[#allocation12] sm:$0xf]
      %v173 = vlaneseq
      %v174 = vshrl.u32 %v173, 7
      %v175 = vsub.s32 0, %v174
      %v176 = vrot.slane %v171, %v175
      %v177 = vlaneseq
      %v178 = vshrl.u32 %v177, 7
      %v179 = vsub.s32 1, %v178
      %v180 = vrot.slane %v171, %v179
      %v181 = vlaneseq
      %v182 = vshrl.u32 %v181, 7
      %v183 = vsub.s32 2, %v182
      %v184 = vrot.slane %v171, %v183
      %v185 = vlaneseq
      %v186 = vshrl.u32 %v185, 7
      %v187 = vsub.s32 3, %v186
      %v188 = vrot.slane %v171, %v187
      %v209 = vunpack.c.l.b16 %v123
      %v210 = vunpack.c.l.b16 %v124
      %v211 = vunpack.c.l.b16 %v125
      %v212 = vunpack.c.l.b16 %v126
      %v213 = vunpack.c.l.b16 %v127
      %v214 = vunpack.c.l.b16 %v128
      %v215 = vunpack.c.l.b16 %v129
      %v216 = vunpack.c.l.b16 %v130
      %v217 = vunpack.c.l.b16 %v131
      %v218 = vunpack.c.l.b16 %v132
      %v219 = vunpack.c.l.b16 %v133
      %v220 = vunpack.c.l.b16 %v134
      %v221 = vunpack.c.l.b16 %v135
      %v222 = vunpack.c.l.b16 %v136
      %v223 = vunpack.c.l.b16 %v137
      %v224 = vunpack.c.l.b16 %v138
      %v225 = vpack.c.b16 %v210, %v209
      %v226 = vpack.c.b16 %v212, %v211
      %v227 = vpack.c.b16 %v214, %v213
      %v228 = vpack.c.b16 %v216, %v215
      %v229 = vpack.c.b16 %v218, %v217
      %v230 = vpack.c.b16 %v220, %v219
      %v231 = vpack.c.b16 %v222, %v221
      %v232 = vpack.c.b16 %v224, %v223
      %v273 = vunpack.c.l.b16 %v139
      %v274 = vunpack.c.h.b16 %v139
      %v275 = vunpack.c.l.b16 %v140
      %v276 = vunpack.c.h.b16 %v140
      %v277 = vunpack.c.l.b16 %v141
      %v278 = vunpack.c.h.b16 %v141
      %v279 = vunpack.c.l.b16 %v142
      %v280 = vunpack.c.h.b16 %v142
      %v281 = vunpack.c.l.b16 %v143
      %v282 = vunpack.c.h.b16 %v143
      %v283 = vunpack.c.l.b16 %v144
      %v284 = vunpack.c.h.b16 %v144
      %v285 = vunpack.c.l.b16 %v145
      %v286 = vunpack.c.h.b16 %v145
      %v287 = vunpack.c.l.b16 %v146
      %v288 = vunpack.c.h.b16 %v146
      %v289 = vunpack.c.l.b16 %v147
      %v290 = vunpack.c.h.b16 %v147
      %v291 = vunpack.c.l.b16 %v148
      %v292 = vunpack.c.h.b16 %v148
      %v293 = vunpack.c.l.b16 %v149
      %v294 = vunpack.c.h.b16 %v149
      %v295 = vunpack.c.l.b16 %v150
      %v296 = vunpack.c.h.b16 %v150
      %v297 = vunpack.c.l.b16 %v151
      %v298 = vunpack.c.h.b16 %v151
      %v299 = vunpack.c.l.b16 %v152
      %v300 = vunpack.c.h.b16 %v152
      %v301 = vunpack.c.l.b16 %v153
      %v302 = vunpack.c.h.b16 %v153
      %v303 = vunpack.c.l.b16 %v154
      %v304 = vunpack.c.h.b16 %v154
      %v305 = vunpack.c.l.b16 %v155
      %v306 = vunpack.c.h.b16 %v155
      %v307 = vunpack.c.l.b16 %v156
      %v308 = vunpack.c.h.b16 %v156
      %v309 = vunpack.c.l.b16 %v157
      %v310 = vunpack.c.h.b16 %v157
      %v311 = vunpack.c.l.b16 %v158
      %v312 = vunpack.c.h.b16 %v158
      %v313 = vunpack.c.l.b16 %v159
      %v314 = vunpack.c.h.b16 %v159
      %v315 = vunpack.c.l.b16 %v160
      %v316 = vunpack.c.h.b16 %v160
      %v317 = vunpack.c.l.b16 %v161
      %v318 = vunpack.c.h.b16 %v161
      %v319 = vunpack.c.l.b16 %v162
      %v320 = vunpack.c.h.b16 %v162
      %v321 = vunpack.c.l.b16 %v163
      %v322 = vunpack.c.h.b16 %v163
      %v323 = vunpack.c.l.b16 %v164
      %v324 = vunpack.c.h.b16 %v164
      %v325 = vunpack.c.l.b16 %v165
      %v326 = vunpack.c.h.b16 %v165
      %v327 = vunpack.c.l.b16 %v166
      %v328 = vunpack.c.h.b16 %v166
      %v329 = vunpack.c.l.b16 %v167
      %v330 = vunpack.c.h.b16 %v167
      %v331 = vunpack.c.l.b16 %v168
      %v332 = vunpack.c.h.b16 %v168
      %v333 = vunpack.c.l.b16 %v169
      %v334 = vunpack.c.h.b16 %v169
      %v335 = vunpack.c.l.b16 %v170
      %v336 = vunpack.c.h.b16 %v170
      %v337 = vpack.c.b16 %v277, %v273
      %v338 = vpack.c.b16 %v278, %v274
      %v339 = vpack.c.b16 %v279, %v275
      %v340 = vpack.c.b16 %v280, %v276
      %v341 = vpack.c.b16 %v285, %v281
      %v342 = vpack.c.b16 %v286, %v282
      %v343 = vpack.c.b16 %v287, %v283
      %v344 = vpack.c.b16 %v288, %v284
      %v345 = vpack.c.b16 %v293, %v289
      %v346 = vpack.c.b16 %v294, %v290
      %v347 = vpack.c.b16 %v295, %v291
      %v348 = vpack.c.b16 %v296, %v292
      %v349 = vpack.c.b16 %v301, %v297
      %v350 = vpack.c.b16 %v302, %v298
      %v351 = vpack.c.b16 %v303, %v299
      %v352 = vpack.c.b16 %v304, %v300
      %v353 = vpack.c.b16 %v309, %v305
      %v354 = vpack.c.b16 %v310, %v306
      %v355 = vpack.c.b16 %v311, %v307
      %v356 = vpack.c.b16 %v312, %v308
      %v357 = vpack.c.b16 %v317, %v313
      %v358 = vpack.c.b16 %v318, %v314
      %v359 = vpack.c.b16 %v319, %v315
      %v360 = vpack.c.b16 %v320, %v316
      %v361 = vpack.c.b16 %v325, %v321
      %v362 = vpack.c.b16 %v326, %v322
      %v363 = vpack.c.b16 %v327, %v323
      %v364 = vpack.c.b16 %v328, %v324
      %v365 = vpack.c.b16 %v333, %v329
      %v366 = vpack.c.b16 %v334, %v330
      %v367 = vpack.c.b16 %v335, %v331
      %v368 = vpack.c.b16 %v336, %v332
      %401 = vmatprep.subr.bf16.mxu0 %v366
      %402 = vmatpush1.bf16.msra.mxu0 %v365
      %403 = vmatprep.subr.bf16.mxu0 %v362
      %404 = vmatpush1.bf16.msra.mxu0 %v361
      %405 = vmatprep.subr.bf16.mxu0 %v358
      %406 = vmatpush1.bf16.msra.mxu0 %v357
      %407 = vmatprep.subr.bf16.mxu0 %v354
      %408 = vmatpush1.bf16.msra.mxu0 %v353
      %409 = vmatprep.subr.bf16.mxu0 %v350
      %410 = vmatpush1.bf16.msra.mxu0 %v349
      %411 = vmatprep.subr.bf16.mxu0 %v346
      %412 = vmatpush1.bf16.msra.mxu0 %v345
      %413 = vmatprep.subr.bf16.mxu0 %v342
      %414 = vmatpush1.bf16.msra.mxu0 %v341
      %415 = vmatprep.subr.bf16.mxu0 %v338
      %416 = vmatpush1.bf16.msra.mxu0 %v337
      %417 = vmatprep.subr.bf16.mxu0 0
      %418 = vmatpush2.bf16.msra.mxu0 0
      %419 = vmatprep.subr.bf16.mxu0 0
      %420 = vmatpush2.bf16.msra.mxu0 0
      %421 = vmatprep.subr.bf16.mxu0 0
      %422 = vmatpush2.bf16.msra.mxu0 0
      %423 = vmatprep.subr.bf16.mxu0 0
      %424 = vmatpush2.bf16.msra.mxu0 0
      %425 = vmatprep.subr.bf16.mxu0 0
      %426 = vmatpush2.bf16.msra.mxu0 0
      %427 = vmatprep.subr.bf16.mxu0 0
      %428 = vmatpush2.bf16.msra.mxu0 0
      %429 = vmatprep.subr.bf16.mxu0 0
      %430 = vmatpush2.bf16.msra.mxu0 0
      %431 = vmatprep.subr.bf16.mxu0 0
      %432 = vmatpush2.bf16.msra.mxu0 0
      %433 = vmatprep.mubr.bf16.mxu0 0
      %434 = vmatmul.mubr.bf16.gmra.mxu0 %v225
      %v435 = vpop.f32.mrf.mxu0
      %v436 = vadd.f32 %v176, %v435
      %v437 = vpop.f32.mrf.mxu0
      %v438 = vadd.f32 %v180, %v437
      %v439 = vpop.f32.mrf.mxu0
      %v440 = vadd.f32 %v176, %v439
      %v441 = vpop.f32.mrf.mxu0
      %v442 = vadd.f32 %v180, %v441
      %443 = vmatprep.mubr.bf16.mxu0 0
      %444 = vmatmul.mubr.bf16.gmra.mxu0 %v226
      %v445 = vpop.f32.mrf.mxu0
      %v446 = vadd.f32 %v176, %v445
      %v447 = vpop.f32.mrf.mxu0
      %v448 = vadd.f32 %v180, %v447
      %v449 = vpop.f32.mrf.mxu0
      %v450 = vadd.f32 %v176, %v449
      %v451 = vpop.f32.mrf.mxu0
      %v452 = vadd.f32 %v180, %v451
      %453 = vmatprep.mubr.bf16.mxu0 0
      %454 = vmatmul.mubr.bf16.gmra.mxu0 %v227
      %v455 = vpop.f32.mrf.mxu0
      %v456 = vadd.f32 %v176, %v455
      %v457 = vpop.f32.mrf.mxu0
      %v458 = vadd.f32 %v180, %v457
      %v459 = vpop.f32.mrf.mxu0
      %v460 = vadd.f32 %v176, %v459
      %v461 = vpop.f32.mrf.mxu0
      %v462 = vadd.f32 %v180, %v461
      %463 = vmatprep.mubr.bf16.mxu0 0
      %464 = vmatmul.mubr.bf16.gmra.mxu0 %v228
      %v465 = vpop.f32.mrf.mxu0
      %v466 = vadd.f32 %v176, %v465
      %v467 = vpop.f32.mrf.mxu0
      %v468 = vadd.f32 %v180, %v467
      %v469 = vpop.f32.mrf.mxu0
      %v470 = vadd.f32 %v176, %v469
      %v471 = vpop.f32.mrf.mxu0
      %v472 = vadd.f32 %v180, %v471
      %473 = vmatprep.mubr.bf16.mxu0 0
      %474 = vmatmul.mubr.bf16.gmra.mxu0 %v229
      %v475 = vpop.f32.mrf.mxu0
      %v476 = vadd.f32 %v176, %v475
      %v477 = vpop.f32.mrf.mxu0
      %v478 = vadd.f32 %v180, %v477
      %v479 = vpop.f32.mrf.mxu0
      %v480 = vadd.f32 %v176, %v479
      %v481 = vpop.f32.mrf.mxu0
      %v482 = vadd.f32 %v180, %v481
      %483 = vmatprep.mubr.bf16.mxu0 0
      %484 = vmatmul.mubr.bf16.gmra.mxu0 %v230
      %v485 = vpop.f32.mrf.mxu0
      %v486 = vadd.f32 %v176, %v485
      %v487 = vpop.f32.mrf.mxu0
      %v488 = vadd.f32 %v180, %v487
      %v489 = vpop.f32.mrf.mxu0
      %v490 = vadd.f32 %v176, %v489
      %v491 = vpop.f32.mrf.mxu0
      %v492 = vadd.f32 %v180, %v491
      %493 = vmatprep.mubr.bf16.mxu0 0
      %494 = vmatmul.mubr.bf16.gmra.mxu0 %v231
      %v495 = vpop.f32.mrf.mxu0
      %v496 = vadd.f32 %v176, %v495
      %v497 = vpop.f32.mrf.mxu0
      %v498 = vadd.f32 %v180, %v497
      %v499 = vpop.f32.mrf.mxu0
      %v500 = vadd.f32 %v176, %v499
      %v501 = vpop.f32.mrf.mxu0
      %v502 = vadd.f32 %v180, %v501
      %503 = vmatprep.mubr.bf16.mxu0 0
      %504 = vmatmul.mubr.bf16.gmra.mxu0 %v232
      %v505 = vpop.f32.mrf.mxu0
      %v506 = vadd.f32 %v176, %v505
      %v507 = vpop.f32.mrf.mxu0
      %v508 = vadd.f32 %v180, %v507
      %v509 = vpop.f32.mrf.mxu0
      %v510 = vadd.f32 %v176, %v509
      %v511 = vpop.f32.mrf.mxu0
      %v512 = vadd.f32 %v180, %v511
      %513 = vdwg.mxu0
      %514 = vmatprep.subr.bf16.mxu0 %v368
      %515 = vmatpush1.bf16.msra.mxu0 %v367
      %516 = vmatprep.subr.bf16.mxu0 %v364
      %517 = vmatpush1.bf16.msra.mxu0 %v363
      %518 = vmatprep.subr.bf16.mxu0 %v360
      %519 = vmatpush1.bf16.msra.mxu0 %v359
      %520 = vmatprep.subr.bf16.mxu0 %v356
      %521 = vmatpush1.bf16.msra.mxu0 %v355
      %522 = vmatprep.subr.bf16.mxu0 %v352
      %523 = vmatpush1.bf16.msra.mxu0 %v351
      %524 = vmatprep.subr.bf16.mxu0 %v348
      %525 = vmatpush1.bf16.msra.mxu0 %v347
      %526 = vmatprep.subr.bf16.mxu0 %v344
      %527 = vmatpush1.bf16.msra.mxu0 %v343
      %528 = vmatprep.subr.bf16.mxu0 %v340
      %529 = vmatpush1.bf16.msra.mxu0 %v339
      %530 = vmatprep.subr.bf16.mxu0 0
      %531 = vmatpush2.bf16.msra.mxu0 0
      %532 = vmatprep.subr.bf16.mxu0 0
      %533 = vmatpush2.bf16.msra.mxu0 0
      %534 = vmatprep.subr.bf16.mxu0 0
      %535 = vmatpush2.bf16.msra.mxu0 0
      %536 = vmatprep.subr.bf16.mxu0 0
      %537 = vmatpush2.bf16.msra.mxu0 0
      %538 = vmatprep.subr.bf16.mxu0 0
      %539 = vmatpush2.bf16.msra.mxu0 0
      %540 = vmatprep.subr.bf16.mxu0 0
      %541 = vmatpush2.bf16.msra.mxu0 0
      %542 = vmatprep.subr.bf16.mxu0 0
      %543 = vmatpush2.bf16.msra.mxu0 0
      %544 = vmatprep.subr.bf16.mxu0 0
      %545 = vmatpush2.bf16.msra.mxu0 0
      %546 = vmatprep.mubr.bf16.mxu0 0
      %547 = vmatmul.mubr.bf16.gmra.mxu0 %v225
      %v548 = vpop.f32.mrf.mxu0
      %v549 = vadd.f32 %v184, %v548
      %v550 = vpop.f32.mrf.mxu0
      %v551 = vadd.f32 %v188, %v550
      %v552 = vpop.f32.mrf.mxu0
      %v553 = vadd.f32 %v184, %v552
      %v554 = vpop.f32.mrf.mxu0
      %v555 = vadd.f32 %v188, %v554
      %556 = vmatprep.mubr.bf16.mxu0 0
      %557 = vmatmul.mubr.bf16.gmra.mxu0 %v226
      %v558 = vpop.f32.mrf.mxu0
      %v559 = vadd.f32 %v184, %v558
      %v560 = vpop.f32.mrf.mxu0
      %v561 = vadd.f32 %v188, %v560
      %v562 = vpop.f32.mrf.mxu0
      %v563 = vadd.f32 %v184, %v562
      %v564 = vpop.f32.mrf.mxu0
      %v565 = vadd.f32 %v188, %v564
      %566 = vmatprep.mubr.bf16.mxu0 0
      %567 = vmatmul.mubr.bf16.gmra.mxu0 %v227
      %v568 = vpop.f32.mrf.mxu0
      %v569 = vadd.f32 %v184, %v568
      %v570 = vpop.f32.mrf.mxu0
      %v571 = vadd.f32 %v188, %v570
      %v572 = vpop.f32.mrf.mxu0
      %v573 = vadd.f32 %v184, %v572
      %v574 = vpop.f32.mrf.mxu0
      %v575 = vadd.f32 %v188, %v574
      %576 = vmatprep.mubr.bf16.mxu0 0
      %577 = vmatmul.mubr.bf16.gmra.mxu0 %v228
      %v578 = vpop.f32.mrf.mxu0
      %v579 = vadd.f32 %v184, %v578
      %v580 = vpop.f32.mrf.mxu0
      %v581 = vadd.f32 %v188, %v580
      %v582 = vpop.f32.mrf.mxu0
      %v583 = vadd.f32 %v184, %v582
      %v584 = vpop.f32.mrf.mxu0
      %v585 = vadd.f32 %v188, %v584
      %586 = vmatprep.mubr.bf16.mxu0 0
      %587 = vmatmul.mubr.bf16.gmra.mxu0 %v229
      %v588 = vpop.f32.mrf.mxu0
      %v589 = vadd.f32 %v184, %v588
      %v590 = vpop.f32.mrf.mxu0
      %v591 = vadd.f32 %v188, %v590
      %v592 = vpop.f32.mrf.mxu0
      %v593 = vadd.f32 %v184, %v592
      %v594 = vpop.f32.mrf.mxu0
      %v595 = vadd.f32 %v188, %v594
      %596 = vmatprep.mubr.bf16.mxu0 0
      %597 = vmatmul.mubr.bf16.gmra.mxu0 %v230
      %v598 = vpop.f32.mrf.mxu0
      %v599 = vadd.f32 %v184, %v598
      %v600 = vpop.f32.mrf.mxu0
      %v601 = vadd.f32 %v188, %v600
      %v602 = vpop.f32.mrf.mxu0
      %v603 = vadd.f32 %v184, %v602
      %v604 = vpop.f32.mrf.mxu0
      %v605 = vadd.f32 %v188, %v604
      %606 = vmatprep.mubr.bf16.mxu0 0
      %607 = vmatmul.mubr.bf16.gmra.mxu0 %v231
      %v608 = vpop.f32.mrf.mxu0
      %v609 = vadd.f32 %v184, %v608
      %v610 = vpop.f32.mrf.mxu0
      %v611 = vadd.f32 %v188, %v610
      %v612 = vpop.f32.mrf.mxu0
      %v613 = vadd.f32 %v184, %v612
      %v614 = vpop.f32.mrf.mxu0
      %v615 = vadd.f32 %v188, %v614
      %616 = vmatprep.mubr.bf16.mxu0 0
      %617 = vmatmul.mubr.bf16.gmra.mxu0 %v232
      %v618 = vpop.f32.mrf.mxu0
      %v619 = vadd.f32 %v184, %v618
      %v620 = vpop.f32.mrf.mxu0
      %v621 = vadd.f32 %v188, %v620
      %v622 = vpop.f32.mrf.mxu0
      %v623 = vadd.f32 %v184, %v622
      %v624 = vpop.f32.mrf.mxu0
      %v625 = vadd.f32 %v188, %v624
      %626 = vdwg.mxu0
      %627 = vst [vmem:[#allocation2] sm:$0xff] %v436
      %628 = vst [vmem:[#allocation2 + $0x8] sm:$0xff] %v438
      %629 = vst [vmem:[#allocation2 + $0x10] sm:$0xff] %v549
      %630 = vst [vmem:[#allocation2 + $0x18] sm:$0xff] %v551
      %631 = vst [vmem:[#allocation2 + $0x20] sm:$0xff] %v440
      %632 = vst [vmem:[#allocation2 + $0x28] sm:$0xff] %v442
      %633 = vst [vmem:[#allocation2 + $0x30] sm:$0xff] %v553
      %634 = vst [vmem:[#allocation2 + $0x38] sm:$0xff] %v555
      %635 = vst [vmem:[#allocation2 + $0x40] sm:$0xff] %v446
      %636 = vst [vmem:[#allocation2 + $0x48] sm:$0xff] %v448
      %637 = vst [vmem:[#allocation2 + $0x50] sm:$0xff] %v559
      %638 = vst [vmem:[#allocation2 + $0x58] sm:$0xff] %v561
      %639 = vst [vmem:[#allocation2 + $0x60] sm:$0xff] %v450
      %640 = vst [vmem:[#allocation2 + $0x68] sm:$0xff] %v452
      %641 = vst [vmem:[#allocation2 + $0x70] sm:$0xff] %v563
      %642 = vst [vmem:[#allocation2 + $0x78] sm:$0xff] %v565
      %643 = vst [vmem:[#allocation2 + $0x80] sm:$0xff] %v456
      %644 = vst [vmem:[#allocation2 + $0x88] sm:$0xff] %v458
      %645 = vst [vmem:[#allocation2 + $0x90] sm:$0xff] %v569
      %646 = vst [vmem:[#allocation2 + $0x98] sm:$0xff] %v571
      %647 = vst [vmem:[#allocation2 + $0xa0] sm:$0xff] %v460
      %648 = vst [vmem:[#allocation2 + $0xa8] sm:$0xff] %v462
      %649 = vst [vmem:[#allocation2 + $0xb0] sm:$0xff] %v573
      %650 = vst [vmem:[#allocation2 + $0xb8] sm:$0xff] %v575
      %651 = vst [vmem:[#allocation2 + $0xc0] sm:$0xff] %v466
      %652 = vst [vmem:[#allocation2 + $0xc8] sm:$0xff] %v468
      %653 = vst [vmem:[#allocation2 + $0xd0] sm:$0xff] %v579
      %654 = vst [vmem:[#allocation2 + $0xd8] sm:$0xff] %v581
      %655 = vst [vmem:[#allocation2 + $0xe0] sm:$0xff] %v470
      %656 = vst [vmem:[#allocation2 + $0xe8] sm:$0xff] %v472
      %657 = vst [vmem:[#allocation2 + $0xf0] sm:$0xff] %v583
      %658 = vst [vmem:[#allocation2 + $0xf8] sm:$0xff] %v585
      %659 = vst [vmem:[#allocation2 + $0x100] sm:$0xff] %v476
      %660 = vst [vmem:[#allocation2 + $0x108] sm:$0xff] %v478
      %661 = vst [vmem:[#allocation2 + $0x110] sm:$0xff] %v589
      %662 = vst [vmem:[#allocation2 + $0x118] sm:$0xff] %v591
      %663 = vst [vmem:[#allocation2 + $0x120] sm:$0xff] %v480
      %664 = vst [vmem:[#allocation2 + $0x128] sm:$0xff] %v482
      %665 = vst [vmem:[#allocation2 + $0x130] sm:$0xff] %v593
      %666 = vst [vmem:[#allocation2 + $0x138] sm:$0xff] %v595
      %667 = vst [vmem:[#allocation2 + $0x140] sm:$0xff] %v486
      %668 = vst [vmem:[#allocation2 + $0x148] sm:$0xff] %v488
      %669 = vst [vmem:[#allocation2 + $0x150] sm:$0xff] %v599
      %670 = vst [vmem:[#allocation2 + $0x158] sm:$0xff] %v601
      %671 = vst [vmem:[#allocation2 + $0x160] sm:$0xff] %v490
      %672 = vst [vmem:[#allocation2 + $0x168] sm:$0xff] %v492
      %673 = vst [vmem:[#allocation2 + $0x170] sm:$0xff] %v603
      %674 = vst [vmem:[#allocation2 + $0x178] sm:$0xff] %v605
      %675 = vst [vmem:[#allocation2 + $0x180] sm:$0xff] %v496
      %676 = vst [vmem:[#allocation2 + $0x188] sm:$0xff] %v498
      %677 = vst [vmem:[#allocation2 + $0x190] sm:$0xff] %v609
      %678 = vst [vmem:[#allocation2 + $0x198] sm:$0xff] %v611
      %679 = vst [vmem:[#allocation2 + $0x1a0] sm:$0xff] %v500
      %680 = vst [vmem:[#allocation2 + $0x1a8] sm:$0xff] %v502
      %681 = vst [vmem:[#allocation2 + $0x1b0] sm:$0xff] %v613
      %682 = vst [vmem:[#allocation2 + $0x1b8] sm:$0xff] %v615
      %683 = vst [vmem:[#allocation2 + $0x1c0] sm:$0xff] %v506
      %684 = vst [vmem:[#allocation2 + $0x1c8] sm:$0xff] %v508
      %685 = vst [vmem:[#allocation2 + $0x1d0] sm:$0xff] %v619
      %686 = vst [vmem:[#allocation2 + $0x1d8] sm:$0xff] %v621
      %687 = vst [vmem:[#allocation2 + $0x1e0] sm:$0xff] %v510
      %688 = vst [vmem:[#allocation2 + $0x1e8] sm:$0xff] %v512
      %689 = vst [vmem:[#allocation2 + $0x1f0] sm:$0xff] %v623
      %690 = vst [vmem:[#allocation2 + $0x1f8] sm:$0xff] %v625
      %v691 = vld [vmem:[#allocation10] sm:$0xff]
      %v692 = vld [vmem:[#allocation10 + $0x8] sm:$0xff]
      %v693 = vld [vmem:[#allocation10 + $0x10] sm:$0xff]
      %v694 = vld [vmem:[#allocation10 + $0x18] sm:$0xff]
      %v695 = vld [vmem:[#allocation10 + $0x20] sm:$0xff]
      %v696 = vld [vmem:[#allocation10 + $0x28] sm:$0xff]
      %v697 = vld [vmem:[#allocation10 + $0x30] sm:$0xff]
      %v698 = vld [vmem:[#allocation10 + $0x38] sm:$0xff]
      %v699 = vld [vmem:[#allocation10 + $0x40] sm:$0xff]
      %v700 = vld [vmem:[#allocation10 + $0x48] sm:$0xff]
      %v701 = vld [vmem:[#allocation10 + $0x50] sm:$0xff]
      %v702 = vld [vmem:[#allocation10 + $0x58] sm:$0xff]
      %v703 = vld [vmem:[#allocation10 + $0x60] sm:$0xff]
      %v704 = vld [vmem:[#allocation10 + $0x68] sm:$0xff]
      %v705 = vld [vmem:[#allocation10 + $0x70] sm:$0xff]
      %v706 = vld [vmem:[#allocation10 + $0x78] sm:$0xff]
      %v707 = vld [vmem:[#allocation10 + $0x80] sm:$0xff]
      %v708 = vld [vmem:[#allocation10 + $0x88] sm:$0xff]
      %v709 = vld [vmem:[#allocation10 + $0x90] sm:$0xff]
      %v710 = vld [vmem:[#allocation10 + $0x98] sm:$0xff]
      %v711 = vld [vmem:[#allocation10 + $0xa0] sm:$0xff]
      %v712 = vld [vmem:[#allocation10 + $0xa8] sm:$0xff]
      %v713 = vld [vmem:[#allocation10 + $0xb0] sm:$0xff]
      %v714 = vld [vmem:[#allocation10 + $0xb8] sm:$0xff]
      %v715 = vld [vmem:[#allocation10 + $0xc0] sm:$0xff]
      %v716 = vld [vmem:[#allocation10 + $0xc8] sm:$0xff]
      %v717 = vld [vmem:[#allocation10 + $0xd0] sm:$0xff]
      %v718 = vld [vmem:[#allocation10 + $0xd8] sm:$0xff]
      %v719 = vld [vmem:[#allocation10 + $0xe0] sm:$0xff]
      %v720 = vld [vmem:[#allocation10 + $0xe8] sm:$0xff]
      %v721 = vld [vmem:[#allocation10 + $0xf0] sm:$0xff]
      %v722 = vld [vmem:[#allocation10 + $0xf8] sm:$0xff]
      %v723 = vld [vmem:[%s8] sm:$0xff]
      %v724 = vld [vmem:[%s8 + $0x8] sm:$0xff]
      %v725 = vld [vmem:[#allocation16] sm:$0xff]
      %v726 = vld [vmem:[#allocation16 + $0x8] sm:$0xff]
      %v727 = vld [vmem:[#allocation2] sm:$0xff]
      %v728 = vld [vmem:[#allocation2 + $0x8] sm:$0xff]
      %v729 = vld [vmem:[#allocation2 + $0x10] sm:$0xff]
      %v730 = vld [vmem:[#allocation2 + $0x18] sm:$0xff]
      %v731 = vld [vmem:[#allocation2 + $0x20] sm:$0xff]
      %v732 = vld [vmem:[#allocation2 + $0x28] sm:$0xff]
      %v733 = vld [vmem:[#allocation2 + $0x30] sm:$0xff]
      %v734 = vld [vmem:[#allocation2 + $0x38] sm:$0xff]
      %v735 = vpack.c.bf16 %v724, %v723
      %v768 = vunpack.c.l.b16 %v691
      %v769 = vunpack.c.h.b16 %v691
      %v770 = vunpack.c.l.b16 %v692
      %v771 = vunpack.c.h.b16 %v692
      %v772 = vunpack.c.l.b16 %v693
      %v773 = vunpack.c.h.b16 %v693
      %v774 = vunpack.c.l.b16 %v694
      %v775 = vunpack.c.h.b16 %v694
      %v776 = vunpack.c.l.b16 %v695
      %v777 = vunpack.c.h.b16 %v695
      %v778 = vunpack.c.l.b16 %v696
      %v779 = vunpack.c.h.b16 %v696
      %v780 = vunpack.c.l.b16 %v697
      %v781 = vunpack.c.h.b16 %v697
      %v782 = vunpack.c.l.b16 %v698
      %v783 = vunpack.c.h.b16 %v698
      %v784 = vunpack.c.l.b16 %v699
      %v785 = vunpack.c.h.b16 %v699
      %v786 = vunpack.c.l.b16 %v700
      %v787 = vunpack.c.h.b16 %v700
      %v788 = vunpack.c.l.b16 %v701
      %v789 = vunpack.c.h.b16 %v701
      %v790 = vunpack.c.l.b16 %v702
      %v791 = vunpack.c.h.b16 %v702
      %v792 = vunpack.c.l.b16 %v703
      %v793 = vunpack.c.h.b16 %v703
      %v794 = vunpack.c.l.b16 %v704
      %v795 = vunpack.c.h.b16 %v704
      %v796 = vunpack.c.l.b16 %v705
      %v797 = vunpack.c.h.b16 %v705
      %v798 = vunpack.c.l.b16 %v706
      %v799 = vunpack.c.h.b16 %v706
      %v800 = vunpack.c.l.b16 %v707
      %v801 = vunpack.c.h.b16 %v707
      %v802 = vunpack.c.l.b16 %v708
      %v803 = vunpack.c.h.b16 %v708
      %v804 = vunpack.c.l.b16 %v709
      %v805 = vunpack.c.h.b16 %v709
      %v806 = vunpack.c.l.b16 %v710
      %v807 = vunpack.c.h.b16 %v710
      %v808 = vunpack.c.l.b16 %v711
      %v809 = vunpack.c.h.b16 %v711
      %v810 = vunpack.c.l.b16 %v712
      %v811 = vunpack.c.h.b16 %v712
      %v812 = vunpack.c.l.b16 %v713
      %v813 = vunpack.c.h.b16 %v713
      %v814 = vunpack.c.l.b16 %v714
      %v815 = vunpack.c.h.b16 %v714
      %v816 = vunpack.c.l.b16 %v715
      %v817 = vunpack.c.h.b16 %v715
      %v818 = vunpack.c.l.b16 %v716
      %v819 = vunpack.c.h.b16 %v716
      %v820 = vunpack.c.l.b16 %v717
      %v821 = vunpack.c.h.b16 %v717
      %v822 = vunpack.c.l.b16 %v718
      %v823 = vunpack.c.h.b16 %v718
      %v824 = vunpack.c.l.b16 %v719
      %v825 = vunpack.c.h.b16 %v719
      %v826 = vunpack.c.l.b16 %v720
      %v827 = vunpack.c.h.b16 %v720
      %v828 = vunpack.c.l.b16 %v721
      %v829 = vunpack.c.h.b16 %v721
      %v830 = vunpack.c.l.b16 %v722
      %v831 = vunpack.c.h.b16 %v722
      %v832 = vpack.c.b16 %v772, %v768
      %v833 = vpack.c.b16 %v773, %v769
      %v834 = vpack.c.b16 %v774, %v770
      %v835 = vpack.c.b16 %v775, %v771
      %v836 = vpack.c.b16 %v780, %v776
      %v837 = vpack.c.b16 %v781, %v777
      %v838 = vpack.c.b16 %v782, %v778
      %v839 = vpack.c.b16 %v783, %v779
      %v840 = vpack.c.b16 %v788, %v784
      %v841 = vpack.c.b16 %v789, %v785
      %v842 = vpack.c.b16 %v790, %v786
      %v843 = vpack.c.b16 %v791, %v787
      %v844 = vpack.c.b16 %v796, %v792
      %v845 = vpack.c.b16 %v797, %v793
      %v846 = vpack.c.b16 %v798, %v794
      %v847 = vpack.c.b16 %v799, %v795
      %v848 = vpack.c.b16 %v804, %v800
      %v849 = vpack.c.b16 %v805, %v801
      %v850 = vpack.c.b16 %v806, %v802
      %v851 = vpack.c.b16 %v807, %v803
      %v852 = vpack.c.b16 %v812, %v808
      %v853 = vpack.c.b16 %v813, %v809
      %v854 = vpack.c.b16 %v814, %v810
      %v855 = vpack.c.b16 %v815, %v811
      %v856 = vpack.c.b16 %v820, %v816
      %v857 = vpack.c.b16 %v821, %v817
      %v858 = vpack.c.b16 %v822, %v818
      %v859 = vpack.c.b16 %v823, %v819
      %v860 = vpack.c.b16 %v828, %v824
      %v861 = vpack.c.b16 %v829, %v825
      %v862 = vpack.c.b16 %v830, %v826
      %v863 = vpack.c.b16 %v831, %v827
      %896 = vmatprep.subr.bf16.mxu0 %v861
      %897 = vmatpush1.bf16.msra.mxu0 %v860
      %898 = vmatprep.subr.bf16.mxu0 %v857
      %899 = vmatpush1.bf16.msra.mxu0 %v856
      %900 = vmatprep.subr.bf16.mxu0 %v853
      %901 = vmatpush1.bf16.msra.mxu0 %v852
      %902 = vmatprep.subr.bf16.mxu0 %v849
      %903 = vmatpush1.bf16.msra.mxu0 %v848
      %904 = vmatprep.subr.bf16.mxu0 %v845
      %905 = vmatpush1.bf16.msra.mxu0 %v844
      %906 = vmatprep.subr.bf16.mxu0 %v841
      %907 = vmatpush1.bf16.msra.mxu0 %v840
      %908 = vmatprep.subr.bf16.mxu0 %v837
      %909 = vmatpush1.bf16.msra.mxu0 %v836
      %910 = vmatprep.subr.bf16.mxu0 %v833
      %911 = vmatpush1.bf16.msra.mxu0 %v832
      %912 = vmatprep.subr.bf16.mxu0 0
      %913 = vmatpush2.bf16.msra.mxu0 0
      %914 = vmatprep.subr.bf16.mxu0 0
      %915 = vmatpush2.bf16.msra.mxu0 0
      %916 = vmatprep.subr.bf16.mxu0 0
      %917 = vmatpush2.bf16.msra.mxu0 0
      %918 = vmatprep.subr.bf16.mxu0 0
      %919 = vmatpush2.bf16.msra.mxu0 0
      %920 = vmatprep.subr.bf16.mxu0 0
      %921 = vmatpush2.bf16.msra.mxu0 0
      %922 = vmatprep.subr.bf16.mxu0 0
      %923 = vmatpush2.bf16.msra.mxu0 0
      %924 = vmatprep.subr.bf16.mxu0 0
      %925 = vmatpush2.bf16.msra.mxu0 0
      %926 = vmatprep.subr.bf16.mxu0 0
      %927 = vmatpush2.bf16.msra.mxu0 0
      %928 = vmatprep.mubr.bf16.mxu0 0
      %929 = vmatmul.mubr.bf16.gmra.mxu0 %v735
      %v930 = vpop.f32.mrf.mxu0
      %v931 = vadd.f32 0.0, %v930
      %v932 = vpop.f32.mrf.mxu0
      %v933 = vadd.f32 0.0, %v932
      %v934 = vpop.f32.mrf.mxu0
      %v935 = vadd.f32 0.0, %v934
      %v936 = vpop.f32.mrf.mxu0
      %v937 = vadd.f32 0.0, %v936
      %938 = vdwg.mxu0
      %939 = vmatprep.subr.bf16.mxu0 %v863
      %940 = vmatpush1.bf16.msra.mxu0 %v862
      %941 = vmatprep.subr.bf16.mxu0 %v859
      %942 = vmatpush1.bf16.msra.mxu0 %v858
      %943 = vmatprep.subr.bf16.mxu0 %v855
      %944 = vmatpush1.bf16.msra.mxu0 %v854
      %945 = vmatprep.subr.bf16.mxu0 %v851
      %946 = vmatpush1.bf16.msra.mxu0 %v850
      %947 = vmatprep.subr.bf16.mxu0 %v847
      %948 = vmatpush1.bf16.msra.mxu0 %v846
      %949 = vmatprep.subr.bf16.mxu0 %v843
      %950 = vmatpush1.bf16.msra.mxu0 %v842
      %951 = vmatprep.subr.bf16.mxu0 %v839
      %952 = vmatpush1.bf16.msra.mxu0 %v838
      %953 = vmatprep.subr.bf16.mxu0 %v835
      %954 = vmatpush1.bf16.msra.mxu0 %v834
      %955 = vmatprep.subr.bf16.mxu0 0
      %956 = vmatpush2.bf16.msra.mxu0 0
      %957 = vmatprep.subr.bf16.mxu0 0
      %958 = vmatpush2.bf16.msra.mxu0 0
      %959 = vmatprep.subr.bf16.mxu0 0
      %960 = vmatpush2.bf16.msra.mxu0 0
      %961 = vmatprep.subr.bf16.mxu0 0
      %962 = vmatpush2.bf16.msra.mxu0 0
      %963 = vmatprep.subr.bf16.mxu0 0
      %964 = vmatpush2.bf16.msra.mxu0 0
      %965 = vmatprep.subr.bf16.mxu0 0
      %966 = vmatpush2.bf16.msra.mxu0 0
      %967 = vmatprep.subr.bf16.mxu0 0
      %968 = vmatpush2.bf16.msra.mxu0 0
      %969 = vmatprep.subr.bf16.mxu0 0
      %970 = vmatpush2.bf16.msra.mxu0 0
      %971 = vmatprep.mubr.bf16.mxu0 0
      %972 = vmatmul.mubr.bf16.gmra.mxu0 %v735
      %v973 = vpop.f32.mrf.mxu0
      %v974 = vadd.f32 0.0, %v973
      %v975 = vpop.f32.mrf.mxu0
      %v976 = vadd.f32 0.0, %v975
      %v977 = vpop.f32.mrf.mxu0
      %v978 = vadd.f32 0.0, %v977
      %v979 = vpop.f32.mrf.mxu0
      %v980 = vadd.f32 0.0, %v979
      %981 = vdwg.mxu0
      %v982 = vadd.f32 %v727, %v931
      %v983 = vadd.f32 %v728, %v933
      %v984 = vadd.f32 %v729, %v974
      %v985 = vadd.f32 %v730, %v976
      %v986 = vadd.f32 %v731, %v935
      %v987 = vadd.f32 %v732, %v937
      %v988 = vadd.f32 %v733, %v978
      %v989 = vadd.f32 %v734, %v980
      %v990 = vxor.u32 %v982, 2147483648
      %v991 = vxor.u32 %v986, 2147483648
      %v992 = vmul.f32 %v990, 1.442695
      %v993 = vpow.pop %v992
      %v994 = vmul.f32 %v991, 1.442695
      %v995 = vpow.pop %v994
      %v996 = vadd.f32 %v993, 1.0
      %v997 = vadd.f32 %v995, 1.0
      %v998 = vrcp.pop %v996
      %v999 = vmul.f32 1.0, %v998
      %v1000 = vrcp.pop %v997
      %v1001 = vmul.f32 1.0, %v1000
      %v1002 = vxor.u32 %v983, 2147483648
      %v1003 = vxor.u32 %v987, 2147483648
      %v1004 = vmul.f32 %v1002, 1.442695
      %v1005 = vpow.pop %v1004
      %v1006 = vmul.f32 %v1003, 1.442695
      %v1007 = vpow.pop %v1006
      %v1008 = vadd.f32 %v1005, 1.0
      %v1009 = vadd.f32 %v1007, 1.0
      %v1010 = vrcp.pop %v1008
      %v1011 = vmul.f32 1.0, %v1010
      %v1012 = vrcp.pop %v1009
      %v1013 = vmul.f32 1.0, %v1012
      %v1014 = vtanh.pop %v984
      %v1015 = vtanh.pop %v988
      %v1016 = vxor.u32 %v985, 2147483648
      %v1017 = vxor.u32 %v989, 2147483648
      %v1018 = vmul.f32 %v1016, 1.442695
      %v1019 = vpow.pop %v1018
      %v1020 = vmul.f32 %v1017, 1.442695
      %v1021 = vpow.pop %v1020
      %v1022 = vadd.f32 %v1019, 1.0
      %v1023 = vadd.f32 %v1021, 1.0
      %v1024 = vrcp.pop %v1022
      %v1025 = vmul.f32 1.0, %v1024
      %v1026 = vrcp.pop %v1023
      %v1027 = vmul.f32 1.0, %v1026
      %v1028 = vmul.f32 %v1011, %v725
      %v1029 = vmul.f32 %v1013, %v726
      %v1030 = vmul.f32 %v999, %v1014
      %v1031 = vmul.f32 %v1001, %v1015
      %v1032 = vadd.f32 %v1028, %v1030
      %v1033 = vadd.f32 %v1029, %v1031
      %v1034 = vtanh.pop %v1032
      %v1035 = vtanh.pop %v1033
      %v1036 = vmul.f32 %v1025, %v1034
      %v1037 = vmul.f32 %v1027, %v1035
      %v1038 = vld [vmem:[%s1] sm:$0xff]
      %v1039 = vld [vmem:[%s1 + $0x8] sm:$0xff]
      %1041 = vset.pattern.permute.xlu0 0
      %1042 = vperm.xlu0 %1041, %v1038
      %v1043 = vpop.permute.xlu0 %1042
      %1046 = vset.pattern.permute.xlu0 0
      %1047 = vperm.xlu0 %1046, %v1039
      %v1048 = vpop.permute.xlu0 %1047
      %v1050 = vmul.f32 %v1043, %v1036
      %v1051 = vmul.f32 %v1048, %v1037
      %v1052 = vsub.f32 1.0, %v1038
      %v1053 = vsub.f32 1.0, %v1039
      %1055 = vset.pattern.permute.xlu0 0
      %1056 = vperm.xlu0 %1055, %v1052
      %v1057 = vpop.permute.xlu0 %1056
      %1060 = vset.pattern.permute.xlu0 0
      %1061 = vperm.xlu0 %1060, %v1053
      %v1062 = vpop.permute.xlu0 %1061
      %v1064 = vmul.f32 %v1057, %v723
      %v1065 = vmul.f32 %v1062, %v724
      %v1066 = vadd.f32 %v1050, %v1064
      %v1067 = vadd.f32 %v1051, %v1065
      %v1068 = vmul.f32 %v1043, %v1032
      %v1069 = vmul.f32 %v1048, %v1033
      %v1070 = vmul.f32 %v1057, %v725
      %v1071 = vmul.f32 %v1062, %v726
      %v1072 = vadd.f32 %v1068, %v1070
      %v1073 = vadd.f32 %v1069, %v1071
      %v1074 = vpack.c.bf16 %v1067, %v1066
      %v1076 = vunpack.c.l.b16 %v1074
      %v1077 = vunpack.c.h.b16 %v1074
      %v1078 = vpack.c.b16 %v1076, %v1076
      %v1079 = vpack.c.b16 %v1077, %v1077
      %1082 = vst [vmem:[#allocation3] sm:$0xf] %v1078
      %1083 = vst [vmem:[#allocation3 + $0x4] sm:$0xf] %v1079
      %v1084 = vld [vmem:[#allocation2 + $0x40] sm:$0xff]
      %v1085 = vld [vmem:[#allocation2 + $0x48] sm:$0xff]
      %v1086 = vld [vmem:[#allocation2 + $0x50] sm:$0xff]
      %v1087 = vld [vmem:[#allocation2 + $0x58] sm:$0xff]
      %v1088 = vld [vmem:[#allocation2 + $0x60] sm:$0xff]
      %v1089 = vld [vmem:[#allocation2 + $0x68] sm:$0xff]
      %v1090 = vld [vmem:[#allocation2 + $0x70] sm:$0xff]
      %v1091 = vld [vmem:[#allocation2 + $0x78] sm:$0xff]
      %1092 = vmatprep.subr.bf16.mxu0 %v861
      %1093 = vmatpush1.bf16.msra.mxu0 %v860
      %1094 = vmatprep.subr.bf16.mxu0 %v857
      %1095 = vmatpush1.bf16.msra.mxu0 %v856
      %1096 = vmatprep.subr.bf16.mxu0 %v853
      %1097 = vmatpush1.bf16.msra.mxu0 %v852
      %1098 = vmatprep.subr.bf16.mxu0 %v849
      %1099 = vmatpush1.bf16.msra.mxu0 %v848
      %1100 = vmatprep.subr.bf16.mxu0 %v845
      %1101 = vmatpush1.bf16.msra.mxu0 %v844
      %1102 = vmatprep.subr.bf16.mxu0 %v841
      %1103 = vmatpush1.bf16.msra.mxu0 %v840
      %1104 = vmatprep.subr.bf16.mxu0 %v837
      %1105 = vmatpush1.bf16.msra.mxu0 %v836
      %1106 = vmatprep.subr.bf16.mxu0 %v833
      %1107 = vmatpush1.bf16.msra.mxu0 %v832
      %1108 = vmatprep.subr.bf16.mxu0 0
      %1109 = vmatpush2.bf16.msra.mxu0 0
      %1110 = vmatprep.subr.bf16.mxu0 0
      %1111 = vmatpush2.bf16.msra.mxu0 0
      %1112 = vmatprep.subr.bf16.mxu0 0
      %1113 = vmatpush2.bf16.msra.mxu0 0
      %1114 = vmatprep.subr.bf16.mxu0 0
      %1115 = vmatpush2.bf16.msra.mxu0 0
      %1116 = vmatprep.subr.bf16.mxu0 0
      %1117 = vmatpush2.bf16.msra.mxu0 0
      %1118 = vmatprep.subr.bf16.mxu0 0
      %1119 = vmatpush2.bf16.msra.mxu0 0
      %1120 = vmatprep.subr.bf16.mxu0 0
      %1121 = vmatpush2.bf16.msra.mxu0 0
      %1122 = vmatprep.subr.bf16.mxu0 0
      %1123 = vmatpush2.bf16.msra.mxu0 0
      %1124 = vmatprep.mubr.bf16.mxu0 0
      %1125 = vmatmul.mubr.bf16.gmra.mxu0 %v1074
      %v1126 = vpop.f32.mrf.mxu0
      %v1127 = vadd.f32 0.0, %v1126
      %v1128 = vpop.f32.mrf.mxu0
      %v1129 = vadd.f32 0.0, %v1128
      %v1130 = vpop.f32.mrf.mxu0
      %v1131 = vadd.f32 0.0, %v1130
      %v1132 = vpop.f32.mrf.mxu0
      %v1133 = vadd.f32 0.0, %v1132
      %1134 = vdwg.mxu0
      %1135 = vmatprep.subr.bf16.mxu0 %v863
      %1136 = vmatpush1.bf16.msra.mxu0 %v862
      %1137 = vmatprep.subr.bf16.mxu0 %v859
      %1138 = vmatpush1.bf16.msra.mxu0 %v858
      %1139 = vmatprep.subr.bf16.mxu0 %v855
      %1140 = vmatpush1.bf16.msra.mxu0 %v854
      %1141 = vmatprep.subr.bf16.mxu0 %v851
      %1142 = vmatpush1.bf16.msra.mxu0 %v850
      %1143 = vmatprep.subr.bf16.mxu0 %v847
      %1144 = vmatpush1.bf16.msra.mxu0 %v846
      %1145 = vmatprep.subr.bf16.mxu0 %v843
      %1146 = vmatpush1.bf16.msra.mxu0 %v842
      %1147 = vmatprep.subr.bf16.mxu0 %v839
      %1148 = vmatpush1.bf16.msra.mxu0 %v838
      %1149 = vmatprep.subr.bf16.mxu0 %v835
      %1150 = vmatpush1.bf16.msra.mxu0 %v834
      %1151 = vmatprep.subr.bf16.mxu0 0
      %1152 = vmatpush2.bf16.msra.mxu0 0
      %1153 = vmatprep.subr.bf16.mxu0 0
      %1154 = vmatpush2.bf16.msra.mxu0 0
      %1155 = vmatprep.subr.bf16.mxu0 0
      %1156 = vmatpush2.bf16.msra.mxu0 0
      %1157 = vmatprep.subr.bf16.mxu0 0
      %1158 = vmatpush2.bf16.msra.mxu0 0
      %1159 = vmatprep.subr.bf16.mxu0 0
      %1160 = vmatpush2.bf16.msra.mxu0 0
      %1161 = vmatprep.subr.bf16.mxu0 0
      %1162 = vmatpush2.bf16.msra.mxu0 0
      %1163 = vmatprep.subr.bf16.mxu0 0
      %1164 = vmatpush2.bf16.msra.mxu0 0
      %1165 = vmatprep.subr.bf16.mxu0 0
      %1166 = vmatpush2.bf16.msra.mxu0 0
      %1167 = vmatprep.mubr.bf16.mxu0 0
      %1168 = vmatmul.mubr.bf16.gmra.mxu0 %v1074
      %v1169 = vpop.f32.mrf.mxu0
      %v1170 = vadd.f32 0.0, %v1169
      %v1171 = vpop.f32.mrf.mxu0
      %v1172 = vadd.f32 0.0, %v1171
      %v1173 = vpop.f32.mrf.mxu0
      %v1174 = vadd.f32 0.0, %v1173
      %v1175 = vpop.f32.mrf.mxu0
      %v1176 = vadd.f32 0.0, %v1175
      %1177 = vdwg.mxu0
      %v1178 = vadd.f32 %v1084, %v1127
      %v1179 = vadd.f32 %v1085, %v1129
      %v1180 = vadd.f32 %v1086, %v1170
      %v1181 = vadd.f32 %v1087, %v1172
      %v1182 = vadd.f32 %v1088, %v1131
      %v1183 = vadd.f32 %v1089, %v1133
      %v1184 = vadd.f32 %v1090, %v1174
      %v1185 = vadd.f32 %v1091, %v1176
      %v1186 = vxor.u32 %v1178, 2147483648
      %v1187 = vxor.u32 %v1182, 2147483648
      %v1188 = vmul.f32 %v1186, 1.442695
      %v1189 = vpow.pop %v1188
      %v1190 = vmul.f32 %v1187, 1.442695
      %v1191 = vpow.pop %v1190
      %v1192 = vadd.f32 %v1189, 1.0
      %v1193 = vadd.f32 %v1191, 1.0
      %v1194 = vrcp.pop %v1192
      %v1195 = vmul.f32 1.0, %v1194
      %v1196 = vrcp.pop %v1193
      %v1197 = vmul.f32 1.0, %v1196
      %v1198 = vxor.u32 %v1179, 2147483648
      %v1199 = vxor.u32 %v1183, 2147483648
      %v1200 = vmul.f32 %v1198, 1.442695
      %v1201 = vpow.pop %v1200
      %v1202 = vmul.f32 %v1199, 1.442695
      %v1203 = vpow.pop %v1202
      %v1204 = vadd.f32 %v1201, 1.0
      %v1205 = vadd.f32 %v1203, 1.0
      %v1206 = vrcp.pop %v1204
      %v1207 = vmul.f32 1.0, %v1206
      %v1208 = vrcp.pop %v1205
      %v1209 = vmul.f32 1.0, %v1208
      %v1210 = vtanh.pop %v1180
      %v1211 = vtanh.pop %v1184
      %v1212 = vxor.u32 %v1181, 2147483648
      %v1213 = vxor.u32 %v1185, 2147483648
      %v1214 = vmul.f32 %v1212, 1.442695
      %v1215 = vpow.pop %v1214
      %v1216 = vmul.f32 %v1213, 1.442695
      %v1217 = vpow.pop %v1216
      %v1218 = vadd.f32 %v1215, 1.0
      %v1219 = vadd.f32 %v1217, 1.0
      %v1220 = vrcp.pop %v1218
      %v1221 = vmul.f32 1.0, %v1220
      %v1222 = vrcp.pop %v1219
      %v1223 = vmul.f32 1.0, %v1222
      %v1224 = vmul.f32 %v1207, %v1072
      %v1225 = vmul.f32 %v1209, %v1073
      %v1226 = vmul.f32 %v1195, %v1210
      %v1227 = vmul.f32 %v1197, %v1211
      %v1228 = vadd.f32 %v1224, %v1226
      %v1229 = vadd.f32 %v1225, %v1227
      %v1230 = vtanh.pop %v1228
      %v1231 = vtanh.pop %v1229
      %v1232 = vmul.f32 %v1221, %v1230
      %v1233 = vmul.f32 %v1223, %v1231
      %v1234 = vld [vmem:[%s1 + $0x10] sm:$0xff]
      %v1235 = vld [vmem:[%s1 + $0x18] sm:$0xff]
      %1237 = vset.pattern.permute.xlu0 0
      %1238 = vperm.xlu0 %1237, %v1234
      %v1239 = vpop.permute.xlu0 %1238
      %1242 = vset.pattern.permute.xlu0 0
      %1243 = vperm.xlu0 %1242, %v1235
      %v1244 = vpop.permute.xlu0 %1243
      %v1246 = vmul.f32 %v1239, %v1232
      %v1247 = vmul.f32 %v1244, %v1233
      %v1248 = vsub.f32 1.0, %v1234
      %v1249 = vsub.f32 1.0, %v1235
      %1251 = vset.pattern.permute.xlu0 0
      %1252 = vperm.xlu0 %1251, %v1248
      %v1253 = vpop.permute.xlu0 %1252
      %1256 = vset.pattern.permute.xlu0 0
      %1257 = vperm.xlu0 %1256, %v1249
      %v1258 = vpop.permute.xlu0 %1257
      %v1260 = vmul.f32 %v1253, %v1066
      %v1261 = vmul.f32 %v1258, %v1067
      %v1262 = vadd.f32 %v1246, %v1260
      %v1263 = vadd.f32 %v1247, %v1261
      %v1264 = vmul.f32 %v1239, %v1228
      %v1265 = vmul.f32 %v1244, %v1229
      %v1266 = vmul.f32 %v1253, %v1072
      %v1267 = vmul.f32 %v1258, %v1073
      %v1268 = vadd.f32 %v1264, %v1266
      %v1269 = vadd.f32 %v1265, %v1267
      %v1270 = vpack.c.bf16 %v1263, %v1262
      %v1272 = vunpack.c.l.b16 %v1270
      %v1273 = vunpack.c.h.b16 %v1270
      %v1274 = vpack.c.b16 %v1272, %v1272
      %v1275 = vpack.c.b16 %v1273, %v1273
      %1278 = vst [vmem:[#allocation3 + $0x8] sm:$0xf] %v1274
      %1279 = vst [vmem:[#allocation3 + $0xc] sm:$0xf] %v1275
      %v1280 = vld [vmem:[#allocation2 + $0x80] sm:$0xff]
      %v1281 = vld [vmem:[#allocation2 + $0x88] sm:$0xff]
      %v1282 = vld [vmem:[#allocation2 + $0x90] sm:$0xff]
      %v1283 = vld [vmem:[#allocation2 + $0x98] sm:$0xff]
      %v1284 = vld [vmem:[#allocation2 + $0xa0] sm:$0xff]
      %v1285 = vld [vmem:[#allocation2 + $0xa8] sm:$0xff]
      %v1286 = vld [vmem:[#allocation2 + $0xb0] sm:$0xff]
      %v1287 = vld [vmem:[#allocation2 + $0xb8] sm:$0xff]
      %1288 = vmatprep.subr.bf16.mxu0 %v861
      %1289 = vmatpush1.bf16.msra.mxu0 %v860
      %1290 = vmatprep.subr.bf16.mxu0 %v857
      %1291 = vmatpush1.bf16.msra.mxu0 %v856
      %1292 = vmatprep.subr.bf16.mxu0 %v853
      %1293 = vmatpush1.bf16.msra.mxu0 %v852
      %1294 = vmatprep.subr.bf16.mxu0 %v849
      %1295 = vmatpush1.bf16.msra.mxu0 %v848
      %1296 = vmatprep.subr.bf16.mxu0 %v845
      %1297 = vmatpush1.bf16.msra.mxu0 %v844
      %1298 = vmatprep.subr.bf16.mxu0 %v841
      %1299 = vmatpush1.bf16.msra.mxu0 %v840
      %1300 = vmatprep.subr.bf16.mxu0 %v837
      %1301 = vmatpush1.bf16.msra.mxu0 %v836
      %1302 = vmatprep.subr.bf16.mxu0 %v833
      %1303 = vmatpush1.bf16.msra.mxu0 %v832
      %1304 = vmatprep.subr.bf16.mxu0 0
      %1305 = vmatpush2.bf16.msra.mxu0 0
      %1306 = vmatprep.subr.bf16.mxu0 0
      %1307 = vmatpush2.bf16.msra.mxu0 0
      %1308 = vmatprep.subr.bf16.mxu0 0
      %1309 = vmatpush2.bf16.msra.mxu0 0
      %1310 = vmatprep.subr.bf16.mxu0 0
      %1311 = vmatpush2.bf16.msra.mxu0 0
      %1312 = vmatprep.subr.bf16.mxu0 0
      %1313 = vmatpush2.bf16.msra.mxu0 0
      %1314 = vmatprep.subr.bf16.mxu0 0
      %1315 = vmatpush2.bf16.msra.mxu0 0
      %1316 = vmatprep.subr.bf16.mxu0 0
      %1317 = vmatpush2.bf16.msra.mxu0 0
      %1318 = vmatprep.subr.bf16.mxu0 0
      %1319 = vmatpush2.bf16.msra.mxu0 0
      %1320 = vmatprep.mubr.bf16.mxu0 0
      %1321 = vmatmul.mubr.bf16.gmra.mxu0 %v1270
      %v1322 = vpop.f32.mrf.mxu0
      %v1323 = vadd.f32 0.0, %v1322
      %v1324 = vpop.f32.mrf.mxu0
      %v1325 = vadd.f32 0.0, %v1324
      %v1326 = vpop.f32.mrf.mxu0
      %v1327 = vadd.f32 0.0, %v1326
      %v1328 = vpop.f32.mrf.mxu0
      %v1329 = vadd.f32 0.0, %v1328
      %1330 = vdwg.mxu0
      %1331 = vmatprep.subr.bf16.mxu0 %v863
      %1332 = vmatpush1.bf16.msra.mxu0 %v862
      %1333 = vmatprep.subr.bf16.mxu0 %v859
      %1334 = vmatpush1.bf16.msra.mxu0 %v858
      %1335 = vmatprep.subr.bf16.mxu0 %v855
      %1336 = vmatpush1.bf16.msra.mxu0 %v854
      %1337 = vmatprep.subr.bf16.mxu0 %v851
      %1338 = vmatpush1.bf16.msra.mxu0 %v850
      %1339 = vmatprep.subr.bf16.mxu0 %v847
      %1340 = vmatpush1.bf16.msra.mxu0 %v846
      %1341 = vmatprep.subr.bf16.mxu0 %v843
      %1342 = vmatpush1.bf16.msra.mxu0 %v842
      %1343 = vmatprep.subr.bf16.mxu0 %v839
      %1344 = vmatpush1.bf16.msra.mxu0 %v838
      %1345 = vmatprep.subr.bf16.mxu0 %v835
      %1346 = vmatpush1.bf16.msra.mxu0 %v834
      %1347 = vmatprep.subr.bf16.mxu0 0
      %1348 = vmatpush2.bf16.msra.mxu0 0
      %1349 = vmatprep.subr.bf16.mxu0 0
      %1350 = vmatpush2.bf16.msra.mxu0 0
      %1351 = vmatprep.subr.bf16.mxu0 0
      %1352 = vmatpush2.bf16.msra.mxu0 0
      %1353 = vmatprep.subr.bf16.mxu0 0
      %1354 = vmatpush2.bf16.msra.mxu0 0
      %1355 = vmatprep.subr.bf16.mxu0 0
      %1356 = vmatpush2.bf16.msra.mxu0 0
      %1357 = vmatprep.subr.bf16.mxu0 0
      %1358 = vmatpush2.bf16.msra.mxu0 0
      %1359 = vmatprep.subr.bf16.mxu0 0
      %1360 = vmatpush2.bf16.msra.mxu0 0
      %1361 = vmatprep.subr.bf16.mxu0 0
      %1362 = vmatpush2.bf16.msra.mxu0 0
      %1363 = vmatprep.mubr.bf16.mxu0 0
      %1364 = vmatmul.mubr.bf16.gmra.mxu0 %v1270
      %v1365 = vpop.f32.mrf.mxu0
      %v1366 = vadd.f32 0.0, %v1365
      %v1367 = vpop.f32.mrf.mxu0
      %v1368 = vadd.f32 0.0, %v1367
      %v1369 = vpop.f32.mrf.mxu0
      %v1370 = vadd.f32 0.0, %v1369
      %v1371 = vpop.f32.mrf.mxu0
      %v1372 = vadd.f32 0.0, %v1371
      %1373 = vdwg.mxu0
      %v1374 = vadd.f32 %v1280, %v1323
      %v1375 = vadd.f32 %v1281, %v1325
      %v1376 = vadd.f32 %v1282, %v1366
      %v1377 = vadd.f32 %v1283, %v1368
      %v1378 = vadd.f32 %v1284, %v1327
      %v1379 = vadd.f32 %v1285, %v1329
      %v1380 = vadd.f32 %v1286, %v1370
      %v1381 = vadd.f32 %v1287, %v1372
      %v1382 = vxor.u32 %v1374, 2147483648
      %v1383 = vxor.u32 %v1378, 2147483648
      %v1384 = vmul.f32 %v1382, 1.442695
      %v1385 = vpow.pop %v1384
      %v1386 = vmul.f32 %v1383, 1.442695
      %v1387 = vpow.pop %v1386
      %v1388 = vadd.f32 %v1385, 1.0
      %v1389 = vadd.f32 %v1387, 1.0
      %v1390 = vrcp.pop %v1388
      %v1391 = vmul.f32 1.0, %v1390
      %v1392 = vrcp.pop %v1389
      %v1393 = vmul.f32 1.0, %v1392
      %v1394 = vxor.u32 %v1375, 2147483648
      %v1395 = vxor.u32 %v1379, 2147483648
      %v1396 = vmul.f32 %v1394, 1.442695
      %v1397 = vpow.pop %v1396
      %v1398 = vmul.f32 %v1395, 1.442695
      %v1399 = vpow.pop %v1398
      %v1400 = vadd.f32 %v1397, 1.0
      %v1401 = vadd.f32 %v1399, 1.0
      %v1402 = vrcp.pop %v1400
      %v1403 = vmul.f32 1.0, %v1402
      %v1404 = vrcp.pop %v1401
      %v1405 = vmul.f32 1.0, %v1404
      %v1406 = vtanh.pop %v1376
      %v1407 = vtanh.pop %v1380
      %v1408 = vxor.u32 %v1377, 2147483648
      %v1409 = vxor.u32 %v1381, 2147483648
      %v1410 = vmul.f32 %v1408, 1.442695
      %v1411 = vpow.pop %v1410
      %v1412 = vmul.f32 %v1409, 1.442695
      %v1413 = vpow.pop %v1412
      %v1414 = vadd.f32 %v1411, 1.0
      %v1415 = vadd.f32 %v1413, 1.0
      %v1416 = vrcp.pop %v1414
      %v1417 = vmul.f32 1.0, %v1416
      %v1418 = vrcp.pop %v1415
      %v1419 = vmul.f32 1.0, %v1418
      %v1420 = vmul.f32 %v1403, %v1268
      %v1421 = vmul.f32 %v1405, %v1269
      %v1422 = vmul.f32 %v1391, %v1406
      %v1423 = vmul.f32 %v1393, %v1407
      %v1424 = vadd.f32 %v1420, %v1422
      %v1425 = vadd.f32 %v1421, %v1423
      %v1426 = vtanh.pop %v1424
      %v1427 = vtanh.pop %v1425
      %v1428 = vmul.f32 %v1417, %v1426
      %v1429 = vmul.f32 %v1419, %v1427
      %v1430 = vld [vmem:[%s1 + $0x20] sm:$0xff]
      %v1431 = vld [vmem:[%s1 + $0x28] sm:$0xff]
      %1433 = vset.pattern.permute.xlu0 0
      %1434 = vperm.xlu0 %1433, %v1430
      %v1435 = vpop.permute.xlu0 %1434
      %1438 = vset.pattern.permute.xlu0 0
      %1439 = vperm.xlu0 %1438, %v1431
      %v1440 = vpop.permute.xlu0 %1439
      %v1442 = vmul.f32 %v1435, %v1428
      %v1443 = vmul.f32 %v1440, %v1429
      %v1444 = vsub.f32 1.0, %v1430
      %v1445 = vsub.f32 1.0, %v1431
      %1447 = vset.pattern.permute.xlu0 0
      %1448 = vperm.xlu0 %1447, %v1444
      %v1449 = vpop.permute.xlu0 %1448
      %1452 = vset.pattern.permute.xlu0 0
      %1453 = vperm.xlu0 %1452, %v1445
      %v1454 = vpop.permute.xlu0 %1453
      %v1456 = vmul.f32 %v1449, %v1262
      %v1457 = vmul.f32 %v1454, %v1263
      %v1458 = vadd.f32 %v1442, %v1456
      %v1459 = vadd.f32 %v1443, %v1457
      %v1460 = vmul.f32 %v1435, %v1424
      %v1461 = vmul.f32 %v1440, %v1425
      %v1462 = vmul.f32 %v1449, %v1268
      %v1463 = vmul.f32 %v1454, %v1269
      %v1464 = vadd.f32 %v1460, %v1462
      %v1465 = vadd.f32 %v1461, %v1463
      %v1466 = vpack.c.bf16 %v1459, %v1458
      %v1468 = vunpack.c.l.b16 %v1466
      %v1469 = vunpack.c.h.b16 %v1466
      %v1470 = vpack.c.b16 %v1468, %v1468
      %v1471 = vpack.c.b16 %v1469, %v1469
      %1474 = vst [vmem:[#allocation3 + $0x10] sm:$0xf] %v1470
      %1475 = vst [vmem:[#allocation3 + $0x14] sm:$0xf] %v1471
      %v1476 = vld [vmem:[#allocation2 + $0xc0] sm:$0xff]
      %v1477 = vld [vmem:[#allocation2 + $0xc8] sm:$0xff]
      %v1478 = vld [vmem:[#allocation2 + $0xd0] sm:$0xff]
      %v1479 = vld [vmem:[#allocation2 + $0xd8] sm:$0xff]
      %v1480 = vld [vmem:[#allocation2 + $0xe0] sm:$0xff]
      %v1481 = vld [vmem:[#allocation2 + $0xe8] sm:$0xff]
      %v1482 = vld [vmem:[#allocation2 + $0xf0] sm:$0xff]
      %v1483 = vld [vmem:[#allocation2 + $0xf8] sm:$0xff]
      %1484 = vmatprep.subr.bf16.mxu0 %v861
      %1485 = vmatpush1.bf16.msra.mxu0 %v860
      %1486 = vmatprep.subr.bf16.mxu0 %v857
      %1487 = vmatpush1.bf16.msra.mxu0 %v856
      %1488 = vmatprep.subr.bf16.mxu0 %v853
      %1489 = vmatpush1.bf16.msra.mxu0 %v852
      %1490 = vmatprep.subr.bf16.mxu0 %v849
      %1491 = vmatpush1.bf16.msra.mxu0 %v848
      %1492 = vmatprep.subr.bf16.mxu0 %v845
      %1493 = vmatpush1.bf16.msra.mxu0 %v844
      %1494 = vmatprep.subr.bf16.mxu0 %v841
      %1495 = vmatpush1.bf16.msra.mxu0 %v840
      %1496 = vmatprep.subr.bf16.mxu0 %v837
      %1497 = vmatpush1.bf16.msra.mxu0 %v836
      %1498 = vmatprep.subr.bf16.mxu0 %v833
      %1499 = vmatpush1.bf16.msra.mxu0 %v832
      %1500 = vmatprep.subr.bf16.mxu0 0
      %1501 = vmatpush2.bf16.msra.mxu0 0
      %1502 = vmatprep.subr.bf16.mxu0 0
      %1503 = vmatpush2.bf16.msra.mxu0 0
      %1504 = vmatprep.subr.bf16.mxu0 0
      %1505 = vmatpush2.bf16.msra.mxu0 0
      %1506 = vmatprep.subr.bf16.mxu0 0
      %1507 = vmatpush2.bf16.msra.mxu0 0
      %1508 = vmatprep.subr.bf16.mxu0 0
      %1509 = vmatpush2.bf16.msra.mxu0 0
      %1510 = vmatprep.subr.bf16.mxu0 0
      %1511 = vmatpush2.bf16.msra.mxu0 0
      %1512 = vmatprep.subr.bf16.mxu0 0
      %1513 = vmatpush2.bf16.msra.mxu0 0
      %1514 = vmatprep.subr.bf16.mxu0 0
      %1515 = vmatpush2.bf16.msra.mxu0 0
      %1516 = vmatprep.mubr.bf16.mxu0 0
      %1517 = vmatmul.mubr.bf16.gmra.mxu0 %v1466
      %v1518 = vpop.f32.mrf.mxu0
      %v1519 = vadd.f32 0.0, %v1518
      %v1520 = vpop.f32.mrf.mxu0
      %v1521 = vadd.f32 0.0, %v1520
      %v1522 = vpop.f32.mrf.mxu0
      %v1523 = vadd.f32 0.0, %v1522
      %v1524 = vpop.f32.mrf.mxu0
      %v1525 = vadd.f32 0.0, %v1524
      %1526 = vdwg.mxu0
      %1527 = vmatprep.subr.bf16.mxu0 %v863
      %1528 = vmatpush1.bf16.msra.mxu0 %v862
      %1529 = vmatprep.subr.bf16.mxu0 %v859
      %1530 = vmatpush1.bf16.msra.mxu0 %v858
      %1531 = vmatprep.subr.bf16.mxu0 %v855
      %1532 = vmatpush1.bf16.msra.mxu0 %v854
      %1533 = vmatprep.subr.bf16.mxu0 %v851
      %1534 = vmatpush1.bf16.msra.mxu0 %v850
      %1535 = vmatprep.subr.bf16.mxu0 %v847
      %1536 = vmatpush1.bf16.msra.mxu0 %v846
      %1537 = vmatprep.subr.bf16.mxu0 %v843
      %1538 = vmatpush1.bf16.msra.mxu0 %v842
      %1539 = vmatprep.subr.bf16.mxu0 %v839
      %1540 = vmatpush1.bf16.msra.mxu0 %v838
      %1541 = vmatprep.subr.bf16.mxu0 %v835
      %1542 = vmatpush1.bf16.msra.mxu0 %v834
      %1543 = vmatprep.subr.bf16.mxu0 0
      %1544 = vmatpush2.bf16.msra.mxu0 0
      %1545 = vmatprep.subr.bf16.mxu0 0
      %1546 = vmatpush2.bf16.msra.mxu0 0
      %1547 = vmatprep.subr.bf16.mxu0 0
      %1548 = vmatpush2.bf16.msra.mxu0 0
      %1549 = vmatprep.subr.bf16.mxu0 0
      %1550 = vmatpush2.bf16.msra.mxu0 0
      %1551 = vmatprep.subr.bf16.mxu0 0
      %1552 = vmatpush2.bf16.msra.mxu0 0
      %1553 = vmatprep.subr.bf16.mxu0 0
      %1554 = vmatpush2.bf16.msra.mxu0 0
      %1555 = vmatprep.subr.bf16.mxu0 0
      %1556 = vmatpush2.bf16.msra.mxu0 0
      %1557 = vmatprep.subr.bf16.mxu0 0
      %1558 = vmatpush2.bf16.msra.mxu0 0
      %1559 = vmatprep.mubr.bf16.mxu0 0
      %1560 = vmatmul.mubr.bf16.gmra.mxu0 %v1466
      %v1561 = vpop.f32.mrf.mxu0
      %v1562 = vadd.f32 0.0, %v1561
      %v1563 = vpop.f32.mrf.mxu0
      %v1564 = vadd.f32 0.0, %v1563
      %v1565 = vpop.f32.mrf.mxu0
      %v1566 = vadd.f32 0.0, %v1565
      %v1567 = vpop.f32.mrf.mxu0
      %v1568 = vadd.f32 0.0, %v1567
      %1569 = vdwg.mxu0
      %v1570 = vadd.f32 %v1476, %v1519
      %v1571 = vadd.f32 %v1477, %v1521
      %v1572 = vadd.f32 %v1478, %v1562
      %v1573 = vadd.f32 %v1479, %v1564
      %v1574 = vadd.f32 %v1480, %v1523
      %v1575 = vadd.f32 %v1481, %v1525
      %v1576 = vadd.f32 %v1482, %v1566
      %v1577 = vadd.f32 %v1483, %v1568
      %v1578 = vxor.u32 %v1570, 2147483648
      %v1579 = vxor.u32 %v1574, 2147483648
      %v1580 = vmul.f32 %v1578, 1.442695
      %v1581 = vpow.pop %v1580
      %v1582 = vmul.f32 %v1579, 1.442695
      %v1583 = vpow.pop %v1582
      %v1584 = vadd.f32 %v1581, 1.0
      %v1585 = vadd.f32 %v1583, 1.0
      %v1586 = vrcp.pop %v1584
      %v1587 = vmul.f32 1.0, %v1586
      %v1588 = vrcp.pop %v1585
      %v1589 = vmul.f32 1.0, %v1588
      %v1590 = vxor.u32 %v1571, 2147483648
      %v1591 = vxor.u32 %v1575, 2147483648
      %v1592 = vmul.f32 %v1590, 1.442695
      %v1593 = vpow.pop %v1592
      %v1594 = vmul.f32 %v1591, 1.442695
      %v1595 = vpow.pop %v1594
      %v1596 = vadd.f32 %v1593, 1.0
      %v1597 = vadd.f32 %v1595, 1.0
      %v1598 = vrcp.pop %v1596
      %v1599 = vmul.f32 1.0, %v1598
      %v1600 = vrcp.pop %v1597
      %v1601 = vmul.f32 1.0, %v1600
      %v1602 = vtanh.pop %v1572
      %v1603 = vtanh.pop %v1576
      %v1604 = vxor.u32 %v1573, 2147483648
      %v1605 = vxor.u32 %v1577, 2147483648
      %v1606 = vmul.f32 %v1604, 1.442695
      %v1607 = vpow.pop %v1606
      %v1608 = vmul.f32 %v1605, 1.442695
      %v1609 = vpow.pop %v1608
      %v1610 = vadd.f32 %v1607, 1.0
      %v1611 = vadd.f32 %v1609, 1.0
      %v1612 = vrcp.pop %v1610
      %v1613 = vmul.f32 1.0, %v1612
      %v1614 = vrcp.pop %v1611
      %v1615 = vmul.f32 1.0, %v1614
      %v1616 = vmul.f32 %v1599, %v1464
      %v1617 = vmul.f32 %v1601, %v1465
      %v1618 = vmul.f32 %v1587, %v1602
      %v1619 = vmul.f32 %v1589, %v1603
      %v1620 = vadd.f32 %v1616, %v1618
      %v1621 = vadd.f32 %v1617, %v1619
      %v1622 = vtanh.pop %v1620
      %v1623 = vtanh.pop %v1621
      %v1624 = vmul.f32 %v1613, %v1622
      %v1625 = vmul.f32 %v1615, %v1623
      %v1626 = vld [vmem:[%s1 + $0x30] sm:$0xff]
      %v1627 = vld [vmem:[%s1 + $0x38] sm:$0xff]
      %1629 = vset.pattern.permute.xlu0 0
      %1630 = vperm.xlu0 %1629, %v1626
      %v1631 = vpop.permute.xlu0 %1630
      %1634 = vset.pattern.permute.xlu0 0
      %1635 = vperm.xlu0 %1634, %v1627
      %v1636 = vpop.permute.xlu0 %1635
      %v1638 = vmul.f32 %v1631, %v1624
      %v1639 = vmul.f32 %v1636, %v1625
      %v1640 = vsub.f32 1.0, %v1626
      %v1641 = vsub.f32 1.0, %v1627
      %1643 = vset.pattern.permute.xlu0 0
      %1644 = vperm.xlu0 %1643, %v1640
      %v1645 = vpop.permute.xlu0 %1644
      %1648 = vset.pattern.permute.xlu0 0
      %1649 = vperm.xlu0 %1648, %v1641
      %v1650 = vpop.permute.xlu0 %1649
      %v1652 = vmul.f32 %v1645, %v1458
      %v1653 = vmul.f32 %v1650, %v1459
      %v1654 = vadd.f32 %v1638, %v1652
      %v1655 = vadd.f32 %v1639, %v1653
      %v1656 = vmul.f32 %v1631, %v1620
      %v1657 = vmul.f32 %v1636, %v1621
      %v1658 = vmul.f32 %v1645, %v1464
      %v1659 = vmul.f32 %v1650, %v1465
      %v1660 = vadd.f32 %v1656, %v1658
      %v1661 = vadd.f32 %v1657, %v1659
      %v1662 = vpack.c.bf16 %v1655, %v1654
      %v1664 = vunpack.c.l.b16 %v1662
      %v1665 = vunpack.c.h.b16 %v1662
      %v1666 = vpack.c.b16 %v1664, %v1664
      %v1667 = vpack.c.b16 %v1665, %v1665
      %1670 = vst [vmem:[#allocation3 + $0x18] sm:$0xf] %v1666
      %1671 = vst [vmem:[#allocation3 + $0x1c] sm:$0xf] %v1667
      %v1672 = vld [vmem:[#allocation2 + $0x100] sm:$0xff]
      %v1673 = vld [vmem:[#allocation2 + $0x108] sm:$0xff]
      %v1674 = vld [vmem:[#allocation2 + $0x110] sm:$0xff]
      %v1675 = vld [vmem:[#allocation2 + $0x118] sm:$0xff]
      %v1676 = vld [vmem:[#allocation2 + $0x120] sm:$0xff]
      %v1677 = vld [vmem:[#allocation2 + $0x128] sm:$0xff]
      %v1678 = vld [vmem:[#allocation2 + $0x130] sm:$0xff]
      %v1679 = vld [vmem:[#allocation2 + $0x138] sm:$0xff]
      %1680 = vmatprep.subr.bf16.mxu0 %v861
      %1681 = vmatpush1.bf16.msra.mxu0 %v860
      %1682 = vmatprep.subr.bf16.mxu0 %v857
      %1683 = vmatpush1.bf16.msra.mxu0 %v856
      %1684 = vmatprep.subr.bf16.mxu0 %v853
      %1685 = vmatpush1.bf16.msra.mxu0 %v852
      %1686 = vmatprep.subr.bf16.mxu0 %v849
      %1687 = vmatpush1.bf16.msra.mxu0 %v848
      %1688 = vmatprep.subr.bf16.mxu0 %v845
      %1689 = vmatpush1.bf16.msra.mxu0 %v844
      %1690 = vmatprep.subr.bf16.mxu0 %v841
      %1691 = vmatpush1.bf16.msra.mxu0 %v840
      %1692 = vmatprep.subr.bf16.mxu0 %v837
      %1693 = vmatpush1.bf16.msra.mxu0 %v836
      %1694 = vmatprep.subr.bf16.mxu0 %v833
      %1695 = vmatpush1.bf16.msra.mxu0 %v832
      %1696 = vmatprep.subr.bf16.mxu0 0
      %1697 = vmatpush2.bf16.msra.mxu0 0
      %1698 = vmatprep.subr.bf16.mxu0 0
      %1699 = vmatpush2.bf16.msra.mxu0 0
      %1700 = vmatprep.subr.bf16.mxu0 0
      %1701 = vmatpush2.bf16.msra.mxu0 0
      %1702 = vmatprep.subr.bf16.mxu0 0
      %1703 = vmatpush2.bf16.msra.mxu0 0
      %1704 = vmatprep.subr.bf16.mxu0 0
      %1705 = vmatpush2.bf16.msra.mxu0 0
      %1706 = vmatprep.subr.bf16.mxu0 0
      %1707 = vmatpush2.bf16.msra.mxu0 0
      %1708 = vmatprep.subr.bf16.mxu0 0
      %1709 = vmatpush2.bf16.msra.mxu0 0
      %1710 = vmatprep.subr.bf16.mxu0 0
      %1711 = vmatpush2.bf16.msra.mxu0 0
      %1712 = vmatprep.mubr.bf16.mxu0 0
      %1713 = vmatmul.mubr.bf16.gmra.mxu0 %v1662
      %v1714 = vpop.f32.mrf.mxu0
      %v1715 = vadd.f32 0.0, %v1714
      %v1716 = vpop.f32.mrf.mxu0
      %v1717 = vadd.f32 0.0, %v1716
      %v1718 = vpop.f32.mrf.mxu0
      %v1719 = vadd.f32 0.0, %v1718
      %v1720 = vpop.f32.mrf.mxu0
      %v1721 = vadd.f32 0.0, %v1720
      %1722 = vdwg.mxu0
      %1723 = vmatprep.subr.bf16.mxu0 %v863
      %1724 = vmatpush1.bf16.msra.mxu0 %v862
      %1725 = vmatprep.subr.bf16.mxu0 %v859
      %1726 = vmatpush1.bf16.msra.mxu0 %v858
      %1727 = vmatprep.subr.bf16.mxu0 %v855
      %1728 = vmatpush1.bf16.msra.mxu0 %v854
      %1729 = vmatprep.subr.bf16.mxu0 %v851
      %1730 = vmatpush1.bf16.msra.mxu0 %v850
      %1731 = vmatprep.subr.bf16.mxu0 %v847
      %1732 = vmatpush1.bf16.msra.mxu0 %v846
      %1733 = vmatprep.subr.bf16.mxu0 %v843
      %1734 = vmatpush1.bf16.msra.mxu0 %v842
      %1735 = vmatprep.subr.bf16.mxu0 %v839
      %1736 = vmatpush1.bf16.msra.mxu0 %v838
      %1737 = vmatprep.subr.bf16.mxu0 %v835
      %1738 = vmatpush1.bf16.msra.mxu0 %v834
      %1739 = vmatprep.subr.bf16.mxu0 0
      %1740 = vmatpush2.bf16.msra.mxu0 0
      %1741 = vmatprep.subr.bf16.mxu0 0
      %1742 = vmatpush2.bf16.msra.mxu0 0
      %1743 = vmatprep.subr.bf16.mxu0 0
      %1744 = vmatpush2.bf16.msra.mxu0 0
      %1745 = vmatprep.subr.bf16.mxu0 0
      %1746 = vmatpush2.bf16.msra.mxu0 0
      %1747 = vmatprep.subr.bf16.mxu0 0
      %1748 = vmatpush2.bf16.msra.mxu0 0
      %1749 = vmatprep.subr.bf16.mxu0 0
      %1750 = vmatpush2.bf16.msra.mxu0 0
      %1751 = vmatprep.subr.bf16.mxu0 0
      %1752 = vmatpush2.bf16.msra.mxu0 0
      %1753 = vmatprep.subr.bf16.mxu0 0
      %1754 = vmatpush2.bf16.msra.mxu0 0
      %1755 = vmatprep.mubr.bf16.mxu0 0
      %1756 = vmatmul.mubr.bf16.gmra.mxu0 %v1662
      %v1757 = vpop.f32.mrf.mxu0
      %v1758 = vadd.f32 0.0, %v1757
      %v1759 = vpop.f32.mrf.mxu0
      %v1760 = vadd.f32 0.0, %v1759
      %v1761 = vpop.f32.mrf.mxu0
      %v1762 = vadd.f32 0.0, %v1761
      %v1763 = vpop.f32.mrf.mxu0
      %v1764 = vadd.f32 0.0, %v1763
      %1765 = vdwg.mxu0
      %v1766 = vadd.f32 %v1672, %v1715
      %v1767 = vadd.f32 %v1673, %v1717
      %v1768 = vadd.f32 %v1674, %v1758
      %v1769 = vadd.f32 %v1675, %v1760
      %v1770 = vadd.f32 %v1676, %v1719
      %v1771 = vadd.f32 %v1677, %v1721
      %v1772 = vadd.f32 %v1678, %v1762
      %v1773 = vadd.f32 %v1679, %v1764
      %v1774 = vxor.u32 %v1766, 2147483648
      %v1775 = vxor.u32 %v1770, 2147483648
      %v1776 = vmul.f32 %v1774, 1.442695
      %v1777 = vpow.pop %v1776
      %v1778 = vmul.f32 %v1775, 1.442695
      %v1779 = vpow.pop %v1778
      %v1780 = vadd.f32 %v1777, 1.0
      %v1781 = vadd.f32 %v1779, 1.0
      %v1782 = vrcp.pop %v1780
      %v1783 = vmul.f32 1.0, %v1782
      %v1784 = vrcp.pop %v1781
      %v1785 = vmul.f32 1.0, %v1784
      %v1786 = vxor.u32 %v1767, 2147483648
      %v1787 = vxor.u32 %v1771, 2147483648
      %v1788 = vmul.f32 %v1786, 1.442695
      %v1789 = vpow.pop %v1788
      %v1790 = vmul.f32 %v1787, 1.442695
      %v1791 = vpow.pop %v1790
      %v1792 = vadd.f32 %v1789, 1.0
      %v1793 = vadd.f32 %v1791, 1.0
      %v1794 = vrcp.pop %v1792
      %v1795 = vmul.f32 1.0, %v1794
      %v1796 = vrcp.pop %v1793
      %v1797 = vmul.f32 1.0, %v1796
      %v1798 = vtanh.pop %v1768
      %v1799 = vtanh.pop %v1772
      %v1800 = vxor.u32 %v1769, 2147483648
      %v1801 = vxor.u32 %v1773, 2147483648
      %v1802 = vmul.f32 %v1800, 1.442695
      %v1803 = vpow.pop %v1802
      %v1804 = vmul.f32 %v1801, 1.442695
      %v1805 = vpow.pop %v1804
      %v1806 = vadd.f32 %v1803, 1.0
      %v1807 = vadd.f32 %v1805, 1.0
      %v1808 = vrcp.pop %v1806
      %v1809 = vmul.f32 1.0, %v1808
      %v1810 = vrcp.pop %v1807
      %v1811 = vmul.f32 1.0, %v1810
      %v1812 = vmul.f32 %v1795, %v1660
      %v1813 = vmul.f32 %v1797, %v1661
      %v1814 = vmul.f32 %v1783, %v1798
      %v1815 = vmul.f32 %v1785, %v1799
      %v1816 = vadd.f32 %v1812, %v1814
      %v1817 = vadd.f32 %v1813, %v1815
      %v1818 = vtanh.pop %v1816
      %v1819 = vtanh.pop %v1817
      %v1820 = vmul.f32 %v1809, %v1818
      %v1821 = vmul.f32 %v1811, %v1819
      %v1822 = vld [vmem:[%s1 + $0x40] sm:$0xff]
      %v1823 = vld [vmem:[%s1 + $0x48] sm:$0xff]
      %1825 = vset.pattern.permute.xlu0 0
      %1826 = vperm.xlu0 %1825, %v1822
      %v1827 = vpop.permute.xlu0 %1826
      %1830 = vset.pattern.permute.xlu0 0
      %1831 = vperm.xlu0 %1830, %v1823
      %v1832 = vpop.permute.xlu0 %1831
      %v1834 = vmul.f32 %v1827, %v1820
      %v1835 = vmul.f32 %v1832, %v1821
      %v1836 = vsub.f32 1.0, %v1822
      %v1837 = vsub.f32 1.0, %v1823
      %1839 = vset.pattern.permute.xlu0 0
      %1840 = vperm.xlu0 %1839, %v1836
      %v1841 = vpop.permute.xlu0 %1840
      %1844 = vset.pattern.permute.xlu0 0
      %1845 = vperm.xlu0 %1844, %v1837
      %v1846 = vpop.permute.xlu0 %1845
      %v1848 = vmul.f32 %v1841, %v1654
      %v1849 = vmul.f32 %v1846, %v1655
      %v1850 = vadd.f32 %v1834, %v1848
      %v1851 = vadd.f32 %v1835, %v1849
      %v1852 = vmul.f32 %v1827, %v1816
      %v1853 = vmul.f32 %v1832, %v1817
      %v1854 = vmul.f32 %v1841, %v1660
      %v1855 = vmul.f32 %v1846, %v1661
      %v1856 = vadd.f32 %v1852, %v1854
      %v1857 = vadd.f32 %v1853, %v1855
      %v1858 = vpack.c.bf16 %v1851, %v1850
      %v1860 = vunpack.c.l.b16 %v1858
      %v1861 = vunpack.c.h.b16 %v1858
      %v1862 = vpack.c.b16 %v1860, %v1860
      %v1863 = vpack.c.b16 %v1861, %v1861
      %1866 = vst [vmem:[#allocation3 + $0x20] sm:$0xf] %v1862
      %1867 = vst [vmem:[#allocation3 + $0x24] sm:$0xf] %v1863
      %v1868 = vld [vmem:[#allocation2 + $0x140] sm:$0xff]
      %v1869 = vld [vmem:[#allocation2 + $0x148] sm:$0xff]
      %v1870 = vld [vmem:[#allocation2 + $0x150] sm:$0xff]
      %v1871 = vld [vmem:[#allocation2 + $0x158] sm:$0xff]
      %v1872 = vld [vmem:[#allocation2 + $0x160] sm:$0xff]
      %v1873 = vld [vmem:[#allocation2 + $0x168] sm:$0xff]
      %v1874 = vld [vmem:[#allocation2 + $0x170] sm:$0xff]
      %v1875 = vld [vmem:[#allocation2 + $0x178] sm:$0xff]
      %1876 = vmatprep.subr.bf16.mxu0 %v861
      %1877 = vmatpush1.bf16.msra.mxu0 %v860
      %1878 = vmatprep.subr.bf16.mxu0 %v857
      %1879 = vmatpush1.bf16.msra.mxu0 %v856
      %1880 = vmatprep.subr.bf16.mxu0 %v853
      %1881 = vmatpush1.bf16.msra.mxu0 %v852
      %1882 = vmatprep.subr.bf16.mxu0 %v849
      %1883 = vmatpush1.bf16.msra.mxu0 %v848
      %1884 = vmatprep.subr.bf16.mxu0 %v845
      %1885 = vmatpush1.bf16.msra.mxu0 %v844
      %1886 = vmatprep.subr.bf16.mxu0 %v841
      %1887 = vmatpush1.bf16.msra.mxu0 %v840
      %1888 = vmatprep.subr.bf16.mxu0 %v837
      %1889 = vmatpush1.bf16.msra.mxu0 %v836
      %1890 = vmatprep.subr.bf16.mxu0 %v833
      %1891 = vmatpush1.bf16.msra.mxu0 %v832
      %1892 = vmatprep.subr.bf16.mxu0 0
      %1893 = vmatpush2.bf16.msra.mxu0 0
      %1894 = vmatprep.subr.bf16.mxu0 0
      %1895 = vmatpush2.bf16.msra.mxu0 0
      %1896 = vmatprep.subr.bf16.mxu0 0
      %1897 = vmatpush2.bf16.msra.mxu0 0
      %1898 = vmatprep.subr.bf16.mxu0 0
      %1899 = vmatpush2.bf16.msra.mxu0 0
      %1900 = vmatprep.subr.bf16.mxu0 0
      %1901 = vmatpush2.bf16.msra.mxu0 0
      %1902 = vmatprep.subr.bf16.mxu0 0
      %1903 = vmatpush2.bf16.msra.mxu0 0
      %1904 = vmatprep.subr.bf16.mxu0 0
      %1905 = vmatpush2.bf16.msra.mxu0 0
      %1906 = vmatprep.subr.bf16.mxu0 0
      %1907 = vmatpush2.bf16.msra.mxu0 0
      %1908 = vmatprep.mubr.bf16.mxu0 0
      %1909 = vmatmul.mubr.bf16.gmra.mxu0 %v1858
      %v1910 = vpop.f32.mrf.mxu0
      %v1911 = vadd.f32 0.0, %v1910
      %v1912 = vpop.f32.mrf.mxu0
      %v1913 = vadd.f32 0.0, %v1912
      %v1914 = vpop.f32.mrf.mxu0
      %v1915 = vadd.f32 0.0, %v1914
      %v1916 = vpop.f32.mrf.mxu0
      %v1917 = vadd.f32 0.0, %v1916
      %1918 = vdwg.mxu0
      %1919 = vmatprep.subr.bf16.mxu0 %v863
      %1920 = vmatpush1.bf16.msra.mxu0 %v862
      %1921 = vmatprep.subr.bf16.mxu0 %v859
      %1922 = vmatpush1.bf16.msra.mxu0 %v858
      %1923 = vmatprep.subr.bf16.mxu0 %v855
      %1924 = vmatpush1.bf16.msra.mxu0 %v854
      %1925 = vmatprep.subr.bf16.mxu0 %v851
      %1926 = vmatpush1.bf16.msra.mxu0 %v850
      %1927 = vmatprep.subr.bf16.mxu0 %v847
      %1928 = vmatpush1.bf16.msra.mxu0 %v846
      %1929 = vmatprep.subr.bf16.mxu0 %v843
      %1930 = vmatpush1.bf16.msra.mxu0 %v842
      %1931 = vmatprep.subr.bf16.mxu0 %v839
      %1932 = vmatpush1.bf16.msra.mxu0 %v838
      %1933 = vmatprep.subr.bf16.mxu0 %v835
      %1934 = vmatpush1.bf16.msra.mxu0 %v834
      %1935 = vmatprep.subr.bf16.mxu0 0
      %1936 = vmatpush2.bf16.msra.mxu0 0
      %1937 = vmatprep.subr.bf16.mxu0 0
      %1938 = vmatpush2.bf16.msra.mxu0 0
      %1939 = vmatprep.subr.bf16.mxu0 0
      %1940 = vmatpush2.bf16.msra.mxu0 0
      %1941 = vmatprep.subr.bf16.mxu0 0
      %1942 = vmatpush2.bf16.msra.mxu0 0
      %1943 = vmatprep.subr.bf16.mxu0 0
      %1944 = vmatpush2.bf16.msra.mxu0 0
      %1945 = vmatprep.subr.bf16.mxu0 0
      %1946 = vmatpush2.bf16.msra.mxu0 0
      %1947 = vmatprep.subr.bf16.mxu0 0
      %1948 = vmatpush2.bf16.msra.mxu0 0
      %1949 = vmatprep.subr.bf16.mxu0 0
      %1950 = vmatpush2.bf16.msra.mxu0 0
      %1951 = vmatprep.mubr.bf16.mxu0 0
      %1952 = vmatmul.mubr.bf16.gmra.mxu0 %v1858
      %v1953 = vpop.f32.mrf.mxu0
      %v1954 = vadd.f32 0.0, %v1953
      %v1955 = vpop.f32.mrf.mxu0
      %v1956 = vadd.f32 0.0, %v1955
      %v1957 = vpop.f32.mrf.mxu0
      %v1958 = vadd.f32 0.0, %v1957
      %v1959 = vpop.f32.mrf.mxu0
      %v1960 = vadd.f32 0.0, %v1959
      %1961 = vdwg.mxu0
      %v1962 = vadd.f32 %v1868, %v1911
      %v1963 = vadd.f32 %v1869, %v1913
      %v1964 = vadd.f32 %v1870, %v1954
      %v1965 = vadd.f32 %v1871, %v1956
      %v1966 = vadd.f32 %v1872, %v1915
      %v1967 = vadd.f32 %v1873, %v1917
      %v1968 = vadd.f32 %v1874, %v1958
      %v1969 = vadd.f32 %v1875, %v1960
      %v1970 = vxor.u32 %v1962, 2147483648
      %v1971 = vxor.u32 %v1966, 2147483648
      %v1972 = vmul.f32 %v1970, 1.442695
      %v1973 = vpow.pop %v1972
      %v1974 = vmul.f32 %v1971, 1.442695
      %v1975 = vpow.pop %v1974
      %v1976 = vadd.f32 %v1973, 1.0
      %v1977 = vadd.f32 %v1975, 1.0
      %v1978 = vrcp.pop %v1976
      %v1979 = vmul.f32 1.0, %v1978
      %v1980 = vrcp.pop %v1977
      %v1981 = vmul.f32 1.0, %v1980
      %v1982 = vxor.u32 %v1963, 2147483648
      %v1983 = vxor.u32 %v1967, 2147483648
      %v1984 = vmul.f32 %v1982, 1.442695
      %v1985 = vpow.pop %v1984
      %v1986 = vmul.f32 %v1983, 1.442695
      %v1987 = vpow.pop %v1986
      %v1988 = vadd.f32 %v1985, 1.0
      %v1989 = vadd.f32 %v1987, 1.0
      %v1990 = vrcp.pop %v1988
      %v1991 = vmul.f32 1.0, %v1990
      %v1992 = vrcp.pop %v1989
      %v1993 = vmul.f32 1.0, %v1992
      %v1994 = vtanh.pop %v1964
      %v1995 = vtanh.pop %v1968
      %v1996 = vxor.u32 %v1965, 2147483648
      %v1997 = vxor.u32 %v1969, 2147483648
      %v1998 = vmul.f32 %v1996, 1.442695
      %v1999 = vpow.pop %v1998
      %v2000 = vmul.f32 %v1997, 1.442695
      %v2001 = vpow.pop %v2000
      %v2002 = vadd.f32 %v1999, 1.0
      %v2003 = vadd.f32 %v2001, 1.0
      %v2004 = vrcp.pop %v2002
      %v2005 = vmul.f32 1.0, %v2004
      %v2006 = vrcp.pop %v2003
      %v2007 = vmul.f32 1.0, %v2006
      %v2008 = vmul.f32 %v1991, %v1856
      %v2009 = vmul.f32 %v1993, %v1857
      %v2010 = vmul.f32 %v1979, %v1994
      %v2011 = vmul.f32 %v1981, %v1995
      %v2012 = vadd.f32 %v2008, %v2010
      %v2013 = vadd.f32 %v2009, %v2011
      %v2014 = vtanh.pop %v2012
      %v2015 = vtanh.pop %v2013
      %v2016 = vmul.f32 %v2005, %v2014
      %v2017 = vmul.f32 %v2007, %v2015
      %v2018 = vld [vmem:[%s1 + $0x50] sm:$0xff]
      %v2019 = vld [vmem:[%s1 + $0x58] sm:$0xff]
      %2021 = vset.pattern.permute.xlu0 0
      %2022 = vperm.xlu0 %2021, %v2018
      %v2023 = vpop.permute.xlu0 %2022
      %2026 = vset.pattern.permute.xlu0 0
      %2027 = vperm.xlu0 %2026, %v2019
      %v2028 = vpop.permute.xlu0 %2027
      %v2030 = vmul.f32 %v2023, %v2016
      %v2031 = vmul.f32 %v2028, %v2017
      %v2032 = vsub.f32 1.0, %v2018
      %v2033 = vsub.f32 1.0, %v2019
      %2035 = vset.pattern.permute.xlu0 0
      %2036 = vperm.xlu0 %2035, %v2032
      %v2037 = vpop.permute.xlu0 %2036
      %2040 = vset.pattern.permute.xlu0 0
      %2041 = vperm.xlu0 %2040, %v2033
      %v2042 = vpop.permute.xlu0 %2041
      %v2044 = vmul.f32 %v2037, %v1850
      %v2045 = vmul.f32 %v2042, %v1851
      %v2046 = vadd.f32 %v2030, %v2044
      %v2047 = vadd.f32 %v2031, %v2045
      %v2048 = vmul.f32 %v2023, %v2012
      %v2049 = vmul.f32 %v2028, %v2013
      %v2050 = vmul.f32 %v2037, %v1856
      %v2051 = vmul.f32 %v2042, %v1857
      %v2052 = vadd.f32 %v2048, %v2050
      %v2053 = vadd.f32 %v2049, %v2051
      %v2054 = vpack.c.bf16 %v2047, %v2046
      %v2056 = vunpack.c.l.b16 %v2054
      %v2057 = vunpack.c.h.b16 %v2054
      %v2058 = vpack.c.b16 %v2056, %v2056
      %v2059 = vpack.c.b16 %v2057, %v2057
      %2062 = vst [vmem:[#allocation3 + $0x28] sm:$0xf] %v2058
      %2063 = vst [vmem:[#allocation3 + $0x2c] sm:$0xf] %v2059
      %v2064 = vld [vmem:[#allocation2 + $0x180] sm:$0xff]
      %v2065 = vld [vmem:[#allocation2 + $0x188] sm:$0xff]
      %v2066 = vld [vmem:[#allocation2 + $0x190] sm:$0xff]
      %v2067 = vld [vmem:[#allocation2 + $0x198] sm:$0xff]
      %v2068 = vld [vmem:[#allocation2 + $0x1a0] sm:$0xff]
      %v2069 = vld [vmem:[#allocation2 + $0x1a8] sm:$0xff]
      %v2070 = vld [vmem:[#allocation2 + $0x1b0] sm:$0xff]
      %v2071 = vld [vmem:[#allocation2 + $0x1b8] sm:$0xff]
      %2072 = vmatprep.subr.bf16.mxu0 %v861
      %2073 = vmatpush1.bf16.msra.mxu0 %v860
      %2074 = vmatprep.subr.bf16.mxu0 %v857
      %2075 = vmatpush1.bf16.msra.mxu0 %v856
      %2076 = vmatprep.subr.bf16.mxu0 %v853
      %2077 = vmatpush1.bf16.msra.mxu0 %v852
      %2078 = vmatprep.subr.bf16.mxu0 %v849
      %2079 = vmatpush1.bf16.msra.mxu0 %v848
      %2080 = vmatprep.subr.bf16.mxu0 %v845
      %2081 = vmatpush1.bf16.msra.mxu0 %v844
      %2082 = vmatprep.subr.bf16.mxu0 %v841
      %2083 = vmatpush1.bf16.msra.mxu0 %v840
      %2084 = vmatprep.subr.bf16.mxu0 %v837
      %2085 = vmatpush1.bf16.msra.mxu0 %v836
      %2086 = vmatprep.subr.bf16.mxu0 %v833
      %2087 = vmatpush1.bf16.msra.mxu0 %v832
      %2088 = vmatprep.subr.bf16.mxu0 0
      %2089 = vmatpush2.bf16.msra.mxu0 0
      %2090 = vmatprep.subr.bf16.mxu0 0
      %2091 = vmatpush2.bf16.msra.mxu0 0
      %2092 = vmatprep.subr.bf16.mxu0 0
      %2093 = vmatpush2.bf16.msra.mxu0 0
      %2094 = vmatprep.subr.bf16.mxu0 0
      %2095 = vmatpush2.bf16.msra.mxu0 0
      %2096 = vmatprep.subr.bf16.mxu0 0
      %2097 = vmatpush2.bf16.msra.mxu0 0
      %2098 = vmatprep.subr.bf16.mxu0 0
      %2099 = vmatpush2.bf16.msra.mxu0 0
      %2100 = vmatprep.subr.bf16.mxu0 0
      %2101 = vmatpush2.bf16.msra.mxu0 0
      %2102 = vmatprep.subr.bf16.mxu0 0
      %2103 = vmatpush2.bf16.msra.mxu0 0
      %2104 = vmatprep.mubr.bf16.mxu0 0
      %2105 = vmatmul.mubr.bf16.gmra.mxu0 %v2054
      %v2106 = vpop.f32.mrf.mxu0
      %v2107 = vadd.f32 0.0, %v2106
      %v2108 = vpop.f32.mrf.mxu0
      %v2109 = vadd.f32 0.0, %v2108
      %v2110 = vpop.f32.mrf.mxu0
      %v2111 = vadd.f32 0.0, %v2110
      %v2112 = vpop.f32.mrf.mxu0
      %v2113 = vadd.f32 0.0, %v2112
      %2114 = vdwg.mxu0
      %2115 = vmatprep.subr.bf16.mxu0 %v863
      %2116 = vmatpush1.bf16.msra.mxu0 %v862
      %2117 = vmatprep.subr.bf16.mxu0 %v859
      %2118 = vmatpush1.bf16.msra.mxu0 %v858
      %2119 = vmatprep.subr.bf16.mxu0 %v855
      %2120 = vmatpush1.bf16.msra.mxu0 %v854
      %2121 = vmatprep.subr.bf16.mxu0 %v851
      %2122 = vmatpush1.bf16.msra.mxu0 %v850
      %2123 = vmatprep.subr.bf16.mxu0 %v847
      %2124 = vmatpush1.bf16.msra.mxu0 %v846
      %2125 = vmatprep.subr.bf16.mxu0 %v843
      %2126 = vmatpush1.bf16.msra.mxu0 %v842
      %2127 = vmatprep.subr.bf16.mxu0 %v839
      %2128 = vmatpush1.bf16.msra.mxu0 %v838
      %2129 = vmatprep.subr.bf16.mxu0 %v835
      %2130 = vmatpush1.bf16.msra.mxu0 %v834
      %2131 = vmatprep.subr.bf16.mxu0 0
      %2132 = vmatpush2.bf16.msra.mxu0 0
      %2133 = vmatprep.subr.bf16.mxu0 0
      %2134 = vmatpush2.bf16.msra.mxu0 0
      %2135 = vmatprep.subr.bf16.mxu0 0
      %2136 = vmatpush2.bf16.msra.mxu0 0
      %2137 = vmatprep.subr.bf16.mxu0 0
      %2138 = vmatpush2.bf16.msra.mxu0 0
      %2139 = vmatprep.subr.bf16.mxu0 0
      %2140 = vmatpush2.bf16.msra.mxu0 0
      %2141 = vmatprep.subr.bf16.mxu0 0
      %2142 = vmatpush2.bf16.msra.mxu0 0
      %2143 = vmatprep.subr.bf16.mxu0 0
      %2144 = vmatpush2.bf16.msra.mxu0 0
      %2145 = vmatprep.subr.bf16.mxu0 0
      %2146 = vmatpush2.bf16.msra.mxu0 0
      %2147 = vmatprep.mubr.bf16.mxu0 0
      %2148 = vmatmul.mubr.bf16.gmra.mxu0 %v2054
      %v2149 = vpop.f32.mrf.mxu0
      %v2150 = vadd.f32 0.0, %v2149
      %v2151 = vpop.f32.mrf.mxu0
      %v2152 = vadd.f32 0.0, %v2151
      %v2153 = vpop.f32.mrf.mxu0
      %v2154 = vadd.f32 0.0, %v2153
      %v2155 = vpop.f32.mrf.mxu0
      %v2156 = vadd.f32 0.0, %v2155
      %2157 = vdwg.mxu0
      %v2158 = vadd.f32 %v2064, %v2107
      %v2159 = vadd.f32 %v2065, %v2109
      %v2160 = vadd.f32 %v2066, %v2150
      %v2161 = vadd.f32 %v2067, %v2152
      %v2162 = vadd.f32 %v2068, %v2111
      %v2163 = vadd.f32 %v2069, %v2113
      %v2164 = vadd.f32 %v2070, %v2154
      %v2165 = vadd.f32 %v2071, %v2156
      %v2166 = vxor.u32 %v2158, 2147483648
      %v2167 = vxor.u32 %v2162, 2147483648
      %v2168 = vmul.f32 %v2166, 1.442695
      %v2169 = vpow.pop %v2168
      %v2170 = vmul.f32 %v2167, 1.442695
      %v2171 = vpow.pop %v2170
      %v2172 = vadd.f32 %v2169, 1.0
      %v2173 = vadd.f32 %v2171, 1.0
      %v2174 = vrcp.pop %v2172
      %v2175 = vmul.f32 1.0, %v2174
      %v2176 = vrcp.pop %v2173
      %v2177 = vmul.f32 1.0, %v2176
      %v2178 = vxor.u32 %v2159, 2147483648
      %v2179 = vxor.u32 %v2163, 2147483648
      %v2180 = vmul.f32 %v2178, 1.442695
      %v2181 = vpow.pop %v2180
      %v2182 = vmul.f32 %v2179, 1.442695
      %v2183 = vpow.pop %v2182
      %v2184 = vadd.f32 %v2181, 1.0
      %v2185 = vadd.f32 %v2183, 1.0
      %v2186 = vrcp.pop %v2184
      %v2187 = vmul.f32 1.0, %v2186
      %v2188 = vrcp.pop %v2185
      %v2189 = vmul.f32 1.0, %v2188
      %v2190 = vtanh.pop %v2160
      %v2191 = vtanh.pop %v2164
      %v2192 = vxor.u32 %v2161, 2147483648
      %v2193 = vxor.u32 %v2165, 2147483648
      %v2194 = vmul.f32 %v2192, 1.442695
      %v2195 = vpow.pop %v2194
      %v2196 = vmul.f32 %v2193, 1.442695
      %v2197 = vpow.pop %v2196
      %v2198 = vadd.f32 %v2195, 1.0
      %v2199 = vadd.f32 %v2197, 1.0
      %v2200 = vrcp.pop %v2198
      %v2201 = vmul.f32 1.0, %v2200
      %v2202 = vrcp.pop %v2199
      %v2203 = vmul.f32 1.0, %v2202
      %v2204 = vmul.f32 %v2187, %v2052
      %v2205 = vmul.f32 %v2189, %v2053
      %v2206 = vmul.f32 %v2175, %v2190
      %v2207 = vmul.f32 %v2177, %v2191
      %v2208 = vadd.f32 %v2204, %v2206
      %v2209 = vadd.f32 %v2205, %v2207
      %v2210 = vtanh.pop %v2208
      %v2211 = vtanh.pop %v2209
      %v2212 = vmul.f32 %v2201, %v2210
      %v2213 = vmul.f32 %v2203, %v2211
      %v2214 = vld [vmem:[%s1 + $0x60] sm:$0xff]
      %v2215 = vld [vmem:[%s1 + $0x68] sm:$0xff]
      %2217 = vset.pattern.permute.xlu0 0
      %2218 = vperm.xlu0 %2217, %v2214
      %v2219 = vpop.permute.xlu0 %2218
      %2222 = vset.pattern.permute.xlu0 0
      %2223 = vperm.xlu0 %2222, %v2215
      %v2224 = vpop.permute.xlu0 %2223
      %v2226 = vmul.f32 %v2219, %v2212
      %v2227 = vmul.f32 %v2224, %v2213
      %v2228 = vsub.f32 1.0, %v2214
      %v2229 = vsub.f32 1.0, %v2215
      %2231 = vset.pattern.permute.xlu0 0
      %2232 = vperm.xlu0 %2231, %v2228
      %v2233 = vpop.permute.xlu0 %2232
      %2236 = vset.pattern.permute.xlu0 0
      %2237 = vperm.xlu0 %2236, %v2229
      %v2238 = vpop.permute.xlu0 %2237
      %v2240 = vmul.f32 %v2233, %v2046
      %v2241 = vmul.f32 %v2238, %v2047
      %v2242 = vadd.f32 %v2226, %v2240
      %v2243 = vadd.f32 %v2227, %v2241
      %v2244 = vmul.f32 %v2219, %v2208
      %v2245 = vmul.f32 %v2224, %v2209
      %v2246 = vmul.f32 %v2233, %v2052
      %v2247 = vmul.f32 %v2238, %v2053
      %v2248 = vadd.f32 %v2244, %v2246
      %v2249 = vadd.f32 %v2245, %v2247
      %v2250 = vpack.c.bf16 %v2243, %v2242
      %v2252 = vunpack.c.l.b16 %v2250
      %v2253 = vunpack.c.h.b16 %v2250
      %v2254 = vpack.c.b16 %v2252, %v2252
      %v2255 = vpack.c.b16 %v2253, %v2253
      %2258 = vst [vmem:[#allocation3 + $0x30] sm:$0xf] %v2254
      %2259 = vst [vmem:[#allocation3 + $0x34] sm:$0xf] %v2255
      %v2260 = vld [vmem:[#allocation2 + $0x1c0] sm:$0xff]
      %v2261 = vld [vmem:[#allocation2 + $0x1c8] sm:$0xff]
      %v2262 = vld [vmem:[#allocation2 + $0x1d0] sm:$0xff]
      %v2263 = vld [vmem:[#allocation2 + $0x1d8] sm:$0xff]
      %v2264 = vld [vmem:[#allocation2 + $0x1e0] sm:$0xff]
      %v2265 = vld [vmem:[#allocation2 + $0x1e8] sm:$0xff]
      %v2266 = vld [vmem:[#allocation2 + $0x1f0] sm:$0xff]
      %v2267 = vld [vmem:[#allocation2 + $0x1f8] sm:$0xff]
      %2268 = vmatprep.subr.bf16.mxu0 %v861
      %2269 = vmatpush1.bf16.msra.mxu0 %v860
      %2270 = vmatprep.subr.bf16.mxu0 %v857
      %2271 = vmatpush1.bf16.msra.mxu0 %v856
      %2272 = vmatprep.subr.bf16.mxu0 %v853
      %2273 = vmatpush1.bf16.msra.mxu0 %v852
      %2274 = vmatprep.subr.bf16.mxu0 %v849
      %2275 = vmatpush1.bf16.msra.mxu0 %v848
      %2276 = vmatprep.subr.bf16.mxu0 %v845
      %2277 = vmatpush1.bf16.msra.mxu0 %v844
      %2278 = vmatprep.subr.bf16.mxu0 %v841
      %2279 = vmatpush1.bf16.msra.mxu0 %v840
      %2280 = vmatprep.subr.bf16.mxu0 %v837
      %2281 = vmatpush1.bf16.msra.mxu0 %v836
      %2282 = vmatprep.subr.bf16.mxu0 %v833
      %2283 = vmatpush1.bf16.msra.mxu0 %v832
      %2284 = vmatprep.subr.bf16.mxu0 0
      %2285 = vmatpush2.bf16.msra.mxu0 0
      %2286 = vmatprep.subr.bf16.mxu0 0
      %2287 = vmatpush2.bf16.msra.mxu0 0
      %2288 = vmatprep.subr.bf16.mxu0 0
      %2289 = vmatpush2.bf16.msra.mxu0 0
      %2290 = vmatprep.subr.bf16.mxu0 0
      %2291 = vmatpush2.bf16.msra.mxu0 0
      %2292 = vmatprep.subr.bf16.mxu0 0
      %2293 = vmatpush2.bf16.msra.mxu0 0
      %2294 = vmatprep.subr.bf16.mxu0 0
      %2295 = vmatpush2.bf16.msra.mxu0 0
      %2296 = vmatprep.subr.bf16.mxu0 0
      %2297 = vmatpush2.bf16.msra.mxu0 0
      %2298 = vmatprep.subr.bf16.mxu0 0
      %2299 = vmatpush2.bf16.msra.mxu0 0
      %2300 = vmatprep.mubr.bf16.mxu0 0
      %2301 = vmatmul.mubr.bf16.gmra.mxu0 %v2250
      %v2302 = vpop.f32.mrf.mxu0
      %v2303 = vadd.f32 0.0, %v2302
      %v2304 = vpop.f32.mrf.mxu0
      %v2305 = vadd.f32 0.0, %v2304
      %v2306 = vpop.f32.mrf.mxu0
      %v2307 = vadd.f32 0.0, %v2306
      %v2308 = vpop.f32.mrf.mxu0
      %v2309 = vadd.f32 0.0, %v2308
      %2310 = vdwg.mxu0
      %2311 = vmatprep.subr.bf16.mxu0 %v863
      %2312 = vmatpush1.bf16.msra.mxu0 %v862
      %2313 = vmatprep.subr.bf16.mxu0 %v859
      %2314 = vmatpush1.bf16.msra.mxu0 %v858
      %2315 = vmatprep.subr.bf16.mxu0 %v855
      %2316 = vmatpush1.bf16.msra.mxu0 %v854
      %2317 = vmatprep.subr.bf16.mxu0 %v851
      %2318 = vmatpush1.bf16.msra.mxu0 %v850
      %2319 = vmatprep.subr.bf16.mxu0 %v847
      %2320 = vmatpush1.bf16.msra.mxu0 %v846
      %2321 = vmatprep.subr.bf16.mxu0 %v843
      %2322 = vmatpush1.bf16.msra.mxu0 %v842
      %2323 = vmatprep.subr.bf16.mxu0 %v839
      %2324 = vmatpush1.bf16.msra.mxu0 %v838
      %2325 = vmatprep.subr.bf16.mxu0 %v835
      %2326 = vmatpush1.bf16.msra.mxu0 %v834
      %2327 = vmatprep.subr.bf16.mxu0 0
      %2328 = vmatpush2.bf16.msra.mxu0 0
      %2329 = vmatprep.subr.bf16.mxu0 0
      %2330 = vmatpush2.bf16.msra.mxu0 0
      %2331 = vmatprep.subr.bf16.mxu0 0
      %2332 = vmatpush2.bf16.msra.mxu0 0
      %2333 = vmatprep.subr.bf16.mxu0 0
      %2334 = vmatpush2.bf16.msra.mxu0 0
      %2335 = vmatprep.subr.bf16.mxu0 0
      %2336 = vmatpush2.bf16.msra.mxu0 0
      %2337 = vmatprep.subr.bf16.mxu0 0
      %2338 = vmatpush2.bf16.msra.mxu0 0
      %2339 = vmatprep.subr.bf16.mxu0 0
      %2340 = vmatpush2.bf16.msra.mxu0 0
      %2341 = vmatprep.subr.bf16.mxu0 0
      %2342 = vmatpush2.bf16.msra.mxu0 0
      %2343 = vmatprep.mubr.bf16.mxu0 0
      %2344 = vmatmul.mubr.bf16.gmra.mxu0 %v2250
      %v2345 = vpop.f32.mrf.mxu0
      %v2346 = vadd.f32 0.0, %v2345
      %v2347 = vpop.f32.mrf.mxu0
      %v2348 = vadd.f32 0.0, %v2347
      %v2349 = vpop.f32.mrf.mxu0
      %v2350 = vadd.f32 0.0, %v2349
      %v2351 = vpop.f32.mrf.mxu0
      %v2352 = vadd.f32 0.0, %v2351
      %2353 = vdwg.mxu0
      %v2354 = vadd.f32 %v2260, %v2303
      %v2355 = vadd.f32 %v2261, %v2305
      %v2356 = vadd.f32 %v2262, %v2346
      %v2357 = vadd.f32 %v2263, %v2348
      %v2358 = vadd.f32 %v2264, %v2307
      %v2359 = vadd.f32 %v2265, %v2309
      %v2360 = vadd.f32 %v2266, %v2350
      %v2361 = vadd.f32 %v2267, %v2352
      %v2362 = vxor.u32 %v2354, 2147483648
      %v2363 = vxor.u32 %v2358, 2147483648
      %v2364 = vmul.f32 %v2362, 1.442695
      %v2365 = vpow.pop %v2364
      %v2366 = vmul.f32 %v2363, 1.442695
      %v2367 = vpow.pop %v2366
      %v2368 = vadd.f32 %v2365, 1.0
      %v2369 = vadd.f32 %v2367, 1.0
      %v2370 = vrcp.pop %v2368
      %v2371 = vmul.f32 1.0, %v2370
      %v2372 = vrcp.pop %v2369
      %v2373 = vmul.f32 1.0, %v2372
      %v2374 = vxor.u32 %v2355, 2147483648
      %v2375 = vxor.u32 %v2359, 2147483648
      %v2376 = vmul.f32 %v2374, 1.442695
      %v2377 = vpow.pop %v2376
      %v2378 = vmul.f32 %v2375, 1.442695
      %v2379 = vpow.pop %v2378
      %v2380 = vadd.f32 %v2377, 1.0
      %v2381 = vadd.f32 %v2379, 1.0
      %v2382 = vrcp.pop %v2380
      %v2383 = vmul.f32 1.0, %v2382
      %v2384 = vrcp.pop %v2381
      %v2385 = vmul.f32 1.0, %v2384
      %v2386 = vtanh.pop %v2356
      %v2387 = vtanh.pop %v2360
      %v2388 = vxor.u32 %v2357, 2147483648
      %v2389 = vxor.u32 %v2361, 2147483648
      %v2390 = vmul.f32 %v2388, 1.442695
      %v2391 = vpow.pop %v2390
      %v2392 = vmul.f32 %v2389, 1.442695
      %v2393 = vpow.pop %v2392
      %v2394 = vadd.f32 %v2391, 1.0
      %v2395 = vadd.f32 %v2393, 1.0
      %v2396 = vrcp.pop %v2394
      %v2397 = vmul.f32 1.0, %v2396
      %v2398 = vrcp.pop %v2395
      %v2399 = vmul.f32 1.0, %v2398
      %v2400 = vmul.f32 %v2383, %v2248
      %v2401 = vmul.f32 %v2385, %v2249
      %v2402 = vmul.f32 %v2371, %v2386
      %v2403 = vmul.f32 %v2373, %v2387
      %v2404 = vadd.f32 %v2400, %v2402
      %v2405 = vadd.f32 %v2401, %v2403
      %v2406 = vtanh.pop %v2404
      %v2407 = vtanh.pop %v2405
      %v2408 = vmul.f32 %v2397, %v2406
      %v2409 = vmul.f32 %v2399, %v2407
      %v2410 = vld [vmem:[%s1 + $0x70] sm:$0xff]
      %v2411 = vld [vmem:[%s1 + $0x78] sm:$0xff]
      %2413 = vset.pattern.permute.xlu0 0
      %2414 = vperm.xlu0 %2413, %v2410
      %v2415 = vpop.permute.xlu0 %2414
      %2418 = vset.pattern.permute.xlu0 0
      %2419 = vperm.xlu0 %2418, %v2411
      %v2420 = vpop.permute.xlu0 %2419
      %v2422 = vmul.f32 %v2415, %v2408
      %v2423 = vmul.f32 %v2420, %v2409
      %v2424 = vsub.f32 1.0, %v2410
      %v2425 = vsub.f32 1.0, %v2411
      %2427 = vset.pattern.permute.xlu0 0
      %2428 = vperm.xlu0 %2427, %v2424
      %v2429 = vpop.permute.xlu0 %2428
      %2432 = vset.pattern.permute.xlu0 0
      %2433 = vperm.xlu0 %2432, %v2425
      %v2434 = vpop.permute.xlu0 %2433
      %v2436 = vmul.f32 %v2429, %v2242
      %v2437 = vmul.f32 %v2434, %v2243
      %v2438 = vadd.f32 %v2422, %v2436
      %v2439 = vadd.f32 %v2423, %v2437
      %v2440 = vmul.f32 %v2415, %v2404
      %v2441 = vmul.f32 %v2420, %v2405
      %v2442 = vmul.f32 %v2429, %v2248
      %v2443 = vmul.f32 %v2434, %v2249
      %v2444 = vadd.f32 %v2440, %v2442
      %v2445 = vadd.f32 %v2441, %v2443
      %v2446 = vpack.c.bf16 %v2439, %v2438
      %v2448 = vunpack.c.l.b16 %v2446
      %v2449 = vunpack.c.h.b16 %v2446
      %v2450 = vpack.c.b16 %v2448, %v2448
      %v2451 = vpack.c.b16 %v2449, %v2449
      %2454 = vst [vmem:[#allocation3 + $0x38] sm:$0xf] %v2450
      %2455 = vst [vmem:[#allocation3 + $0x3c] sm:$0xf] %v2451
      %2456 = vst [vmem:[#allocation18] sm:$0xff] %v2438
      %2457 = vst [vmem:[#allocation18 + $0x8] sm:$0xff] %v2439
      %2458 = vst [vmem:[#allocation19] sm:$0xff] %v2444
      %2459 = vst [vmem:[#allocation19 + $0x8] sm:$0xff] %v2445
      %vm2460 = vcmask 7168
      %2461 = vst.msk [vmem:[#allocation4] sm:$0xff] %vm2460, -inf
      %2462 = vst.msk [vmem:[#allocation4 + $0x8] sm:$0xff] %vm2460, -inf
      %2463 = vst.msk [vmem:[#allocation4 + $0x10] sm:$0xff] %vm2460, -inf
      %2464 = vst.msk [vmem:[#allocation4 + $0x18] sm:$0xff] %vm2460, -inf
      %2465 = vst.msk [vmem:[#allocation4 + $0x20] sm:$0xff] %vm2460, -inf
      %2466 = vst.msk [vmem:[#allocation4 + $0x28] sm:$0xff] %vm2460, -inf
      %2467 = vst.msk [vmem:[#allocation4 + $0x30] sm:$0xff] %vm2460, -inf
      %2468 = vst.msk [vmem:[#allocation4 + $0x38] sm:$0xff] %vm2460, -inf
      %2469 = vst.msk [vmem:[#allocation4 + $0x40] sm:$0xff] %vm2460, -inf
      %2470 = vst.msk [vmem:[#allocation4 + $0x48] sm:$0xff] %vm2460, -inf
      %2471 = vst.msk [vmem:[#allocation4 + $0x50] sm:$0xff] %vm2460, -inf
      %2472 = vst.msk [vmem:[#allocation4 + $0x58] sm:$0xff] %vm2460, -inf
      %2473 = vst.msk [vmem:[#allocation4 + $0x60] sm:$0xff] %vm2460, -inf
      %2474 = vst.msk [vmem:[#allocation4 + $0x68] sm:$0xff] %vm2460, -inf
      %2475 = vst.msk [vmem:[#allocation4 + $0x70] sm:$0xff] %vm2460, -inf
      %2476 = vst.msk [vmem:[#allocation4 + $0x78] sm:$0xff] %vm2460, -inf
      %2477 = vst.msk [vmem:[#allocation5] sm:$0xff] %vm2460, 0.0
      %2478 = vst.msk [vmem:[#allocation5 + $0x8] sm:$0xff] %vm2460, 0.0
      %2479 = vst.msk [vmem:[#allocation5 + $0x10] sm:$0xff] %vm2460, 0.0
      %2480 = vst.msk [vmem:[#allocation5 + $0x18] sm:$0xff] %vm2460, 0.0
      %2481 = vst.msk [vmem:[#allocation5 + $0x20] sm:$0xff] %vm2460, 0.0
      %2482 = vst.msk [vmem:[#allocation5 + $0x28] sm:$0xff] %vm2460, 0.0
      %2483 = vst.msk [vmem:[#allocation5 + $0x30] sm:$0xff] %vm2460, 0.0
      %2484 = vst.msk [vmem:[#allocation5 + $0x38] sm:$0xff] %vm2460, 0.0
      %2485 = vst.msk [vmem:[#allocation5 + $0x40] sm:$0xff] %vm2460, 0.0
      %2486 = vst.msk [vmem:[#allocation5 + $0x48] sm:$0xff] %vm2460, 0.0
      %2487 = vst.msk [vmem:[#allocation5 + $0x50] sm:$0xff] %vm2460, 0.0
      %2488 = vst.msk [vmem:[#allocation5 + $0x58] sm:$0xff] %vm2460, 0.0
      %2489 = vst.msk [vmem:[#allocation5 + $0x60] sm:$0xff] %vm2460, 0.0
      %2490 = vst.msk [vmem:[#allocation5 + $0x68] sm:$0xff] %vm2460, 0.0
      %2491 = vst.msk [vmem:[#allocation5 + $0x70] sm:$0xff] %vm2460, 0.0
      %2492 = vst.msk [vmem:[#allocation5 + $0x78] sm:$0xff] %vm2460, 0.0
      %2493 = vst.msk [vmem:[#allocation6] sm:$0xff] %vm2460, 0.0
      %2494 = vst.msk [vmem:[#allocation6 + $0x8] sm:$0xff] %vm2460, 0.0
      %2495 = vst.msk [vmem:[#allocation6 + $0x10] sm:$0xff] %vm2460, 0.0
      %2496 = vst.msk [vmem:[#allocation6 + $0x18] sm:$0xff] %vm2460, 0.0
      %2497 = vst.msk [vmem:[#allocation6 + $0x20] sm:$0xff] %vm2460, 0.0
      %2498 = vst.msk [vmem:[#allocation6 + $0x28] sm:$0xff] %vm2460, 0.0
      %2499 = vst.msk [vmem:[#allocation6 + $0x30] sm:$0xff] %vm2460, 0.0
      %2500 = vst.msk [vmem:[#allocation6 + $0x38] sm:$0xff] %vm2460, 0.0
      %2501 = vst.msk [vmem:[#allocation6 + $0x40] sm:$0xff] %vm2460, 0.0
      %2502 = vst.msk [vmem:[#allocation6 + $0x48] sm:$0xff] %vm2460, 0.0
      %2503 = vst.msk [vmem:[#allocation6 + $0x50] sm:$0xff] %vm2460, 0.0
      %2504 = vst.msk [vmem:[#allocation6 + $0x58] sm:$0xff] %vm2460, 0.0
      %2505 = vst.msk [vmem:[#allocation6 + $0x60] sm:$0xff] %vm2460, 0.0
      %2506 = vst.msk [vmem:[#allocation6 + $0x68] sm:$0xff] %vm2460, 0.0
      %2507 = vst.msk [vmem:[#allocation6 + $0x70] sm:$0xff] %vm2460, 0.0
      %2508 = vst.msk [vmem:[#allocation6 + $0x78] sm:$0xff] %vm2460, 0.0
    $region69: #{tpu_custom_call.1} parent=1 // pred_fallthru
      _
    %v2509 = vld [vmem:[#allocation3] sm:$0xf]
    %v2510 = vld [vmem:[#allocation3 + $0x4] sm:$0xf]
    %v2511 = vld [vmem:[#allocation3 + $0x8] sm:$0xf]
    %v2512 = vld [vmem:[#allocation3 + $0xc] sm:$0xf]
    %v2513 = vld [vmem:[#allocation3 + $0x10] sm:$0xf]
    %v2514 = vld [vmem:[#allocation3 + $0x14] sm:$0xf]
    %v2515 = vld [vmem:[#allocation3 + $0x18] sm:$0xf]
    %v2516 = vld [vmem:[#allocation3 + $0x1c] sm:$0xf]
    %v2517 = vld [vmem:[#allocation3 + $0x20] sm:$0xf]
    %v2518 = vld [vmem:[#allocation3 + $0x24] sm:$0xf]
    %v2519 = vld [vmem:[#allocation3 + $0x28] sm:$0xf]
    %v2520 = vld [vmem:[#allocation3 + $0x2c] sm:$0xf]
    %v2521 = vld [vmem:[#allocation3 + $0x30] sm:$0xf]
    %v2522 = vld [vmem:[#allocation3 + $0x34] sm:$0xf]
    %v2523 = vld [vmem:[#allocation3 + $0x38] sm:$0xf]
    %v2524 = vld [vmem:[#allocation3 + $0x3c] sm:$0xf]
    %v2525 = vld [vmem:[#allocation13] sm:$0xf]
    %v2526 = vld [vmem:[#allocation13 + $0x4] sm:$0xf]
    %v2527 = vld [vmem:[#allocation13 + $0x8] sm:$0xf]
    %v2528 = vld [vmem:[#allocation13 + $0xc] sm:$0xf]
    %v2529 = vld [vmem:[#allocation13 + $0x10] sm:$0xf]
    %v2530 = vld [vmem:[#allocation13 + $0x14] sm:$0xf]
    %v2531 = vld [vmem:[#allocation13 + $0x18] sm:$0xf]
    %v2532 = vld [vmem:[#allocation13 + $0x1c] sm:$0xf]
    %v2533 = vld [vmem:[#allocation13 + $0x20] sm:$0xf]
    %v2534 = vld [vmem:[#allocation13 + $0x24] sm:$0xf]
    %v2535 = vld [vmem:[#allocation13 + $0x28] sm:$0xf]
    %v2536 = vld [vmem:[#allocation13 + $0x2c] sm:$0xf]
    %v2537 = vld [vmem:[#allocation13 + $0x30] sm:$0xf]
    %v2538 = vld [vmem:[#allocation13 + $0x34] sm:$0xf]
    %v2539 = vld [vmem:[#allocation13 + $0x38] sm:$0xf]
    %v2540 = vld [vmem:[#allocation13 + $0x3c] sm:$0xf]
    %v2541 = vld [vmem:[#allocation15] sm:$0x1]
    %v2543 = vlaneseq
    %v2544 = vshrl.u32 %v2543, 7
    %v2545 = vsub.s32 0, %v2544
    %v2546 = vrot.slane %v2541, %v2545
    %v2564 = vunpack.c.l.b16 %v2509
    %v2565 = vunpack.c.l.b16 %v2510
    %v2566 = vunpack.c.l.b16 %v2511
    %v2567 = vunpack.c.l.b16 %v2512
    %v2568 = vunpack.c.l.b16 %v2513
    %v2569 = vunpack.c.l.b16 %v2514
    %v2570 = vunpack.c.l.b16 %v2515
    %v2571 = vunpack.c.l.b16 %v2516
    %v2572 = vunpack.c.l.b16 %v2517
    %v2573 = vunpack.c.l.b16 %v2518
    %v2574 = vunpack.c.l.b16 %v2519
    %v2575 = vunpack.c.l.b16 %v2520
    %v2576 = vunpack.c.l.b16 %v2521
    %v2577 = vunpack.c.l.b16 %v2522
    %v2578 = vunpack.c.l.b16 %v2523
    %v2579 = vunpack.c.l.b16 %v2524
    %v2580 = vpack.c.b16 %v2565, %v2564
    %v2581 = vpack.c.b16 %v2567, %v2566
    %v2582 = vpack.c.b16 %v2569, %v2568
    %v2583 = vpack.c.b16 %v2571, %v2570
    %v2584 = vpack.c.b16 %v2573, %v2572
    %v2585 = vpack.c.b16 %v2575, %v2574
    %v2586 = vpack.c.b16 %v2577, %v2576
    %v2587 = vpack.c.b16 %v2579, %v2578
    %v2612 = vunpack.c.l.b16 %v2525
    %v2613 = vunpack.c.l.b16 %v2526
    %v2614 = vunpack.c.l.b16 %v2527
    %v2615 = vunpack.c.l.b16 %v2528
    %v2616 = vunpack.c.l.b16 %v2529
    %v2617 = vunpack.c.l.b16 %v2530
    %v2618 = vunpack.c.l.b16 %v2531
    %v2619 = vunpack.c.l.b16 %v2532
    %v2620 = vunpack.c.l.b16 %v2533
    %v2621 = vunpack.c.l.b16 %v2534
    %v2622 = vunpack.c.l.b16 %v2535
    %v2623 = vunpack.c.l.b16 %v2536
    %v2624 = vunpack.c.l.b16 %v2537
    %v2625 = vunpack.c.l.b16 %v2538
    %v2626 = vunpack.c.l.b16 %v2539
    %v2627 = vunpack.c.l.b16 %v2540
    %v2628 = vpack.c.b16 %v2613, %v2612
    %v2629 = vpack.c.b16 %v2615, %v2614
    %v2630 = vpack.c.b16 %v2617, %v2616
    %v2631 = vpack.c.b16 %v2619, %v2618
    %v2632 = vpack.c.b16 %v2621, %v2620
    %v2633 = vpack.c.b16 %v2623, %v2622
    %v2634 = vpack.c.b16 %v2625, %v2624
    %v2635 = vpack.c.b16 %v2627, %v2626
    %2644 = vmatprep.subr.bf16.mxu0 0
    %2645 = vmatpush1.bf16.msra.mxu0 %v2635
    %2646 = vmatprep.subr.bf16.mxu0 0
    %2647 = vmatpush1.bf16.msra.mxu0 %v2634
    %2648 = vmatprep.subr.bf16.mxu0 0
    %2649 = vmatpush1.bf16.msra.mxu0 %v2633
    %2650 = vmatprep.subr.bf16.mxu0 0
    %2651 = vmatpush1.bf16.msra.mxu0 %v2632
    %2652 = vmatprep.subr.bf16.mxu0 0
    %2653 = vmatpush1.bf16.msra.mxu0 %v2631
    %2654 = vmatprep.subr.bf16.mxu0 0
    %2655 = vmatpush1.bf16.msra.mxu0 %v2630
    %2656 = vmatprep.subr.bf16.mxu0 0
    %2657 = vmatpush1.bf16.msra.mxu0 %v2629
    %2658 = vmatprep.subr.bf16.mxu0 0
    %2659 = vmatpush1.bf16.msra.mxu0 %v2628
    %2660 = vmatprep.subr.bf16.mxu0 0
    %2661 = vmatpush2.bf16.msra.mxu0 0
    %2662 = vmatprep.subr.bf16.mxu0 0
    %2663 = vmatpush2.bf16.msra.mxu0 0
    %2664 = vmatprep.subr.bf16.mxu0 0
    %2665 = vmatpush2.bf16.msra.mxu0 0
    %2666 = vmatprep.subr.bf16.mxu0 0
    %2667 = vmatpush2.bf16.msra.mxu0 0
    %2668 = vmatprep.subr.bf16.mxu0 0
    %2669 = vmatpush2.bf16.msra.mxu0 0
    %2670 = vmatprep.subr.bf16.mxu0 0
    %2671 = vmatpush2.bf16.msra.mxu0 0
    %2672 = vmatprep.subr.bf16.mxu0 0
    %2673 = vmatpush2.bf16.msra.mxu0 0
    %2674 = vmatprep.subr.bf16.mxu0 0
    %2675 = vmatpush2.bf16.msra.mxu0 0
    %2676 = vmatprep.mubr.bf16.mxu0 0
    %2677 = vmatmul.mubr.bf16.gmra.mxu0 %v2580
    %v2678 = vpop.f32.mrf.mxu0
    %v2679 = vadd.f32 %v2546, %v2678
    %v2680 = vpop.f32.mrf.mxu0
    %v2681 = vpop.f32.mrf.mxu0
    %v2682 = vadd.f32 %v2546, %v2681
    %v2683 = vpop.f32.mrf.mxu0
    %2684 = vmatprep.mubr.bf16.mxu0 0
    %2685 = vmatmul.mubr.bf16.gmra.mxu0 %v2581
    %v2686 = vpop.f32.mrf.mxu0
    %v2687 = vadd.f32 %v2546, %v2686
    %v2688 = vpop.f32.mrf.mxu0
    %v2689 = vpop.f32.mrf.mxu0
    %v2690 = vadd.f32 %v2546, %v2689
    %v2691 = vpop.f32.mrf.mxu0
    %2692 = vmatprep.mubr.bf16.mxu0 0
    %2693 = vmatmul.mubr.bf16.gmra.mxu0 %v2582
    %v2694 = vpop.f32.mrf.mxu0
    %v2695 = vadd.f32 %v2546, %v2694
    %v2696 = vpop.f32.mrf.mxu0
    %v2697 = vpop.f32.mrf.mxu0
    %v2698 = vadd.f32 %v2546, %v2697
    %v2699 = vpop.f32.mrf.mxu0
    %2700 = vmatprep.mubr.bf16.mxu0 0
    %2701 = vmatmul.mubr.bf16.gmra.mxu0 %v2583
    %v2702 = vpop.f32.mrf.mxu0
    %v2703 = vadd.f32 %v2546, %v2702
    %v2704 = vpop.f32.mrf.mxu0
    %v2705 = vpop.f32.mrf.mxu0
    %v2706 = vadd.f32 %v2546, %v2705
    %v2707 = vpop.f32.mrf.mxu0
    %2708 = vmatprep.mubr.bf16.mxu0 0
    %2709 = vmatmul.mubr.bf16.gmra.mxu0 %v2584
    %v2710 = vpop.f32.mrf.mxu0
    %v2711 = vadd.f32 %v2546, %v2710
    %v2712 = vpop.f32.mrf.mxu0
    %v2713 = vpop.f32.mrf.mxu0
    %v2714 = vadd.f32 %v2546, %v2713
    %v2715 = vpop.f32.mrf.mxu0
    %2716 = vmatprep.mubr.bf16.mxu0 0
    %2717 = vmatmul.mubr.bf16.gmra.mxu0 %v2585
    %v2718 = vpop.f32.mrf.mxu0
    %v2719 = vadd.f32 %v2546, %v2718
    %v2720 = vpop.f32.mrf.mxu0
    %v2721 = vpop.f32.mrf.mxu0
    %v2722 = vadd.f32 %v2546, %v2721
    %v2723 = vpop.f32.mrf.mxu0
    %2724 = vmatprep.mubr.bf16.mxu0 0
    %2725 = vmatmul.mubr.bf16.gmra.mxu0 %v2586
    %v2726 = vpop.f32.mrf.mxu0
    %v2727 = vadd.f32 %v2546, %v2726
    %v2728 = vpop.f32.mrf.mxu0
    %v2729 = vpop.f32.mrf.mxu0
    %v2730 = vadd.f32 %v2546, %v2729
    %v2731 = vpop.f32.mrf.mxu0
    %2732 = vmatprep.mubr.bf16.mxu0 0
    %2733 = vmatmul.mubr.bf16.gmra.mxu0 %v2587
    %v2734 = vpop.f32.mrf.mxu0
    %v2735 = vadd.f32 %v2546, %v2734
    %v2736 = vpop.f32.mrf.mxu0
    %v2737 = vpop.f32.mrf.mxu0
    %v2738 = vadd.f32 %v2546, %v2737
    %v2739 = vpop.f32.mrf.mxu0
    %2740 = vdwg.mxu0
    %s2741 = smul.u32 0, 128
    %v2742 = vlaneseq
    %v2743 = vand.u32 %v2742, 127
    %v2744 = vstv %s2741
    %v2745 = vadd.s32 %v2744, %v2743
    %v2746 = vld [vmem:[#allocation6] sm:$0xff]
    %v2747 = vld [vmem:[#allocation6 + $0x8] sm:$0xff]
    %v2748 = vld [vmem:[#allocation6 + $0x10] sm:$0xff]
    %v2749 = vld [vmem:[#allocation6 + $0x18] sm:$0xff]
    %v2750 = vld [vmem:[#allocation6 + $0x20] sm:$0xff]
    %v2751 = vld [vmem:[#allocation6 + $0x28] sm:$0xff]
    %v2752 = vld [vmem:[#allocation6 + $0x30] sm:$0xff]
    %v2753 = vld [vmem:[#allocation6 + $0x38] sm:$0xff]
    %v2754 = vld [vmem:[#allocation6 + $0x40] sm:$0xff]
    %v2755 = vld [vmem:[#allocation6 + $0x48] sm:$0xff]
    %v2756 = vld [vmem:[#allocation6 + $0x50] sm:$0xff]
    %v2757 = vld [vmem:[#allocation6 + $0x58] sm:$0xff]
    %v2758 = vld [vmem:[#allocation6 + $0x60] sm:$0xff]
    %v2759 = vld [vmem:[#allocation6 + $0x68] sm:$0xff]
    %v2760 = vld [vmem:[#allocation6 + $0x70] sm:$0xff]
    %v2761 = vld [vmem:[#allocation6 + $0x78] sm:$0xff]
    %v2762 = vld [vmem:[%s2] sm:$0xff]
    %v2763 = vld [vmem:[%s2 + $0x8] sm:$0xff]
    %v2764 = vld [vmem:[%s2 + $0x10] sm:$0xff]
    %v2765 = vld [vmem:[%s2 + $0x18] sm:$0xff]
    %v2766 = vld [vmem:[%s2 + $0x20] sm:$0xff]
    %v2767 = vld [vmem:[%s2 + $0x28] sm:$0xff]
    %v2768 = vld [vmem:[%s2 + $0x30] sm:$0xff]
    %v2769 = vld [vmem:[%s2 + $0x38] sm:$0xff]
    %v2770 = vld [vmem:[%s2 + $0x40] sm:$0xff]
    %v2771 = vld [vmem:[%s2 + $0x48] sm:$0xff]
    %v2772 = vld [vmem:[%s2 + $0x50] sm:$0xff]
    %v2773 = vld [vmem:[%s2 + $0x58] sm:$0xff]
    %v2774 = vld [vmem:[%s2 + $0x60] sm:$0xff]
    %v2775 = vld [vmem:[%s2 + $0x68] sm:$0xff]
    %v2776 = vld [vmem:[%s2 + $0x70] sm:$0xff]
    %v2777 = vld [vmem:[%s2 + $0x78] sm:$0xff]
    %2778 = vset.pattern.permute.xlu0 0
    %2779 = vperm.xlu0 %2778, %v2762
    %v2780 = vpop.permute.xlu0 %2779
    %2781 = vset.pattern.permute.xlu0 0
    %2782 = vperm.xlu0 %2781, %v2763
    %v2783 = vpop.permute.xlu0 %2782
    %2784 = vset.pattern.permute.xlu0 0
    %2785 = vperm.xlu0 %2784, %v2764
    %v2786 = vpop.permute.xlu0 %2785
    %2787 = vset.pattern.permute.xlu0 0
    %2788 = vperm.xlu0 %2787, %v2765
    %v2789 = vpop.permute.xlu0 %2788
    %2790 = vset.pattern.permute.xlu0 0
    %2791 = vperm.xlu0 %2790, %v2766
    %v2792 = vpop.permute.xlu0 %2791
    %2793 = vset.pattern.permute.xlu0 0
    %2794 = vperm.xlu0 %2793, %v2767
    %v2795 = vpop.permute.xlu0 %2794
    %2796 = vset.pattern.permute.xlu0 0
    %2797 = vperm.xlu0 %2796, %v2768
    %v2798 = vpop.permute.xlu0 %2797
    %2799 = vset.pattern.permute.xlu0 0
    %2800 = vperm.xlu0 %2799, %v2769
    %v2801 = vpop.permute.xlu0 %2800
    %2802 = vset.pattern.permute.xlu0 0
    %2803 = vperm.xlu0 %2802, %v2770
    %v2804 = vpop.permute.xlu0 %2803
    %2805 = vset.pattern.permute.xlu0 0
    %2806 = vperm.xlu0 %2805, %v2771
    %v2807 = vpop.permute.xlu0 %2806
    %2808 = vset.pattern.permute.xlu0 0
    %2809 = vperm.xlu0 %2808, %v2772
    %v2810 = vpop.permute.xlu0 %2809
    %2811 = vset.pattern.permute.xlu0 0
    %2812 = vperm.xlu0 %2811, %v2773
    %v2813 = vpop.permute.xlu0 %2812
    %2814 = vset.pattern.permute.xlu0 0
    %2815 = vperm.xlu0 %2814, %v2774
    %v2816 = vpop.permute.xlu0 %2815
    %2817 = vset.pattern.permute.xlu0 0
    %2818 = vperm.xlu0 %2817, %v2775
    %v2819 = vpop.permute.xlu0 %2818
    %2820 = vset.pattern.permute.xlu0 0
    %2821 = vperm.xlu0 %2820, %v2776
    %v2822 = vpop.permute.xlu0 %2821
    %2823 = vset.pattern.permute.xlu0 0
    %2824 = vperm.xlu0 %2823, %v2777
    %v2825 = vpop.permute.xlu0 %2824
    %vm2826 = vcmp.eq.s32.totalorder %v2745, %v2780
    %vm2827 = vcmp.eq.s32.totalorder %v2745, %v2783
    %vm2828 = vcmp.eq.s32.totalorder %v2745, %v2786
    %vm2829 = vcmp.eq.s32.totalorder %v2745, %v2789
    %vm2830 = vcmp.eq.s32.totalorder %v2745, %v2792
    %vm2831 = vcmp.eq.s32.totalorder %v2745, %v2795
    %vm2832 = vcmp.eq.s32.totalorder %v2745, %v2798
    %vm2833 = vcmp.eq.s32.totalorder %v2745, %v2801
    %vm2834 = vcmp.eq.s32.totalorder %v2745, %v2804
    %vm2835 = vcmp.eq.s32.totalorder %v2745, %v2807
    %vm2836 = vcmp.eq.s32.totalorder %v2745, %v2810
    %vm2837 = vcmp.eq.s32.totalorder %v2745, %v2813
    %vm2838 = vcmp.eq.s32.totalorder %v2745, %v2816
    %vm2839 = vcmp.eq.s32.totalorder %v2745, %v2819
    %vm2840 = vcmp.eq.s32.totalorder %v2745, %v2822
    %vm2841 = vcmp.eq.s32.totalorder %v2745, %v2825
    %v2842 = vsel %vm2826, %v2679, 0.0
    %v2843 = vsel %vm2827, %v2682, 0.0
    %v2844 = vsel %vm2828, %v2687, 0.0
    %v2845 = vsel %vm2829, %v2690, 0.0
    %v2846 = vsel %vm2830, %v2695, 0.0
    %v2847 = vsel %vm2831, %v2698, 0.0
    %v2848 = vsel %vm2832, %v2703, 0.0
    %v2849 = vsel %vm2833, %v2706, 0.0
    %v2850 = vsel %vm2834, %v2711, 0.0
    %v2851 = vsel %vm2835, %v2714, 0.0
    %v2852 = vsel %vm2836, %v2719, 0.0
    %v2853 = vsel %vm2837, %v2722, 0.0
    %v2854 = vsel %vm2838, %v2727, 0.0
    %v2855 = vsel %vm2839, %v2730, 0.0
    %v2856 = vsel %vm2840, %v2735, 0.0
    %v2857 = vsel %vm2841, %v2738, 0.0
    %2858 = vadd.xlane.f32.xlu0 %v2842
    %v2859 = vpop.xlane.xlu0 %2858
    %2860 = vadd.xlane.f32.xlu0 %v2843
    %v2861 = vpop.xlane.xlu0 %2860
    %2862 = vadd.xlane.f32.xlu0 %v2844
    %v2863 = vpop.xlane.xlu0 %2862
    %2864 = vadd.xlane.f32.xlu0 %v2845
    %v2865 = vpop.xlane.xlu0 %2864
    %2866 = vadd.xlane.f32.xlu0 %v2846
    %v2867 = vpop.xlane.xlu0 %2866
    %2868 = vadd.xlane.f32.xlu0 %v2847
    %v2869 = vpop.xlane.xlu0 %2868
    %2870 = vadd.xlane.f32.xlu0 %v2848
    %v2871 = vpop.xlane.xlu0 %2870
    %2872 = vadd.xlane.f32.xlu0 %v2849
    %v2873 = vpop.xlane.xlu0 %2872
    %2874 = vadd.xlane.f32.xlu0 %v2850
    %v2875 = vpop.xlane.xlu0 %2874
    %2876 = vadd.xlane.f32.xlu0 %v2851
    %v2877 = vpop.xlane.xlu0 %2876
    %2878 = vadd.xlane.f32.xlu0 %v2852
    %v2879 = vpop.xlane.xlu0 %2878
    %2880 = vadd.xlane.f32.xlu0 %v2853
    %v2881 = vpop.xlane.xlu0 %2880
    %2882 = vadd.xlane.f32.xlu0 %v2854
    %v2883 = vpop.xlane.xlu0 %2882
    %2884 = vadd.xlane.f32.xlu0 %v2855
    %v2885 = vpop.xlane.xlu0 %2884
    %2886 = vadd.xlane.f32.xlu0 %v2856
    %v2887 = vpop.xlane.xlu0 %2886
    %2888 = vadd.xlane.f32.xlu0 %v2857
    %v2889 = vpop.xlane.xlu0 %2888
    %v2890 = vadd.f32 %v2746, %v2859
    %v2891 = vadd.f32 %v2747, %v2861
    %v2892 = vadd.f32 %v2748, %v2863
    %v2893 = vadd.f32 %v2749, %v2865
    %v2894 = vadd.f32 %v2750, %v2867
    %v2895 = vadd.f32 %v2751, %v2869
    %v2896 = vadd.f32 %v2752, %v2871
    %v2897 = vadd.f32 %v2753, %v2873
    %v2898 = vadd.f32 %v2754, %v2875
    %v2899 = vadd.f32 %v2755, %v2877
    %v2900 = vadd.f32 %v2756, %v2879
    %v2901 = vadd.f32 %v2757, %v2881
    %v2902 = vadd.f32 %v2758, %v2883
    %v2903 = vadd.f32 %v2759, %v2885
    %v2904 = vadd.f32 %v2760, %v2887
    %v2905 = vadd.f32 %v2761, %v2889
    %vm2906 = vcmask 7168
    %2907 = vst.msk [vmem:[#allocation6] sm:$0xff] %vm2906, %v2890
    %2908 = vst.msk [vmem:[#allocation6 + $0x8] sm:$0xff] %vm2906, %v2891
    %2909 = vst.msk [vmem:[#allocation6 + $0x10] sm:$0xff] %vm2906, %v2892
    %2910 = vst.msk [vmem:[#allocation6 + $0x18] sm:$0xff] %vm2906, %v2893
    %2911 = vst.msk [vmem:[#allocation6 + $0x20] sm:$0xff] %vm2906, %v2894
    %2912 = vst.msk [vmem:[#allocation6 + $0x28] sm:$0xff] %vm2906, %v2895
    %2913 = vst.msk [vmem:[#allocation6 + $0x30] sm:$0xff] %vm2906, %v2896
    %2914 = vst.msk [vmem:[#allocation6 + $0x38] sm:$0xff] %vm2906, %v2897
    %2915 = vst.msk [vmem:[#allocation6 + $0x40] sm:$0xff] %vm2906, %v2898
    %2916 = vst.msk [vmem:[#allocation6 + $0x48] sm:$0xff] %vm2906, %v2899
    %2917 = vst.msk [vmem:[#allocation6 + $0x50] sm:$0xff] %vm2906, %v2900
    %2918 = vst.msk [vmem:[#allocation6 + $0x58] sm:$0xff] %vm2906, %v2901
    %2919 = vst.msk [vmem:[#allocation6 + $0x60] sm:$0xff] %vm2906, %v2902
    %2920 = vst.msk [vmem:[#allocation6 + $0x68] sm:$0xff] %vm2906, %v2903
    %2921 = vst.msk [vmem:[#allocation6 + $0x70] sm:$0xff] %vm2906, %v2904
    %2922 = vst.msk [vmem:[#allocation6 + $0x78] sm:$0xff] %vm2906, %v2905
    %2923 = vmax.xlane.f32.xlu0 %v2679
    %v2924 = vpop.xlane.xlu0 %2923
    %2925 = vmax.xlane.f32.xlu0 %v2682
    %v2926 = vpop.xlane.xlu0 %2925
    %2927 = vmax.xlane.f32.xlu0 %v2687
    %v2928 = vpop.xlane.xlu0 %2927
    %2929 = vmax.xlane.f32.xlu0 %v2690
    %v2930 = vpop.xlane.xlu0 %2929
    %2931 = vmax.xlane.f32.xlu0 %v2695
    %v2932 = vpop.xlane.xlu0 %2931
    %2933 = vmax.xlane.f32.xlu0 %v2698
    %v2934 = vpop.xlane.xlu0 %2933
    %2935 = vmax.xlane.f32.xlu0 %v2703
    %v2936 = vpop.xlane.xlu0 %2935
    %2937 = vmax.xlane.f32.xlu0 %v2706
    %v2938 = vpop.xlane.xlu0 %2937
    %2939 = vmax.xlane.f32.xlu0 %v2711
    %v2940 = vpop.xlane.xlu0 %2939
    %2941 = vmax.xlane.f32.xlu0 %v2714
    %v2942 = vpop.xlane.xlu0 %2941
    %2943 = vmax.xlane.f32.xlu0 %v2719
    %v2944 = vpop.xlane.xlu0 %2943
    %2945 = vmax.xlane.f32.xlu0 %v2722
    %v2946 = vpop.xlane.xlu0 %2945
    %2947 = vmax.xlane.f32.xlu0 %v2727
    %v2948 = vpop.xlane.xlu0 %2947
    %2949 = vmax.xlane.f32.xlu0 %v2730
    %v2950 = vpop.xlane.xlu0 %2949
    %2951 = vmax.xlane.f32.xlu0 %v2735
    %v2952 = vpop.xlane.xlu0 %2951
    %2953 = vmax.xlane.f32.xlu0 %v2738
    %v2954 = vpop.xlane.xlu0 %2953
    %v2955 = vld [vmem:[#allocation4] sm:$0xff]
    %v2956 = vld [vmem:[#allocation4 + $0x8] sm:$0xff]
    %v2957 = vld [vmem:[#allocation4 + $0x10] sm:$0xff]
    %v2958 = vld [vmem:[#allocation4 + $0x18] sm:$0xff]
    %v2959 = vld [vmem:[#allocation4 + $0x20] sm:$0xff]
    %v2960 = vld [vmem:[#allocation4 + $0x28] sm:$0xff]
    %v2961 = vld [vmem:[#allocation4 + $0x30] sm:$0xff]
    %v2962 = vld [vmem:[#allocation4 + $0x38] sm:$0xff]
    %v2963 = vld [vmem:[#allocation4 + $0x40] sm:$0xff]
    %v2964 = vld [vmem:[#allocation4 + $0x48] sm:$0xff]
    %v2965 = vld [vmem:[#allocation4 + $0x50] sm:$0xff]
    %v2966 = vld [vmem:[#allocation4 + $0x58] sm:$0xff]
    %v2967 = vld [vmem:[#allocation4 + $0x60] sm:$0xff]
    %v2968 = vld [vmem:[#allocation4 + $0x68] sm:$0xff]
    %v2969 = vld [vmem:[#allocation4 + $0x70] sm:$0xff]
    %v2970 = vld [vmem:[#allocation4 + $0x78] sm:$0xff]
    %v2971 = vmax.f32 %v2955, %v2924
    %v2972 = vmax.f32 %v2956, %v2926
    %v2973 = vmax.f32 %v2957, %v2928
    %v2974 = vmax.f32 %v2958, %v2930
    %v2975 = vmax.f32 %v2959, %v2932
    %v2976 = vmax.f32 %v2960, %v2934
    %v2977 = vmax.f32 %v2961, %v2936
    %v2978 = vmax.f32 %v2962, %v2938
    %v2979 = vmax.f32 %v2963, %v2940
    %v2980 = vmax.f32 %v2964, %v2942
    %v2981 = vmax.f32 %v2965, %v2944
    %v2982 = vmax.f32 %v2966, %v2946
    %v2983 = vmax.f32 %v2967, %v2948
    %v2984 = vmax.f32 %v2968, %v2950
    %v2985 = vmax.f32 %v2969, %v2952
    %v2986 = vmax.f32 %v2970, %v2954
    %v2987 = vld [vmem:[#allocation5] sm:$0xff]
    %v2988 = vld [vmem:[#allocation5 + $0x8] sm:$0xff]
    %v2989 = vld [vmem:[#allocation5 + $0x10] sm:$0xff]
    %v2990 = vld [vmem:[#allocation5 + $0x18] sm:$0xff]
    %v2991 = vld [vmem:[#allocation5 + $0x20] sm:$0xff]
    %v2992 = vld [vmem:[#allocation5 + $0x28] sm:$0xff]
    %v2993 = vld [vmem:[#allocation5 + $0x30] sm:$0xff]
    %v2994 = vld [vmem:[#allocation5 + $0x38] sm:$0xff]
    %v2995 = vld [vmem:[#allocation5 + $0x40] sm:$0xff]
    %v2996 = vld [vmem:[#allocation5 + $0x48] sm:$0xff]
    %v2997 = vld [vmem:[#allocation5 + $0x50] sm:$0xff]
    %v2998 = vld [vmem:[#allocation5 + $0x58] sm:$0xff]
    %v2999 = vld [vmem:[#allocation5 + $0x60] sm:$0xff]
    %v3000 = vld [vmem:[#allocation5 + $0x68] sm:$0xff]
    %v3001 = vld [vmem:[#allocation5 + $0x70] sm:$0xff]
    %v3002 = vld [vmem:[#allocation5 + $0x78] sm:$0xff]
    %v3003 = vsub.f32 %v2955, %v2971
    %v3004 = vsub.f32 %v2956, %v2972
    %v3005 = vsub.f32 %v2957, %v2973
    %v3006 = vsub.f32 %v2958, %v2974
    %v3007 = vsub.f32 %v2959, %v2975
    %v3008 = vsub.f32 %v2960, %v2976
    %v3009 = vsub.f32 %v2961, %v2977
    %v3010 = vsub.f32 %v2962, %v2978
    %v3011 = vsub.f32 %v2963, %v2979
    %v3012 = vsub.f32 %v2964, %v2980
    %v3013 = vsub.f32 %v2965, %v2981
    %v3014 = vsub.f32 %v2966, %v2982
    %v3015 = vsub.f32 %v2967, %v2983
    %v3016 = vsub.f32 %v2968, %v2984
    %v3017 = vsub.f32 %v2969, %v2985
    %v3018 = vsub.f32 %v2970, %v2986
    %v3019 = vmul.f32 %v3003, 1.442695
    %v3020 = vpow.pop %v3019
    %v3021 = vmul.f32 %v3004, 1.442695
    %v3022 = vpow.pop %v3021
    %v3023 = vmul.f32 %v3005, 1.442695
    %v3024 = vpow.pop %v3023
    %v3025 = vmul.f32 %v3006, 1.442695
    %v3026 = vpow.pop %v3025
    %v3027 = vmul.f32 %v3007, 1.442695
    %v3028 = vpow.pop %v3027
    %v3029 = vmul.f32 %v3008, 1.442695
    %v3030 = vpow.pop %v3029
    %v3031 = vmul.f32 %v3009, 1.442695
    %v3032 = vpow.pop %v3031
    %v3033 = vmul.f32 %v3010, 1.442695
    %v3034 = vpow.pop %v3033
    %v3035 = vmul.f32 %v3011, 1.442695
    %v3036 = vpow.pop %v3035
    %v3037 = vmul.f32 %v3012, 1.442695
    %v3038 = vpow.pop %v3037
    %v3039 = vmul.f32 %v3013, 1.442695
    %v3040 = vpow.pop %v3039
    %v3041 = vmul.f32 %v3014, 1.442695
    %v3042 = vpow.pop %v3041
    %v3043 = vmul.f32 %v3015, 1.442695
    %v3044 = vpow.pop %v3043
    %v3045 = vmul.f32 %v3016, 1.442695
    %v3046 = vpow.pop %v3045
    %v3047 = vmul.f32 %v3017, 1.442695
    %v3048 = vpow.pop %v3047
    %v3049 = vmul.f32 %v3018, 1.442695
    %v3050 = vpow.pop %v3049
    %v3051 = vmul.f32 %v2987, %v3020
    %v3052 = vmul.f32 %v2988, %v3022
    %v3053 = vmul.f32 %v2989, %v3024
    %v3054 = vmul.f32 %v2990, %v3026
    %v3055 = vmul.f32 %v2991, %v3028
    %v3056 = vmul.f32 %v2992, %v3030
    %v3057 = vmul.f32 %v2993, %v3032
    %v3058 = vmul.f32 %v2994, %v3034
    %v3059 = vmul.f32 %v2995, %v3036
    %v3060 = vmul.f32 %v2996, %v3038
    %v3061 = vmul.f32 %v2997, %v3040
    %v3062 = vmul.f32 %v2998, %v3042
    %v3063 = vmul.f32 %v2999, %v3044
    %v3064 = vmul.f32 %v3000, %v3046
    %v3065 = vmul.f32 %v3001, %v3048
    %v3066 = vmul.f32 %v3002, %v3050
    %3068 = vset.pattern.permute.xlu0 0
    %3069 = vperm.xlu0 %3068, %v2971
    %v3070 = vpop.permute.xlu0 %3069
    %3073 = vset.pattern.permute.xlu0 0
    %3074 = vperm.xlu0 %3073, %v2972
    %v3075 = vpop.permute.xlu0 %3074
    %3078 = vset.pattern.permute.xlu0 0
    %3079 = vperm.xlu0 %3078, %v2973
    %v3080 = vpop.permute.xlu0 %3079
    %3083 = vset.pattern.permute.xlu0 0
    %3084 = vperm.xlu0 %3083, %v2974
    %v3085 = vpop.permute.xlu0 %3084
    %3088 = vset.pattern.permute.xlu0 0
    %3089 = vperm.xlu0 %3088, %v2975
    %v3090 = vpop.permute.xlu0 %3089
    %3093 = vset.pattern.permute.xlu0 0
    %3094 = vperm.xlu0 %3093, %v2976
    %v3095 = vpop.permute.xlu0 %3094
    %3098 = vset.pattern.permute.xlu0 0
    %3099 = vperm.xlu0 %3098, %v2977
    %v3100 = vpop.permute.xlu0 %3099
    %3103 = vset.pattern.permute.xlu0 0
    %3104 = vperm.xlu0 %3103, %v2978
    %v3105 = vpop.permute.xlu0 %3104
    %3108 = vset.pattern.permute.xlu0 0
    %3109 = vperm.xlu0 %3108, %v2979
    %v3110 = vpop.permute.xlu0 %3109
    %3113 = vset.pattern.permute.xlu0 0
    %3114 = vperm.xlu0 %3113, %v2980
    %v3115 = vpop.permute.xlu0 %3114
    %3118 = vset.pattern.permute.xlu0 0
    %3119 = vperm.xlu0 %3118, %v2981
    %v3120 = vpop.permute.xlu0 %3119
    %3123 = vset.pattern.permute.xlu0 0
    %3124 = vperm.xlu0 %3123, %v2982
    %v3125 = vpop.permute.xlu0 %3124
    %3128 = vset.pattern.permute.xlu0 0
    %3129 = vperm.xlu0 %3128, %v2983
    %v3130 = vpop.permute.xlu0 %3129
    %3133 = vset.pattern.permute.xlu0 0
    %3134 = vperm.xlu0 %3133, %v2984
    %v3135 = vpop.permute.xlu0 %3134
    %3138 = vset.pattern.permute.xlu0 0
    %3139 = vperm.xlu0 %3138, %v2985
    %v3140 = vpop.permute.xlu0 %3139
    %3143 = vset.pattern.permute.xlu0 0
    %3144 = vperm.xlu0 %3143, %v2986
    %v3145 = vpop.permute.xlu0 %3144
    %v3147 = vsub.f32 %v2679, %v3070
    %v3148 = vsub.f32 %v2682, %v3075
    %v3149 = vsub.f32 %v2687, %v3080
    %v3150 = vsub.f32 %v2690, %v3085
    %v3151 = vsub.f32 %v2695, %v3090
    %v3152 = vsub.f32 %v2698, %v3095
    %v3153 = vsub.f32 %v2703, %v3100
    %v3154 = vsub.f32 %v2706, %v3105
    %v3155 = vsub.f32 %v2711, %v3110
    %v3156 = vsub.f32 %v2714, %v3115
    %v3157 = vsub.f32 %v2719, %v3120
    %v3158 = vsub.f32 %v2722, %v3125
    %v3159 = vsub.f32 %v2727, %v3130
    %v3160 = vsub.f32 %v2730, %v3135
    %v3161 = vsub.f32 %v2735, %v3140
    %v3162 = vsub.f32 %v2738, %v3145
    %v3163 = vmul.f32 %v3147, 1.442695
    %v3164 = vpow.pop %v3163
    %v3165 = vmul.f32 %v3148, 1.442695
    %v3166 = vpow.pop %v3165
    %v3167 = vmul.f32 %v3149, 1.442695
    %v3168 = vpow.pop %v3167
    %v3169 = vmul.f32 %v3150, 1.442695
    %v3170 = vpow.pop %v3169
    %v3171 = vmul.f32 %v3151, 1.442695
    %v3172 = vpow.pop %v3171
    %v3173 = vmul.f32 %v3152, 1.442695
    %v3174 = vpow.pop %v3173
    %v3175 = vmul.f32 %v3153, 1.442695
    %v3176 = vpow.pop %v3175
    %v3177 = vmul.f32 %v3154, 1.442695
    %v3178 = vpow.pop %v3177
    %v3179 = vmul.f32 %v3155, 1.442695
    %v3180 = vpow.pop %v3179
    %v3181 = vmul.f32 %v3156, 1.442695
    %v3182 = vpow.pop %v3181
    %v3183 = vmul.f32 %v3157, 1.442695
    %v3184 = vpow.pop %v3183
    %v3185 = vmul.f32 %v3158, 1.442695
    %v3186 = vpow.pop %v3185
    %v3187 = vmul.f32 %v3159, 1.442695
    %v3188 = vpow.pop %v3187
    %v3189 = vmul.f32 %v3160, 1.442695
    %v3190 = vpow.pop %v3189
    %v3191 = vmul.f32 %v3161, 1.442695
    %v3192 = vpow.pop %v3191
    %v3193 = vmul.f32 %v3162, 1.442695
    %v3194 = vpow.pop %v3193
    %3195 = vadd.xlane.f32.xlu0 %v3164
    %v3196 = vpop.xlane.xlu0 %3195
    %3197 = vadd.xlane.f32.xlu0 %v3166
    %v3198 = vpop.xlane.xlu0 %3197
    %3199 = vadd.xlane.f32.xlu0 %v3168
    %v3200 = vpop.xlane.xlu0 %3199
    %3201 = vadd.xlane.f32.xlu0 %v3170
    %v3202 = vpop.xlane.xlu0 %3201
    %3203 = vadd.xlane.f32.xlu0 %v3172
    %v3204 = vpop.xlane.xlu0 %3203
    %3205 = vadd.xlane.f32.xlu0 %v3174
    %v3206 = vpop.xlane.xlu0 %3205
    %3207 = vadd.xlane.f32.xlu0 %v3176
    %v3208 = vpop.xlane.xlu0 %3207
    %3209 = vadd.xlane.f32.xlu0 %v3178
    %v3210 = vpop.xlane.xlu0 %3209
    %3211 = vadd.xlane.f32.xlu0 %v3180
    %v3212 = vpop.xlane.xlu0 %3211
    %3213 = vadd.xlane.f32.xlu0 %v3182
    %v3214 = vpop.xlane.xlu0 %3213
    %3215 = vadd.xlane.f32.xlu0 %v3184
    %v3216 = vpop.xlane.xlu0 %3215
    %3217 = vadd.xlane.f32.xlu0 %v3186
    %v3218 = vpop.xlane.xlu0 %3217
    %3219 = vadd.xlane.f32.xlu0 %v3188
    %v3220 = vpop.xlane.xlu0 %3219
    %3221 = vadd.xlane.f32.xlu0 %v3190
    %v3222 = vpop.xlane.xlu0 %3221
    %3223 = vadd.xlane.f32.xlu0 %v3192
    %v3224 = vpop.xlane.xlu0 %3223
    %3225 = vadd.xlane.f32.xlu0 %v3194
    %v3226 = vpop.xlane.xlu0 %3225
    %v3227 = vadd.f32 %v3051, %v3196
    %v3228 = vadd.f32 %v3052, %v3198
    %v3229 = vadd.f32 %v3053, %v3200
    %v3230 = vadd.f32 %v3054, %v3202
    %v3231 = vadd.f32 %v3055, %v3204
    %v3232 = vadd.f32 %v3056, %v3206
    %v3233 = vadd.f32 %v3057, %v3208
    %v3234 = vadd.f32 %v3058, %v3210
    %v3235 = vadd.f32 %v3059, %v3212
    %v3236 = vadd.f32 %v3060, %v3214
    %v3237 = vadd.f32 %v3061, %v3216
    %v3238 = vadd.f32 %v3062, %v3218
    %v3239 = vadd.f32 %v3063, %v3220
    %v3240 = vadd.f32 %v3064, %v3222
    %v3241 = vadd.f32 %v3065, %v3224
    %v3242 = vadd.f32 %v3066, %v3226
    %3243 = vst.msk [vmem:[#allocation5] sm:$0xff] %vm2906, %v3227
    %3244 = vst.msk [vmem:[#allocation5 + $0x8] sm:$0xff] %vm2906, %v3228
    %3245 = vst.msk [vmem:[#allocation5 + $0x10] sm:$0xff] %vm2906, %v3229
    %3246 = vst.msk [vmem:[#allocation5 + $0x18] sm:$0xff] %vm2906, %v3230
    %3247 = vst.msk [vmem:[#allocation5 + $0x20] sm:$0xff] %vm2906, %v3231
    %3248 = vst.msk [vmem:[#allocation5 + $0x28] sm:$0xff] %vm2906, %v3232
    %3249 = vst.msk [vmem:[#allocation5 + $0x30] sm:$0xff] %vm2906, %v3233
    %3250 = vst.msk [vmem:[#allocation5 + $0x38] sm:$0xff] %vm2906, %v3234
    %3251 = vst.msk [vmem:[#allocation5 + $0x40] sm:$0xff] %vm2906, %v3235
    %3252 = vst.msk [vmem:[#allocation5 + $0x48] sm:$0xff] %vm2906, %v3236
    %3253 = vst.msk [vmem:[#allocation5 + $0x50] sm:$0xff] %vm2906, %v3237
    %3254 = vst.msk [vmem:[#allocation5 + $0x58] sm:$0xff] %vm2906, %v3238
    %3255 = vst.msk [vmem:[#allocation5 + $0x60] sm:$0xff] %vm2906, %v3239
    %3256 = vst.msk [vmem:[#allocation5 + $0x68] sm:$0xff] %vm2906, %v3240
    %3257 = vst.msk [vmem:[#allocation5 + $0x70] sm:$0xff] %vm2906, %v3241
    %3258 = vst.msk [vmem:[#allocation5 + $0x78] sm:$0xff] %vm2906, %v3242
    %3259 = vst.msk [vmem:[#allocation4] sm:$0xff] %vm2906, %v2971
    %3260 = vst.msk [vmem:[#allocation4 + $0x8] sm:$0xff] %vm2906, %v2972
    %3261 = vst.msk [vmem:[#allocation4 + $0x10] sm:$0xff] %vm2906, %v2973
    %3262 = vst.msk [vmem:[#allocation4 + $0x18] sm:$0xff] %vm2906, %v2974
    %3263 = vst.msk [vmem:[#allocation4 + $0x20] sm:$0xff] %vm2906, %v2975
    %3264 = vst.msk [vmem:[#allocation4 + $0x28] sm:$0xff] %vm2906, %v2976
    %3265 = vst.msk [vmem:[#allocation4 + $0x30] sm:$0xff] %vm2906, %v2977
    %3266 = vst.msk [vmem:[#allocation4 + $0x38] sm:$0xff] %vm2906, %v2978
    %3267 = vst.msk [vmem:[#allocation4 + $0x40] sm:$0xff] %vm2906, %v2979
    %3268 = vst.msk [vmem:[#allocation4 + $0x48] sm:$0xff] %vm2906, %v2980
    %3269 = vst.msk [vmem:[#allocation4 + $0x50] sm:$0xff] %vm2906, %v2981
    %3270 = vst.msk [vmem:[#allocation4 + $0x58] sm:$0xff] %vm2906, %v2982
    %3271 = vst.msk [vmem:[#allocation4 + $0x60] sm:$0xff] %vm2906, %v2983
    %3272 = vst.msk [vmem:[#allocation4 + $0x68] sm:$0xff] %vm2906, %v2984
    %3273 = vst.msk [vmem:[#allocation4 + $0x70] sm:$0xff] %vm2906, %v2985
    %3274 = vst.msk [vmem:[#allocation4 + $0x78] sm:$0xff] %vm2906, %v2986
    // Predicated region
    $region70: #{tpu_custom_call.1} parent=1 // pred_check
      %p3275 = pneg %p119
    $region71: #{tpu_custom_call.1} parent=1 // pred_check_branch
      %3277 = sbr.rel (%p3275) target = $region73
    $region72: #{tpu_custom_call.1} parent=1 // pred_region
      %v3278 = vld [vmem:[#allocation4] sm:$0xff]
      %v3279 = vld [vmem:[#allocation4 + $0x8] sm:$0xff]
      %v3280 = vld [vmem:[#allocation4 + $0x10] sm:$0xff]
      %v3281 = vld [vmem:[#allocation4 + $0x18] sm:$0xff]
      %v3282 = vld [vmem:[#allocation4 + $0x20] sm:$0xff]
      %v3283 = vld [vmem:[#allocation4 + $0x28] sm:$0xff]
      %v3284 = vld [vmem:[#allocation4 + $0x30] sm:$0xff]
      %v3285 = vld [vmem:[#allocation4 + $0x38] sm:$0xff]
      %v3286 = vld [vmem:[#allocation4 + $0x40] sm:$0xff]
      %v3287 = vld [vmem:[#allocation4 + $0x48] sm:$0xff]
      %v3288 = vld [vmem:[#allocation4 + $0x50] sm:$0xff]
      %v3289 = vld [vmem:[#allocation4 + $0x58] sm:$0xff]
      %v3290 = vld [vmem:[#allocation4 + $0x60] sm:$0xff]
      %v3291 = vld [vmem:[#allocation4 + $0x68] sm:$0xff]
      %v3292 = vld [vmem:[#allocation4 + $0x70] sm:$0xff]
      %v3293 = vld [vmem:[#allocation4 + $0x78] sm:$0xff]
      %v3294 = vld [vmem:[#allocation5] sm:$0xff]
      %v3295 = vld [vmem:[#allocation5 + $0x8] sm:$0xff]
      %v3296 = vld [vmem:[#allocation5 + $0x10] sm:$0xff]
      %v3297 = vld [vmem:[#allocation5 + $0x18] sm:$0xff]
      %v3298 = vld [vmem:[#allocation5 + $0x20] sm:$0xff]
      %v3299 = vld [vmem:[#allocation5 + $0x28] sm:$0xff]
      %v3300 = vld [vmem:[#allocation5 + $0x30] sm:$0xff]
      %v3301 = vld [vmem:[#allocation5 + $0x38] sm:$0xff]
      %v3302 = vld [vmem:[#allocation5 + $0x40] sm:$0xff]
      %v3303 = vld [vmem:[#allocation5 + $0x48] sm:$0xff]
      %v3304 = vld [vmem:[#allocation5 + $0x50] sm:$0xff]
      %v3305 = vld [vmem:[#allocation5 + $0x58] sm:$0xff]
      %v3306 = vld [vmem:[#allocation5 + $0x60] sm:$0xff]
      %v3307 = vld [vmem:[#allocation5 + $0x68] sm:$0xff]
      %v3308 = vld [vmem:[#allocation5 + $0x70] sm:$0xff]
      %v3309 = vld [vmem:[#allocation5 + $0x78] sm:$0xff]
      %v3310 = vlog2.pop %v3294
      %v3311 = vmul.f32 %v3310, 0.6931472
      %v3312 = vlog2.pop %v3295
      %v3313 = vmul.f32 %v3312, 0.6931472
      %v3314 = vlog2.pop %v3296
      %v3315 = vmul.f32 %v3314, 0.6931472
      %v3316 = vlog2.pop %v3297
      %v3317 = vmul.f32 %v3316, 0.6931472
      %v3318 = vlog2.pop %v3298
      %v3319 = vmul.f32 %v3318, 0.6931472
      %v3320 = vlog2.pop %v3299
      %v3321 = vmul.f32 %v3320, 0.6931472
      %v3322 = vlog2.pop %v3300
      %v3323 = vmul.f32 %v3322, 0.6931472
      %v3324 = vlog2.pop %v3301
      %v3325 = vmul.f32 %v3324, 0.6931472
      %v3326 = vlog2.pop %v3302
      %v3327 = vmul.f32 %v3326, 0.6931472
      %v3328 = vlog2.pop %v3303
      %v3329 = vmul.f32 %v3328, 0.6931472
      %v3330 = vlog2.pop %v3304
      %v3331 = vmul.f32 %v3330, 0.6931472
      %v3332 = vlog2.pop %v3305
      %v3333 = vmul.f32 %v3332, 0.6931472
      %v3334 = vlog2.pop %v3306
      %v3335 = vmul.f32 %v3334, 0.6931472
      %v3336 = vlog2.pop %v3307
      %v3337 = vmul.f32 %v3336, 0.6931472
      %v3338 = vlog2.pop %v3308
      %v3339 = vmul.f32 %v3338, 0.6931472
      %v3340 = vlog2.pop %v3309
      %v3341 = vmul.f32 %v3340, 0.6931472
      %v3342 = vadd.f32 %v3278, %v3311
      %v3343 = vadd.f32 %v3279, %v3313
      %v3344 = vadd.f32 %v3280, %v3315
      %v3345 = vadd.f32 %v3281, %v3317
      %v3346 = vadd.f32 %v3282, %v3319
      %v3347 = vadd.f32 %v3283, %v3321
      %v3348 = vadd.f32 %v3284, %v3323
      %v3349 = vadd.f32 %v3285, %v3325
      %v3350 = vadd.f32 %v3286, %v3327
      %v3351 = vadd.f32 %v3287, %v3329
      %v3352 = vadd.f32 %v3288, %v3331
      %v3353 = vadd.f32 %v3289, %v3333
      %v3354 = vadd.f32 %v3290, %v3335
      %v3355 = vadd.f32 %v3291, %v3337
      %v3356 = vadd.f32 %v3292, %v3339
      %v3357 = vadd.f32 %v3293, %v3341
      %v3358 = vld [vmem:[#allocation6] sm:$0xff]
      %v3359 = vld [vmem:[#allocation6 + $0x8] sm:$0xff]
      %v3360 = vld [vmem:[#allocation6 + $0x10] sm:$0xff]
      %v3361 = vld [vmem:[#allocation6 + $0x18] sm:$0xff]
      %v3362 = vld [vmem:[#allocation6 + $0x20] sm:$0xff]
      %v3363 = vld [vmem:[#allocation6 + $0x28] sm:$0xff]
      %v3364 = vld [vmem:[#allocation6 + $0x30] sm:$0xff]
      %v3365 = vld [vmem:[#allocation6 + $0x38] sm:$0xff]
      %v3366 = vld [vmem:[#allocation6 + $0x40] sm:$0xff]
      %v3367 = vld [vmem:[#allocation6 + $0x48] sm:$0xff]
      %v3368 = vld [vmem:[#allocation6 + $0x50] sm:$0xff]
      %v3369 = vld [vmem:[#allocation6 + $0x58] sm:$0xff]
      %v3370 = vld [vmem:[#allocation6 + $0x60] sm:$0xff]
      %v3371 = vld [vmem:[#allocation6 + $0x68] sm:$0xff]
      %v3372 = vld [vmem:[#allocation6 + $0x70] sm:$0xff]
      %v3373 = vld [vmem:[#allocation6 + $0x78] sm:$0xff]
      %v3374 = vsub.f32 %v3342, %v3358
      %v3375 = vsub.f32 %v3343, %v3359
      %v3376 = vsub.f32 %v3344, %v3360
      %v3377 = vsub.f32 %v3345, %v3361
      %v3378 = vsub.f32 %v3346, %v3362
      %v3379 = vsub.f32 %v3347, %v3363
      %v3380 = vsub.f32 %v3348, %v3364
      %v3381 = vsub.f32 %v3349, %v3365
      %v3382 = vsub.f32 %v3350, %v3366
      %v3383 = vsub.f32 %v3351, %v3367
      %v3384 = vsub.f32 %v3352, %v3368
      %v3385 = vsub.f32 %v3353, %v3369
      %v3386 = vsub.f32 %v3354, %v3370
      %v3387 = vsub.f32 %v3355, %v3371
      %v3388 = vsub.f32 %v3356, %v3372
      %v3389 = vsub.f32 %v3357, %v3373
      %v3390 = vld [vmem:[%s1] sm:$0xff]
      %v3391 = vld [vmem:[%s1 + $0x8] sm:$0xff]
      %v3392 = vld [vmem:[%s1 + $0x10] sm:$0xff]
      %v3393 = vld [vmem:[%s1 + $0x18] sm:$0xff]
      %v3394 = vld [vmem:[%s1 + $0x20] sm:$0xff]
      %v3395 = vld [vmem:[%s1 + $0x28] sm:$0xff]
      %v3396 = vld [vmem:[%s1 + $0x30] sm:$0xff]
      %v3397 = vld [vmem:[%s1 + $0x38] sm:$0xff]
      %v3398 = vld [vmem:[%s1 + $0x40] sm:$0xff]
      %v3399 = vld [vmem:[%s1 + $0x48] sm:$0xff]
      %v3400 = vld [vmem:[%s1 + $0x50] sm:$0xff]
      %v3401 = vld [vmem:[%s1 + $0x58] sm:$0xff]
      %v3402 = vld [vmem:[%s1 + $0x60] sm:$0xff]
      %v3403 = vld [vmem:[%s1 + $0x68] sm:$0xff]
      %v3404 = vld [vmem:[%s1 + $0x70] sm:$0xff]
      %v3405 = vld [vmem:[%s1 + $0x78] sm:$0xff]
      %v3406 = vmul.f32 %v3390, %v3374
      %v3407 = vmul.f32 %v3391, %v3375
      %v3408 = vmul.f32 %v3392, %v3376
      %v3409 = vmul.f32 %v3393, %v3377
      %v3410 = vmul.f32 %v3394, %v3378
      %v3411 = vmul.f32 %v3395, %v3379
      %v3412 = vmul.f32 %v3396, %v3380
      %v3413 = vmul.f32 %v3397, %v3381
      %v3414 = vmul.f32 %v3398, %v3382
      %v3415 = vmul.f32 %v3399, %v3383
      %v3416 = vmul.f32 %v3400, %v3384
      %v3417 = vmul.f32 %v3401, %v3385
      %v3418 = vmul.f32 %v3402, %v3386
      %v3419 = vmul.f32 %v3403, %v3387
      %v3420 = vmul.f32 %v3404, %v3388
      %v3421 = vmul.f32 %v3405, %v3389
      %v3422 = vsel %vm2906, %v3406, 0.0
      %v3423 = vsel %vm2906, %v3407, 0.0
      %v3424 = vadd.f32 %v3422, %v3423
      %v3425 = vsel %vm2906, %v3408, 0.0
      %v3426 = vadd.f32 %v3424, %v3425
      %v3427 = vsel %vm2906, %v3409, 0.0
      %v3428 = vadd.f32 %v3426, %v3427
      %v3429 = vsel %vm2906, %v3410, 0.0
      %v3430 = vadd.f32 %v3428, %v3429
      %v3431 = vsel %vm2906, %v3411, 0.0
      %v3432 = vadd.f32 %v3430, %v3431
      %v3433 = vsel %vm2906, %v3412, 0.0
      %v3434 = vadd.f32 %v3432, %v3433
      %v3435 = vsel %vm2906, %v3413, 0.0
      %v3436 = vadd.f32 %v3434, %v3435
      %v3437 = vsel %vm2906, %v3414, 0.0
      %v3438 = vadd.f32 %v3436, %v3437
      %v3439 = vsel %vm2906, %v3415, 0.0
      %v3440 = vadd.f32 %v3438, %v3439
      %v3441 = vsel %vm2906, %v3416, 0.0
      %v3442 = vadd.f32 %v3440, %v3441
      %v3443 = vsel %vm2906, %v3417, 0.0
      %v3444 = vadd.f32 %v3442, %v3443
      %v3445 = vsel %vm2906, %v3418, 0.0
      %v3446 = vadd.f32 %v3444, %v3445
      %v3447 = vsel %vm2906, %v3419, 0.0
      %v3448 = vadd.f32 %v3446, %v3447
      %v3449 = vsel %vm2906, %v3420, 0.0
      %v3450 = vadd.f32 %v3448, %v3449
      %v3451 = vsel %vm2906, %v3421, 0.0
      %v3452 = vadd.f32 %v3450, %v3451
      %3453 = vadd.xlane.f32.xlu0 %v3452
      %v3454 = vpop.xlane.xlu0 %3453
      %v3455 = vrot.slane %v3454, 4
      %v3456 = vadd.f32 %v3454, %v3455
      %v3457 = vrot.slane %v3456, 2
      %v3458 = vadd.f32 %v3456, %v3457
      %v3459 = vrot.slane %v3458, 1
      %v3460 = vadd.f32 %v3458, %v3459
      %s3461 = vtos %v3460
      %v3462 = vstv %s3461
      %v3463 = vsel %vm2906, %v3390, 0.0
      %v3464 = vsel %vm2906, %v3391, 0.0
      %v3465 = vadd.f32 %v3463, %v3464
      %v3466 = vsel %vm2906, %v3392, 0.0
      %v3467 = vadd.f32 %v3465, %v3466
      %v3468 = vsel %vm2906, %v3393, 0.0
      %v3469 = vadd.f32 %v3467, %v3468
      %v3470 = vsel %vm2906, %v3394, 0.0
      %v3471 = vadd.f32 %v3469, %v3470
      %v3472 = vsel %vm2906, %v3395, 0.0
      %v3473 = vadd.f32 %v3471, %v3472
      %v3474 = vsel %vm2906, %v3396, 0.0
      %v3475 = vadd.f32 %v3473, %v3474
      %v3476 = vsel %vm2906, %v3397, 0.0
      %v3477 = vadd.f32 %v3475, %v3476
      %v3478 = vsel %vm2906, %v3398, 0.0
      %v3479 = vadd.f32 %v3477, %v3478
      %v3480 = vsel %vm2906, %v3399, 0.0
      %v3481 = vadd.f32 %v3479, %v3480
      %v3482 = vsel %vm2906, %v3400, 0.0
      %v3483 = vadd.f32 %v3481, %v3482
      %v3484 = vsel %vm2906, %v3401, 0.0
      %v3485 = vadd.f32 %v3483, %v3484
      %v3486 = vsel %vm2906, %v3402, 0.0
      %v3487 = vadd.f32 %v3485, %v3486
      %v3488 = vsel %vm2906, %v3403, 0.0
      %v3489 = vadd.f32 %v3487, %v3488
      %v3490 = vsel %vm2906, %v3404, 0.0
      %v3491 = vadd.f32 %v3489, %v3490
      %v3492 = vsel %vm2906, %v3405, 0.0
      %v3493 = vadd.f32 %v3491, %v3492
      %3494 = vadd.xlane.f32.xlu0 %v3493
      %v3495 = vpop.xlane.xlu0 %3494
      %v3496 = vrot.slane %v3495, 4
      %v3497 = vadd.f32 %v3495, %v3496
      %v3498 = vrot.slane %v3497, 2
      %v3499 = vadd.f32 %v3497, %v3498
      %v3500 = vrot.slane %v3499, 1
      %v3501 = vadd.f32 %v3499, %v3500
      %s3502 = vtos %v3501
      %v3503 = vstv %s3502
      %v3504 = vmax.f32 %v3503, 1.0
      %v3505 = vrcp.pop %v3504
      %v3506 = vmul.f32 %v3462, %v3505
      %vm3507 = vcmask 0
      %3508 = vst.msk [vmem:[#allocation21] sm:$0x1] %vm3507, %v3506
    $region73: #{tpu_custom_call.1} parent=1 // pred_fallthru
      _
    // Predicated region
    $region74: #{tpu_custom_call.1} parent=1 // pred_check
      _
    $region75: #{tpu_custom_call.1} parent=1 // pred_check_branch
      %3510 = sbr.rel (0) target = $region77
    $region76: #{tpu_custom_call.1} parent=1 // pred_region
      %s3512 = ssub.s32 256, 256
      %3513 = vsyncadd [#allocation9], %s3512
      %s3514 = sshll.u32 [#allocation18], 4
      %s3515 = int_to_ptr.vmem [resolvable:$true] %s3514
      %3520 = dma.vmem_to_hbm [thread:$0]  %s3515, 256, %s10, [#allocation9], 128, 128, 8
    $region77: #{tpu_custom_call.1} parent=1 // pred_fallthru
      _
    // Predicated region
    $region78: #{tpu_custom_call.1} parent=1 // pred_check
      _
    $region79: #{tpu_custom_call.1} parent=1 // pred_check_branch
      %3522 = sbr.rel (0) target = $region81
    $region80: #{tpu_custom_call.1} parent=1 // pred_region
      %s3524 = ssub.s32 256, 256
      %3525 = vsyncadd [#allocation20], %s3524
      %s3526 = sshll.u32 [#allocation19], 4
      %s3527 = int_to_ptr.vmem [resolvable:$true] %s3526
      %3532 = dma.vmem_to_hbm [thread:$0]  %s3527, 256, %s11, [#allocation20], 128, 128, 8
    $region81: #{tpu_custom_call.1} parent=1 // pred_fallthru
      _
    // Predicated region
    $region82: #{tpu_custom_call.1} parent=1 // pred_check
      _
    $region83: #{tpu_custom_call.1} parent=1 // pred_check_branch
      %3534 = sbr.rel (0) target = $region85
    $region84: #{tpu_custom_call.1} parent=1 // pred_region
      %s3536 = ssub.s32 16, 16
      %3537 = vsyncadd [#allocation20], %s3536
      %s3539 = sshll.u32 [#allocation21], 4
      %s3540 = int_to_ptr.vmem [resolvable:$true] %s3539
      %3542 = dma.vmem_to_hbm [thread:$0]  %s3540, 16, %s12, [#allocation20]
    $region85: #{tpu_custom_call.1} parent=1 // pred_fallthru
      _
    // Predicated region
    $region86: #{tpu_custom_call.1} parent=1 // pred_check
      _
    $region87: #{tpu_custom_call.1} parent=1 // pred_check_branch
      %3544 = sbr.rel (0) target = $region89
    $region88: #{tpu_custom_call.1} parent=1 // pred_region
      %3545 = dma.done [#allocation9], 256
    $region89: #{tpu_custom_call.1} parent=1 // pred_fallthru
      _
    // Predicated region
    $region90: #{tpu_custom_call.1} parent=1 // pred_check
      _
    $region91: #{tpu_custom_call.1} parent=1 // pred_check_branch
      %3547 = sbr.rel (0) target = $region93
    $region92: #{tpu_custom_call.1} parent=1 // pred_region
      %3548 = dma.done [#allocation20], 256
    $region93: #{tpu_custom_call.1} parent=1 // pred_fallthru
      _
    // Predicated region
    $region94: #{tpu_custom_call.1} parent=1 // pred_check
      _
    $region95: #{tpu_custom_call.1} parent=1 // pred_check_branch
      %3550 = sbr.rel (0) target = $region97
    $region96: #{tpu_custom_call.1} parent=1 // pred_region
      %3551 = dma.done [#allocation20], 16
    $region97: #{tpu_custom_call.1} parent=1 // pred_fallthru
      _
    %3552 = vsyncpa [#allocation8], 1
    %3553 = vsyncpa [#allocation11], 1
    %3554 = vsyncpa [#allocation14], 1
    %3555 = vsyncpa [#allocation17], 1
    %3556 = vsyncpa [#allocation9], 1
    %3557 = vsyncpa [#allocation20], 1

</llo_original>
